<compile_context>
chip_gen: v5e
topology: v5e:2x2
jax: 0.10.0
libtpu: 0.0.40
codegen_flags: <defaults>
</compile_context>

<pallas_src>
import functools

import numpy as np
import jax
import jax.numpy as jnp
from jax.experimental import pallas as pl
from jax.experimental.pallas import tpu as pltpu


_TILE_M = 256      # sublane (row) tile preference
_TILE_LANE = 512   # lane (col) tile preference

_CompilerParams = getattr(pltpu, "CompilerParams", None) or getattr(
    pltpu, "TPUCompilerParams")


def _round_up(x, m):
    return ((x + m - 1) // m) * m


def _lane_pad_and_tile(dim, pref=_TILE_LANE):
    """Pad dim up to a multiple of 128 and pick the largest 128-aligned tile
    <= pref that divides the padded dim."""
    d = _round_up(max(dim, 1), 128)
    t = min(pref, d)
    while d % t:
        t -= 128
    return d, t


def _sub_tile(rows, pref=_TILE_M):
    """Largest multiple-of-8 tile <= pref dividing `rows` (rows % 8 == 0)."""
    t = max(8, min(pref, rows) - (min(pref, rows) % 8))
    while rows % t:
        t -= 8
    return t


def _default_vmem_limit():
    try:
        info = pltpu.get_tpu_info()
        cap = getattr(info, "vmem_capacity_bytes", None)
        if cap:
            return int(min(cap * 3 // 4, 96 * 1024 * 1024))
    except Exception:
        pass
    return 48 * 1024 * 1024     # safe on v5e/v6e (128 MiB) and v7x (64 MiB)


_VMEM_LIMIT = _default_vmem_limit()


def _compiler_params(dims):
    return _CompilerParams(dimension_semantics=dims,
                           vmem_limit_bytes=_VMEM_LIMIT)


# ----------------------------- Pallas kernels ------------------------------

def _matmul_bf16_kernel(lhs_ref, rhs_ref, out_ref, acc_ref):
    """Plain tiled matmul: bf16 operands, f32 accumulator, bf16 store."""
    k = pl.program_id(2)

    @pl.when(k == 0)
    def _init():
        acc_ref[...] = jnp.zeros_like(acc_ref)

    acc_ref[...] += jnp.dot(lhs_ref[...], rhs_ref[...],
                            preferred_element_type=jnp.float32)

    @pl.when(k == pl.num_programs(2) - 1)
    def _store():
        out_ref[...] = acc_ref[...].astype(out_ref.dtype)


def _smooth_filter_kernel(u_ref, a_ref, xc_ref, t_ref, sec_ref, out_ref,
                          acc_ref, *, inv_lam0, alpha, T, batch_rows, tm):
    """prop = U@A/lam0 on the stacked [x;c] rows; rows < batch_rows get the
    fused filter epilogue (z_t), the remaining rows get Ac.  Single dot /
    single accumulator per step (v5e-friendly)."""
    i = pl.program_id(0)
    k = pl.program_id(2)

    @pl.when(k == 0)
    def _init():
        acc_ref[...] = jnp.zeros_like(acc_ref)

    acc_ref[...] += jnp.dot(u_ref[...], a_ref[...],
                            preferred_element_type=jnp.float32)

    @pl.when(k == pl.num_programs(2) - 1)
    def _finalize():
        prop = acc_ref[...] * inv_lam0                       # Ax or Ac
        xv = xc_ref[...].astype(jnp.float32)                 # x or c (unused for c rows)
        coef = (alpha / T) * t_ref[...]                      # (tm, 1)
        zt = xv + coef * (prop - xv) + sec_ref[...].astype(jnp.float32)
        rows = i * tm + jax.lax.broadcasted_iota(jnp.int32, (tm, 1), 0)
        out_ref[...] = jnp.where(rows < batch_rows, zt, prop).astype(out_ref.dtype)


def _denoise_loss_kernel(zt_ref, c_ref, ac_ref, w1a_ref, w1b_ref, w1c_ref,
                         t_ref, w1t_ref, b1_ref, w2_ref, b2_ref, x_ref,
                         loss_ref, acc_h_ref, h_ref, loss_acc_ref,
                         *, inv_T, k_steps, j_steps):
    """Fused denoiser: phase 1 (s < k_steps) accumulates
         h = tanh(z_t@W1a + c@W1b + Ac@W1c + (t/T)*w1t + b1)
       into VMEM scratch (the [z_t|c|Ac|t/T] concat is never built);
       phase 2 (s >= k_steps) streams W2 item tiles, computes x_pred tiles on
       the fly and accumulates per-row sum((x - x_pred)^2).  h / x_pred never
       touch HBM."""
    s = pl.program_id(1)

    @pl.when(s == 0)
    def _init():
        acc_h_ref[...] = jnp.zeros_like(acc_h_ref)
        loss_acc_ref[...] = jnp.zeros_like(loss_acc_ref)

    @pl.when(s < k_steps)
    def _accum_hidden():
        acc_h_ref[...] += (
            jnp.dot(zt_ref[...], w1a_ref[...], preferred_element_type=jnp.float32)
            + jnp.dot(c_ref[...], w1b_ref[...], preferred_element_type=jnp.float32)
            + jnp.dot(ac_ref[...], w1c_ref[...], preferred_element_type=jnp.float32))

    @pl.when(s == k_steps - 1)
    def _finalize_hidden():
        t_scaled = t_ref[...] * inv_T                        # (tm, 1)
        h = jnp.tanh(acc_h_ref[...] + t_scaled * w1t_ref[...] + b1_ref[...])
        h_ref[...] = h.astype(h_ref.dtype)

    @pl.when(s >= k_steps)
    def _loss_tile():
        pred = jnp.dot(h_ref[...], w2_ref[...],
                       preferred_element_type=jnp.float32) + b2_ref[...]
        d = x_ref[...].astype(jnp.float32) - pred
        loss_acc_ref[...] += jnp.sum(d * d, axis=1, keepdims=True)

    @pl.when(s == k_steps + j_steps - 1)
    def _store():
        loss_ref[...] = loss_acc_ref[...]


# --------------------------------- model ------------------------------------

class SHGDPallas:
    """JAX/Pallas port of SHGD (training-path forward)."""

    def __init__(self, interaction, kg_src, kg_dst, entity_embeddings, key,
                 latdim=16, T=2, alpha=2.5, dropout=0.5, denoiser_hidden=256):
        interaction = np.asarray(interaction, np.float32)
        n_users, n_items = interaction.shape
        self.n_items = n_items
        self.n_entities = int(entity_embeddings.shape[0])
        self.T = float(T)
        self.alpha = float(alpha)
        self.dropout = float(dropout)

        # Padded, 128-aligned streamed dimensions + their lane tiles.
        self.ni_pad, self.ti = _lane_pad_and_tile(n_items)
        self.nu_pad, self.tu = _lane_pad_and_tile(n_users)
        self.hp, _ = _lane_pad_and_tile(int(denoiser_hidden))

        # ---- adjacency normalization + leading eigenvalue (host, like __init__) ----
        eps = 1e-10
        user_deg = interaction.sum(axis=1, keepdims=True)
        item_deg = interaction.sum(axis=0, keepdims=True)
        adj_right = (np.power(user_deg + eps, -0.25) * interaction
                     * np.power(item_deg + eps, -0.5)).astype(np.float32)
        s = np.linalg.svd(adj_right, compute_uv=False)
        self.eigen_val0 = float(np.max(s) ** 2)              # eigen_val[0]
        # ideal_weight == 0.0 (default) -> smooth(x) == prop(x); eigen_vec unused.
        # Stream the factored adjacency (no n_items^2 Gram matrix) as bf16
        # MXU operands, zero-padded to tile-aligned shapes.
        A = np.zeros((self.nu_pad, self.ni_pad), np.float32)
        A[:n_users, :n_items] = adj_right
        self.A_bf16 = jnp.asarray(A, jnp.bfloat16)            # (nu_pad, ni_pad)
        self.AT_bf16 = jnp.asarray(A.T, jnp.bfloat16)          # (ni_pad, nu_pad)

        self.kg_src = jnp.asarray(kg_src, jnp.int32)
        self.kg_dst = jnp.asarray(kg_dst, jnp.int32)
        self.entity_embeddings = jnp.asarray(entity_embeddings, jnp.float32)

        # ---- deterministic parameter init (true shapes, then zero-pad) ----
        k_wv, k_w2, k_b2, k_a, k_b, k_c, k_t, k_o = jax.random.split(key, 8)
        bound_wv = float(np.sqrt(6.0 / (latdim + latdim)))     # xavier_uniform
        self.weight_velocity = jax.random.uniform(
            k_wv, (latdim, latdim), jnp.float32, -bound_wv, bound_wv)

        bound2 = float(1.0 / np.sqrt(latdim))                  # nn.Linear default
        self.W2nd_T = jax.random.uniform(k_w2, (latdim, n_items), jnp.float32,
                                         -bound2, bound2)      # mlp_second W^T
        self.b2nd = jax.random.uniform(k_b2, (1, n_items), jnp.float32,
                                       -bound2, bound2)

        # TODO(synk): MLP_Denoiser source is not provided in the reference module;
        # a DiffRec-style MLP ([z_t, c, Ac, t/T] -> tanh hidden -> n_items)
        # stands in.  W1 is stored pre-split per input segment so the concat is
        # never materialized; the t/T column is a separate rank-1 row.
        H = int(denoiser_hidden)
        pad_i = self.ni_pad - n_items
        pad_h = self.hp - H
        d_in = 3 * n_items + 1
        bd1 = float(np.sqrt(6.0 / (d_in + H)))
        bd2 = float(np.sqrt(6.0 / (H + n_items)))

        def pad2(w, p0, p1):
            return jnp.pad(w, ((0, p0), (0, p1)))

        self.W1a = pad2(jax.random.uniform(k_a, (n_items, H), jnp.float32,
                                           -bd1, bd1), pad_i, pad_h).astype(jnp.bfloat16)
        self.W1b = pad2(jax.random.uniform(k_b, (n_items, H), jnp.float32,
                                           -bd1, bd1), pad_i, pad_h).astype(jnp.bfloat16)
        self.W1c = pad2(jax.random.uniform(k_c, (n_items, H), jnp.float32,
                                           -bd1, bd1), pad_i, pad_h).astype(jnp.bfloat16)
        self.w1t = pad2(jax.random.uniform(k_t, (1, H), jnp.float32,
                                           -bd1, bd1), 0, pad_h)
        self.b1 = jnp.zeros((1, self.hp), jnp.float32)
        self.W2 = pad2(jax.random.uniform(k_o, (H, n_items), jnp.float32,
                                          -bd2, bd2), pad_h, pad_i).astype(jnp.bfloat16)
        self.b2 = jnp.zeros((1, self.ni_pad), jnp.float32)

    # ----------------------- pallas_call wrappers -----------------------

    def _project(self, xc, tm):
        """U = [x ; c] @ A^T, stacked rows, bf16 output."""
        M2 = xc.shape[0]
        grid = (M2 // tm, self.nu_pad // self.tu, self.ni_pad // self.ti)
        return pl.pallas_call(
            _matmul_bf16_kernel,
            grid=grid,
            in_specs=[
                pl.BlockSpec((tm, self.ti), lambda i, j, k: (i, k)),        # [x;c]
                pl.BlockSpec((self.ti, self.tu), lambda i, j, k: (k, j)),   # A^T
            ],
            out_specs=pl.BlockSpec((tm, self.tu), lambda i, j, k: (i, j)),
            out_shape=jax.ShapeDtypeStruct((M2, self.nu_pad), jnp.bfloat16),
            scratch_shapes=[pltpu.VMEM((tm, self.tu), jnp.float32)],
            compiler_params=_compiler_params(
                ("parallel", "parallel", "arbitrary")),
        )(xc, self.AT_bf16)

    def _smooth_filter(self, u, xc, t2, sec2, tm, batch_rows):
        """Stacked [z_t ; Ac] = epilogue(U @ A / lam0); bf16 output."""
        M2 = u.shape[0]
        grid = (M2 // tm, self.ni_pad // self.ti, self.nu_pad // self.tu)
        kern = functools.partial(_smooth_filter_kernel,
                                 inv_lam0=1.0 / self.eigen_val0,
                                 alpha=self.alpha, T=self.T,
                                 batch_rows=batch_rows, tm=tm)
        return pl.pallas_call(
            kern,
            grid=grid,
            in_specs=[
                pl.BlockSpec((tm, self.tu), lambda i, j, k: (i, k)),        # U
                pl.BlockSpec((self.tu, self.ti), lambda i, j, k: (k, j)),   # A
                pl.BlockSpec((tm, self.ti), lambda i, j, k: (i, j)),        # x / c
                pl.BlockSpec((tm, 1), lambda i, j, k: (i, 0)),              # t
                pl.BlockSpec((tm, self.ti), lambda i, j, k: (i, j)),        # second_term
            ],
            out_specs=pl.BlockSpec((tm, self.ti), lambda i, j, k: (i, j)),
            out_shape=jax.ShapeDtypeStruct((M2, self.ni_pad), jnp.bfloat16),
            scratch_shapes=[pltpu.VMEM((tm, self.ti), jnp.float32)],
            compiler_params=_compiler_params(
                ("parallel", "parallel", "arbitrary")),
        )(u, self.A_bf16, xc, t2, sec2)

    def _denoise_loss(self, zp, xc, t_p, tm):
        """Fused hidden+loss; per-row sum((x - x_pred)^2), (Mp, 1) f32."""
        Mp = t_p.shape[0]
        Mi = Mp // tm
        ti, Hp = self.ti, self.hp
        ks = self.ni_pad // ti            # item-reduction steps (hidden phase)
        js = self.ni_pad // ti            # item-output steps (loss phase)
        kern = functools.partial(_denoise_loss_kernel, inv_T=1.0 / self.T,
                                 k_steps=ks, j_steps=js)
        return pl.pallas_call(
            kern,
            grid=(Mi, ks + js),
            in_specs=[
                pl.BlockSpec((tm, ti), lambda i, s: (i, jnp.minimum(s, ks - 1))),        # z_t
                pl.BlockSpec((tm, ti), lambda i, s: (i + Mi, jnp.minimum(s, ks - 1))),   # c
                pl.BlockSpec((tm, ti), lambda i, s: (i + Mi, jnp.minimum(s, ks - 1))),   # Ac
                pl.BlockSpec((ti, Hp), lambda i, s: (jnp.minimum(s, ks - 1), 0)),        # W1a
                pl.BlockSpec((ti, Hp), lambda i, s: (jnp.minimum(s, ks - 1), 0)),        # W1b
                pl.BlockSpec((ti, Hp), lambda i, s: (jnp.minimum(s, ks - 1), 0)),        # W1c
                pl.BlockSpec((tm, 1), lambda i, s: (i, 0)),                              # t
                pl.BlockSpec((1, Hp), lambda i, s: (0, 0)),                              # w1t
                pl.BlockSpec((1, Hp), lambda i, s: (0, 0)),                              # b1
                pl.BlockSpec((Hp, ti), lambda i, s: (0, jnp.maximum(s - ks, 0))),        # W2
                pl.BlockSpec((1, ti), lambda i, s: (0, jnp.maximum(s - ks, 0))),         # b2
                pl.BlockSpec((tm, ti), lambda i, s: (i, jnp.maximum(s - ks, 0))),        # x
            ],
            out_specs=pl.BlockSpec((tm, 1), lambda i, s: (i, 0)),
            out_shape=jax.ShapeDtypeStruct((Mp, 1), jnp.float32),
            scratch_shapes=[pltpu.VMEM((tm, Hp), jnp.float32),     # hidden acc
                            pltpu.VMEM((tm, Hp), jnp.bfloat16),    # tanh hidden
                            pltpu.VMEM((tm, 1), jnp.float32)],     # loss acc
            compiler_params=_compiler_params(("parallel", "arbitrary")),
        )(zp, xc, zp, self.W1a, self.W1b, self.W1c, t_p, self.w1t, self.b1,
          self.W2, self.b2, xc)

    # ----------------------- plain-JAX glue -----------------------

    def _divergence(self, batch_item_ids):
        # KG gather + tanh + data-dependent scatter + latdim(=16)-wide linear.
        # Intentionally left to XLA: lane width 16 plus the scatter make a
        # Pallas version pure launch/masked-store overhead.
        E = self.entity_embeddings
        delta = E[self.kg_dst] - E[self.kg_src]
        V = jnp.tanh(delta @ self.weight_velocity)
        message = V * E[self.kg_dst]
        second = jax.ops.segment_sum(message, self.kg_src,
                                     num_segments=self.n_entities)
        sec_b = second[batch_item_ids]
        return sec_b @ self.W2nd_T + self.b2nd

    # ----------------------- forward (training branch) -----------------------

    def forward(self, x, batch_item_ids, key):
        B, n_items = x.shape
        k_t, k_drop = jax.random.split(key)

        # t ~ randint(1, T+1, (B,1)); dropout with torch.F.dropout semantics.
        t = jax.random.randint(k_t, (B, 1), 1, int(self.T) + 1).astype(jnp.float32)
        keep_p = 1.0 - self.dropout
        scale = (1.0 / keep_p) if keep_p > 0.0 else 0.0
        keep = jax.random.bernoulli(k_drop, keep_p, (B, n_items))
        c = jnp.where(keep, x * scale, 0.0)

        second = self._divergence(batch_item_ids)              # (B, n_items) f32

        # Pad batch rows to a multiple of 8 sublanes and items to ni_pad;
        # padded rows/cols carry zeros and drop out of every matmul and of the
        # final mean.  x / c are exact in bf16 (values in {0, 1, 1/(1-p)}).
        Mp = max(8, _round_up(B, 8))
        pad_m, pad_n = Mp - B, self.ni_pad - n_items
        xb = jnp.pad(x, ((0, pad_m), (0, pad_n))).astype(jnp.bfloat16)
        cb = jnp.pad(c, ((0, pad_m), (0, pad_n))).astype(jnp.bfloat16)
        xc = jnp.concatenate([xb, cb], axis=0)                  # (2*Mp, ni_pad)
        t_p = jnp.pad(t, ((0, pad_m), (0, 0)), constant_values=1.0)
        sec_p = jnp.pad(second, ((0, pad_m), (0, pad_n))).astype(jnp.bfloat16)

        # Stacked copies for the smooth/filter kernel (bottom half is masked).
        t2 = jnp.pad(t_p, ((0, Mp), (0, 0)), constant_values=1.0)
        sec2 = jnp.pad(sec_p, ((0, Mp), (0, 0)))

        tm12 = _sub_tile(2 * Mp)        # row tile over the stacked batch
        tm3 = _sub_tile(Mp)             # row tile over the un-stacked batch

        # smooth(x) & smooth(c) in one M-stacked stream; filter + second_term
        # fused into the epilogue.  noise_scale == 0.0 (default) -> no noise term.
        u = self._project(xc, tm12)                            # (2*Mp, nu_pad) bf16
        zp = self._smooth_filter(u, xc, t2, sec2, tm12, Mp)    # [z_t ; Ac] bf16

        per_row = self._denoise_loss(zp, xc, t_p, tm3)         # (Mp, 1) f32
        return jnp.mean(per_row[:B, 0])


# ----------------------------------- main ------------------------------------

if __name__ == "__main__":
    key = jax.random.PRNGKey(0)
    k1, k2, k3, k4, k5, k6, k7, k8 = jax.random.split(key, 8)

    n_users, n_items, n_entities, latdim, nnz, B, T = 8, 512, 12, 16, 24, 4, 2

    interaction = np.asarray(
        jax.random.bernoulli(k1, 0.3, (n_users, n_items)), dtype=np.float32)
    interaction[0, 0] = 1.0  # guarantee a non-empty interaction matrix

    kg_src = jax.random.randint(k2, (nnz,), 0, n_entities, dtype=jnp.int32)
    kg_dst = jax.random.randint(k3, (nnz,), 0, n_entities, dtype=jnp.int32)
    entity_embeddings = 0.1 * jax.random.normal(k4, (n_entities, latdim),
                                                jnp.float32)

    model = SHGDPallas(interaction, kg_src, kg_dst, entity_embeddings, k5,
                       latdim=latdim, T=T, alpha=2.5, dropout=0.5,
                       denoiser_hidden=256)

    x = jax.random.bernoulli(k6, 0.3, (B, n_items)).astype(jnp.float32)
    batch_item_ids = jax.random.randint(k7, (B,), 0, n_entities, dtype=jnp.int32)

    loss = jax.jit(model.forward)(x, batch_item_ids, k8)
    loss = jax.block_until_ready(loss)
    assert jnp.isfinite(loss), "loss is not finite"
    print("KERNEL_OK")
</pallas_src>

<mosaic_0001>
module attributes {stable_mosaic.version = 11 : i64} {
  func.func @_matmul_bf16_kernel(%arg0: i32, %arg1: i32, %arg2: i32, %arg3: memref<16x512xbf16, #tpu.memory_space<vmem>>, %arg4: memref<512x128xbf16, #tpu.memory_space<vmem>>, %arg5: memref<16x128xbf16, #tpu.memory_space<vmem>>, %arg6: memref<16x128xf32, #tpu.memory_space<vmem>>) attributes {dimension_semantics = [#tpu.dimension_semantics<parallel>, #tpu.dimension_semantics<parallel>, #tpu.dimension_semantics<arbitrary>], iteration_bounds = array<i64: 1, 1, 1>, scalar_prefetch = 0 : i64, scratch_operands = 1 : i64, tpu.core_type = #tpu.core_type<tc>, window_params = [{transform_indices = @transform_0, window_bounds = array<i64: 16, 512>}, {transform_indices = @transform_1, window_bounds = array<i64: 512, 128>}, {transform_indices = @transform_2, window_bounds = array<i64: 16, 128>}]} {
    %c0_i32 = arith.constant 0 : i32
    %0 = arith.cmpi eq, %arg2, %c0_i32 : i32
    %1 = arith.extui %0 : i1 to i32
    %c0_i32_0 = arith.constant 0 : i32
    %2 = arith.cmpi ne, %1, %c0_i32_0 : i32
    scf.if %2 {
      %cst_10 = arith.constant 0.000000e+00 : f32
      %12 = vector.broadcast %cst_10 : f32 to vector<16x128xf32>
      %c0_11 = arith.constant 0 : index
      %c0_12 = arith.constant 0 : index
      %13 = vector.load %arg6[%c0_11, %c0_12] : memref<16x128xf32, #tpu.memory_space<vmem>>, vector<16x128xf32>
      tpu.vector_store %arg6[%c0_11, %c0_12], %12 {strides = array<i32>} : memref<16x128xf32, #tpu.memory_space<vmem>>, vector<16x128xf32>,
    } else {
    }
    %c0 = arith.constant 0 : index
    %c0_1 = arith.constant 0 : index
    %3 = vector.load %arg6[%c0, %c0_1] : memref<16x128xf32, #tpu.memory_space<vmem>>, vector<16x128xf32>
    %c0_2 = arith.constant 0 : index
    %c0_3 = arith.constant 0 : index
    %4 = vector.load %arg3[%c0_2, %c0_3] : memref<16x512xbf16, #tpu.memory_space<vmem>>, vector<16x512xbf16>
    %c0_4 = arith.constant 0 : index
    %c0_5 = arith.constant 0 : index
    %5 = vector.load %arg4[%c0_4, %c0_5] : memref<512x128xbf16, #tpu.memory_space<vmem>>, vector<512x128xbf16>
    %cst = arith.constant dense<0.000000e+00> : vector<16x128xf32>
    %6 = tpu.matmul %4, %5, %cst {dimension_numbers = #tpu.dot_dimension_numbers<[1], [0], [0], [1], [0, 0, 1, 1], [], []>} : vector<16x512xbf16>, vector<512x128xbf16>, vector<16x128xf32> -> vector<16x128xf32>
    %7 = arith.addf %3, %6 : vector<16x128xf32>
    %c0_6 = arith.constant 0 : index
    %c0_7 = arith.constant 0 : index
    %8 = vector.load %arg6[%c0_6, %c0_7] : memref<16x128xf32, #tpu.memory_space<vmem>>, vector<16x128xf32>
    tpu.vector_store %arg6[%c0_6, %c0_7], %7 {strides = array<i32>} : memref<16x128xf32, #tpu.memory_space<vmem>>, vector<16x128xf32>,
    %c0_i32_8 = arith.constant 0 : i32
    %9 = arith.cmpi eq, %arg2, %c0_i32_8 : i32
    %10 = arith.extui %9 : i1 to i32
    %c0_i32_9 = arith.constant 0 : i32
    %11 = arith.cmpi ne, %10, %c0_i32_9 : i32
    scf.if %11 {
      %c0_10 = arith.constant 0 : index
      %c0_11 = arith.constant 0 : index
      %12 = vector.load %arg6[%c0_10, %c0_11] : memref<16x128xf32, #tpu.memory_space<vmem>>, vector<16x128xf32>
      %13 = arith.truncf %12 : vector<16x128xf32> to vector<16x128xbf16>
      %c0_12 = arith.constant 0 : index
      %c0_13 = arith.constant 0 : index
      %14 = vector.load %arg5[%c0_12, %c0_13] : memref<16x128xbf16, #tpu.memory_space<vmem>>, vector<16x128xbf16>
      tpu.vector_store %arg5[%c0_12, %c0_13], %13 {strides = array<i32>} : memref<16x128xbf16, #tpu.memory_space<vmem>>, vector<16x128xbf16>,
    } else {
    }
    return
  }
  func.func @transform_0(%arg0: i32, %arg1: i32, %arg2: i32) -> (i32, i32) {
    %c0_i32 = arith.constant 0 : i32
    return %arg0, %arg2 : i32, i32
  }
  func.func @transform_1(%arg0: i32, %arg1: i32, %arg2: i32) -> (i32, i32) {
    %c0_i32 = arith.constant 0 : i32
    return %arg2, %arg1 : i32, i32
  }
  func.func @transform_2(%arg0: i32, %arg1: i32, %arg2: i32) -> (i32, i32) {
    %c0_i32 = arith.constant 0 : i32
    return %arg0, %arg1 : i32, i32
  }
}

module attributes {stable_mosaic.version = 11 : i64} {
  func.func @_smooth_filter_kernel(%arg0: i32, %arg1: i32, %arg2: i32, %arg3: memref<16x128xbf16, #tpu.memory_space<vmem>>, %arg4: memref<128x512xbf16, #tpu.memory_space<vmem>>, %arg5: memref<16x512xbf16, #tpu.memory_space<vmem>>, %arg6: memref<16x1xf32, #tpu.memory_space<vmem>>, %arg7: memref<16x512xbf16, #tpu.memory_space<vmem>>, %arg8: memref<16x512xbf16, #tpu.memory_space<vmem>>, %arg9: memref<16x512xf32, #tpu.memory_space<vmem>>) attributes {dimension_semantics = [#tpu.dimension_semantics<parallel>, #tpu.dimension_semantics<parallel>, #tpu.dimension_semantics<arbitrary>], iteration_bounds = array<i64: 1, 1, 1>, scalar_prefetch = 0 : i64, scratch_operands = 1 : i64, tpu.core_type = #tpu.core_type<tc>, window_params = [{transform_indices = @transform_0, window_bounds = array<i64: 16, 128>}, {transform_indices = @transform_1, window_bounds = array<i64: 128, 512>}, {transform_indices = @transform_2, window_bounds = array<i64: 16, 512>}, {transform_indices = @transform_3, window_bounds = array<i64: 16, 1>}, {transform_indices = @transform_4, window_bounds = array<i64: 16, 512>}, {transform_indices = @transform_5, window_bounds = array<i64: 16, 512>}]} {
    %c0_i32 = arith.constant 0 : i32
    %0 = arith.cmpi eq, %arg2, %c0_i32 : i32
    %1 = arith.extui %0 : i1 to i32
    %c0_i32_0 = arith.constant 0 : i32
    %2 = arith.cmpi ne, %1, %c0_i32_0 : i32
    scf.if %2 {
      %cst_10 = arith.constant 0.000000e+00 : f32
      %12 = vector.broadcast %cst_10 : f32 to vector<16x512xf32>
      %c0_11 = arith.constant 0 : index
      %c0_12 = arith.constant 0 : index
      %13 = vector.load %arg9[%c0_11, %c0_12] : memref<16x512xf32, #tpu.memory_space<vmem>>, vector<16x512xf32>
      tpu.vector_store %arg9[%c0_11, %c0_12], %12 {strides = array<i32>} : memref<16x512xf32, #tpu.memory_space<vmem>>, vector<16x512xf32>,
    } else {
    }
    %c0 = arith.constant 0 : index
    %c0_1 = arith.constant 0 : index
    %3 = vector.load %arg9[%c0, %c0_1] : memref<16x512xf32, #tpu.memory_space<vmem>>, vector<16x512xf32>
    %c0_2 = arith.constant 0 : index
    %c0_3 = arith.constant 0 : index
    %4 = vector.load %arg3[%c0_2, %c0_3] : memref<16x128xbf16, #tpu.memory_space<vmem>>, vector<16x128xbf16>
    %c0_4 = arith.constant 0 : index
    %c0_5 = arith.constant 0 : index
    %5 = vector.load %arg4[%c0_4, %c0_5] : memref<128x512xbf16, #tpu.memory_space<vmem>>, vector<128x512xbf16>
    %cst = arith.constant dense<0.000000e+00> : vector<16x512xf32>
    %6 = tpu.matmul %4, %5, %cst {dimension_numbers = #tpu.dot_dimension_numbers<[1], [0], [0], [1], [0, 0, 1, 1], [], []>} : vector<16x128xbf16>, vector<128x512xbf16>, vector<16x512xf32> -> vector<16x512xf32>
    %7 = arith.addf %3, %6 : vector<16x512xf32>
    %c0_6 = arith.constant 0 : index
    %c0_7 = arith.constant 0 : index
    %8 = vector.load %arg9[%c0_6, %c0_7] : memref<16x512xf32, #tpu.memory_space<vmem>>, vector<16x512xf32>
    tpu.vector_store %arg9[%c0_6, %c0_7], %7 {strides = array<i32>} : memref<16x512xf32, #tpu.memory_space<vmem>>, vector<16x512xf32>,
    %c0_i32_8 = arith.constant 0 : i32
    %9 = arith.cmpi eq, %arg2, %c0_i32_8 : i32
    %10 = arith.extui %9 : i1 to i32
    %c0_i32_9 = arith.constant 0 : i32
    %11 = arith.cmpi ne, %10, %c0_i32_9 : i32
    scf.if %11 {
      %c0_10 = arith.constant 0 : index
      %c0_11 = arith.constant 0 : index
      %12 = vector.load %arg9[%c0_10, %c0_11] : memref<16x512xf32, #tpu.memory_space<vmem>>, vector<16x512xf32>
      %cst_12 = arith.constant 0.0802737399 : f32
      %13 = vector.broadcast %cst_12 : f32 to vector<16x512xf32>
      %14 = arith.mulf %12, %13 : vector<16x512xf32>
      %c0_13 = arith.constant 0 : index
      %c0_14 = arith.constant 0 : index
      %15 = vector.load %arg5[%c0_13, %c0_14] : memref<16x512xbf16, #tpu.memory_space<vmem>>, vector<16x512xbf16>
      %16 = arith.extf %15 : vector<16x512xbf16> to vector<16x512xf32>
      %c0_15 = arith.constant 0 : index
      %c0_16 = arith.constant 0 : index
      %17 = vector.load %arg6[%c0_15, %c0_16] : memref<16x1xf32, #tpu.memory_space<vmem>>, vector<16x1xf32>
      %cst_17 = arith.constant 1.250000e+00 : f32
      %18 = vector.broadcast %cst_17 : f32 to vector<16x1xf32>
      %19 = arith.mulf %18, %17 : vector<16x1xf32>
      %20 = arith.subf %14, %16 : vector<16x512xf32>
      %21 = vector.broadcast %19 : vector<16x1xf32> to vector<16x512xf32>
      %22 = arith.mulf %21, %20 : vector<16x512xf32>
      %23 = arith.addf %16, %22 : vector<16x512xf32>
      %c0_18 = arith.constant 0 : index
      %c0_19 = arith.constant 0 : index
      %24 = vector.load %arg7[%c0_18, %c0_19] : memref<16x512xbf16, #tpu.memory_space<vmem>>, vector<16x512xbf16>
      %25 = arith.extf %24 : vector<16x512xbf16> to vector<16x512xf32>
      %26 = arith.addf %23, %25 : vector<16x512xf32>
      %c16_i32 = arith.constant 16 : i32
      %27 = arith.muli %arg0, %c16_i32 : i32
      %28 = tpu.iota {dimensions = array<i32: 0>} : vector<16x1xi32>
      %29 = vector.broadcast %27 : i32 to vector<16x1xi32>
      %30 = arith.addi %29, %28 : vector<16x1xi32>
      %c8_i32 = arith.constant 8 : i32
      %31 = vector.broadcast %c8_i32 : i32 to vector<16x1xi32>
      %32 = arith.cmpi slt, %30, %31 : vector<16x1xi32>
      %33 = vector.shape_cast %32 : vector<16x1xi1> to vector<16x1xi1>
      %34 = vector.broadcast %33 : vector<16x1xi1> to vector<16x512xi1>
      %35 = arith.select %34, %26, %14 : vector<16x512xi1>, vector<16x512xf32>
      %36 = arith.truncf %35 : vector<16x512xf32> to vector<16x512xbf16>
      %c0_20 = arith.constant 0 : index
      %c0_21 = arith.constant 0 : index
      %37 = vector.load %arg8[%c0_20, %c0_21] : memref<16x512xbf16, #tpu.memory_space<vmem>>, vector<16x512xbf16>
      tpu.vector_store %arg8[%c0_20, %c0_21], %36 {strides = array<i32>} : memref<16x512xbf16, #tpu.memory_space<vmem>>, vector<16x512xbf16>,
    } else {
    }
    return
  }
  func.func @transform_0(%arg0: i32, %arg1: i32, %arg2: i32) -> (i32, i32) {
    %c0_i32 = arith.constant 0 : i32
    return %arg0, %arg2 : i32, i32
  }
  func.func @transform_1(%arg0: i32, %arg1: i32, %arg2: i32) -> (i32, i32) {
    %c0_i32 = arith.constant 0 : i32
    return %arg2, %arg1 : i32, i32
  }
  func.func @transform_2(%arg0: i32, %arg1: i32, %arg2: i32) -> (i32, i32) {
    %c0_i32 = arith.constant 0 : i32
    return %arg0, %arg1 : i32, i32
  }
  func.func @transform_3(%arg0: i32, %arg1: i32, %arg2: i32) -> (i32, i32) {
    %c0_i32 = arith.constant 0 : i32
    %c0_i32_0 = arith.constant 0 : i32
    return %arg0, %c0_i32 : i32, i32
  }
  func.func @transform_4(%arg0: i32, %arg1: i32, %arg2: i32) -> (i32, i32) {
    %c0_i32 = arith.constant 0 : i32
    return %arg0, %arg1 : i32, i32
  }
  func.func @transform_5(%arg0: i32, %arg1: i32, %arg2: i32) -> (i32, i32) {
    %c0_i32 = arith.constant 0 : i32
    return %arg0, %arg1 : i32, i32
  }
}

module attributes {stable_mosaic.version = 11 : i64} {
  func.func @_denoise_loss_kernel(%arg0: i32, %arg1: i32, %arg2: memref<8x512xbf16, #tpu.memory_space<vmem>>, %arg3: memref<8x512xbf16, #tpu.memory_space<vmem>>, %arg4: memref<8x512xbf16, #tpu.memory_space<vmem>>, %arg5: memref<512x256xbf16, #tpu.memory_space<vmem>>, %arg6: memref<512x256xbf16, #tpu.memory_space<vmem>>, %arg7: memref<512x256xbf16, #tpu.memory_space<vmem>>, %arg8: memref<8x1xf32, #tpu.memory_space<vmem>>, %arg9: memref<1x256xf32, #tpu.memory_space<vmem>>, %arg10: memref<1x256xf32, #tpu.memory_space<vmem>>, %arg11: memref<256x512xbf16, #tpu.memory_space<vmem>>, %arg12: memref<1x512xf32, #tpu.memory_space<vmem>>, %arg13: memref<8x512xbf16, #tpu.memory_space<vmem>>, %arg14: memref<8x1xf32, #tpu.memory_space<vmem>>, %arg15: memref<8x256xf32, #tpu.memory_space<vmem>>, %arg16: memref<8x256xbf16, #tpu.memory_space<vmem>>, %arg17: memref<8x1xf32, #tpu.memory_space<vmem>>) attributes {dimension_semantics = [#tpu.dimension_semantics<parallel>, #tpu.dimension_semantics<arbitrary>], iteration_bounds = array<i64: 1, 2>, scalar_prefetch = 0 : i64, scratch_operands = 3 : i64, tpu.core_type = #tpu.core_type<tc>, window_params = [{transform_indices = @transform_0, window_bounds = array<i64: 8, 512>}, {transform_indices = @transform_1, window_bounds = array<i64: 8, 512>}, {transform_indices = @transform_2, window_bounds = array<i64: 8, 512>}, {transform_indices = @transform_3, window_bounds = array<i64: 512, 256>}, {transform_indices = @transform_4, window_bounds = array<i64: 512, 256>}, {transform_indices = @transform_5, window_bounds = array<i64: 512, 256>}, {transform_indices = @transform_6, window_bounds = array<i64: 8, 1>}, {pipeline_mode = #tpu.pipeline_mode<synchronous>, transform_indices = @transform_7, window_bounds = array<i64: 1, 256>}, {pipeline_mode = #tpu.pipeline_mode<synchronous>, transform_indices = @transform_8, window_bounds = array<i64: 1, 256>}, {transform_indices = @transform_9, window_bounds = array<i64: 256, 512>}, {transform_indices = @transform_10, window_bounds = array<i64: 1, 512>}, {transform_indices = @transform_11, window_bounds = array<i64: 8, 512>}, {transform_indices = @transform_12, window_bounds = array<i64: 8, 1>}]} {
    %c0_i32 = arith.constant 0 : i32
    %0 = arith.cmpi eq, %arg1, %c0_i32 : i32
    %1 = arith.extui %0 : i1 to i32
    %c0_i32_0 = arith.constant 0 : i32
    %2 = arith.cmpi ne, %1, %c0_i32_0 : i32
    scf.if %2 {
      %cst = arith.constant 0.000000e+00 : f32
      %15 = vector.broadcast %cst : f32 to vector<8x256xf32>
      %c0 = arith.constant 0 : index
      %c0_8 = arith.constant 0 : index
      %16 = vector.load %arg15[%c0, %c0_8] : memref<8x256xf32, #tpu.memory_space<vmem>>, vector<8x256xf32>
      tpu.vector_store %arg15[%c0, %c0_8], %15 {strides = array<i32>} : memref<8x256xf32, #tpu.memory_space<vmem>>, vector<8x256xf32>,
      %cst_9 = arith.constant 0.000000e+00 : f32
      %17 = vector.broadcast %cst_9 : f32 to vector<8x1xf32>
      %c0_10 = arith.constant 0 : index
      %c0_11 = arith.constant 0 : index
      %18 = vector.load %arg17[%c0_10, %c0_11] : memref<8x1xf32, #tpu.memory_space<vmem>>, vector<8x1xf32>
      tpu.vector_store %arg17[%c0_10, %c0_11], %17 {strides = array<i32>} : memref<8x1xf32, #tpu.memory_space<vmem>>, vector<8x1xf32>,
    } else {
    }
    %c1_i32 = arith.constant 1 : i32
    %3 = arith.cmpi slt, %arg1, %c1_i32 : i32
    %4 = arith.extui %3 : i1 to i32
    %c0_i32_1 = arith.constant 0 : i32
    %5 = arith.cmpi ne, %4, %c0_i32_1 : i32
    scf.if %5 {
      %c0 = arith.constant 0 : index
      %c0_8 = arith.constant 0 : index
      %15 = vector.load %arg15[%c0, %c0_8] : memref<8x256xf32, #tpu.memory_space<vmem>>, vector<8x256xf32>
      %c0_9 = arith.constant 0 : index
      %c0_10 = arith.constant 0 : index
      %16 = vector.load %arg2[%c0_9, %c0_10] : memref<8x512xbf16, #tpu.memory_space<vmem>>, vector<8x512xbf16>
      %c0_11 = arith.constant 0 : index
      %c0_12 = arith.constant 0 : index
      %17 = vector.load %arg5[%c0_11, %c0_12] : memref<512x256xbf16, #tpu.memory_space<vmem>>, vector<512x256xbf16>
      %cst = arith.constant dense<0.000000e+00> : vector<8x256xf32>
      %18 = tpu.matmul %16, %17, %cst {dimension_numbers = #tpu.dot_dimension_numbers<[1], [0], [0], [1], [0, 0, 1, 1], [], []>} : vector<8x512xbf16>, vector<512x256xbf16>, vector<8x256xf32> -> vector<8x256xf32>
      %c0_13 = arith.constant 0 : index
      %c0_14 = arith.constant 0 : index
      %19 = vector.load %arg3[%c0_13, %c0_14] : memref<8x512xbf16, #tpu.memory_space<vmem>>, vector<8x512xbf16>
      %c0_15 = arith.constant 0 : index
      %c0_16 = arith.constant 0 : index
      %20 = vector.load %arg6[%c0_15, %c0_16] : memref<512x256xbf16, #tpu.memory_space<vmem>>, vector<512x256xbf16>
      %cst_17 = arith.constant dense<0.000000e+00> : vector<8x256xf32>
      %21 = tpu.matmul %19, %20, %cst_17 {dimension_numbers = #tpu.dot_dimension_numbers<[1], [0], [0], [1], [0, 0, 1, 1], [], []>} : vector<8x512xbf16>, vector<512x256xbf16>, vector<8x256xf32> -> vector<8x256xf32>
      %22 = arith.addf %18, %21 : vector<8x256xf32>
      %c0_18 = arith.constant 0 : index
      %c0_19 = arith.constant 0 : index
      %23 = vector.load %arg4[%c0_18, %c0_19] : memref<8x512xbf16, #tpu.memory_space<vmem>>, vector<8x512xbf16>
      %c0_20 = arith.constant 0 : index
      %c0_21 = arith.constant 0 : index
      %24 = vector.load %arg7[%c0_20, %c0_21] : memref<512x256xbf16, #tpu.memory_space<vmem>>, vector<512x256xbf16>
      %cst_22 = arith.constant dense<0.000000e+00> : vector<8x256xf32>
      %25 = tpu.matmul %23, %24, %cst_22 {dimension_numbers = #tpu.dot_dimension_numbers<[1], [0], [0], [1], [0, 0, 1, 1], [], []>} : vector<8x512xbf16>, vector<512x256xbf16>, vector<8x256xf32> -> vector<8x256xf32>
      %26 = arith.addf %22, %25 : vector<8x256xf32>
      %27 = arith.addf %15, %26 : vector<8x256xf32>
      %c0_23 = arith.constant 0 : index
      %c0_24 = arith.constant 0 : index
      %28 = vector.load %arg15[%c0_23, %c0_24] : memref<8x256xf32, #tpu.memory_space<vmem>>, vector<8x256xf32>
      tpu.vector_store %arg15[%c0_23, %c0_24], %27 {strides = array<i32>} : memref<8x256xf32, #tpu.memory_space<vmem>>, vector<8x256xf32>,
    } else {
    }
    %c0_i32_2 = arith.constant 0 : i32
    %6 = arith.cmpi eq, %arg1, %c0_i32_2 : i32
    %7 = arith.extui %6 : i1 to i32
    %c0_i32_3 = arith.constant 0 : i32
    %8 = arith.cmpi ne, %7, %c0_i32_3 : i32
    scf.if %8 {
      %c0 = arith.constant 0 : index
      %c0_8 = arith.constant 0 : index
      %15 = vector.load %arg8[%c0, %c0_8] : memref<8x1xf32, #tpu.memory_space<vmem>>, vector<8x1xf32>
      %cst = arith.constant 5.000000e-01 : f32
      %16 = vector.broadcast %cst : f32 to vector<8x1xf32>
      %17 = arith.mulf %15, %16 : vector<8x1xf32>
      %c0_9 = arith.constant 0 : index
      %c0_10 = arith.constant 0 : index
      %18 = vector.load %arg15[%c0_9, %c0_10] : memref<8x256xf32, #tpu.memory_space<vmem>>, vector<8x256xf32>
      %c0_11 = arith.constant 0 : index
      %c0_12 = arith.constant 0 : index
      %19 = vector.load %arg9[%c0_11, %c0_12] : memref<1x256xf32, #tpu.memory_space<vmem>>, vector<1x256xf32>
      %20 = vector.broadcast %17 : vector<8x1xf32> to vector<8x256xf32>
      %21 = vector.broadcast %19 : vector<1x256xf32> to vector<8x256xf32>
      %22 = arith.mulf %20, %21 : vector<8x256xf32>
      %23 = arith.addf %18, %22 : vector<8x256xf32>
      %c0_13 = arith.constant 0 : index
      %c0_14 = arith.constant 0 : index
      %24 = vector.load %arg10[%c0_13, %c0_14] : memref<1x256xf32, #tpu.memory_space<vmem>>, vector<1x256xf32>
      %25 = vector.broadcast %24 : vector<1x256xf32> to vector<8x256xf32>
      %26 = arith.addf %23, %25 : vector<8x256xf32>
      %27 = math.tanh %26 : vector<8x256xf32>
      %28 = arith.truncf %27 : vector<8x256xf32> to vector<8x256xbf16>
      %c0_15 = arith.constant 0 : index
      %c0_16 = arith.constant 0 : index
      %29 = vector.load %arg16[%c0_15, %c0_16] : memref<8x256xbf16, #tpu.memory_space<vmem>>, vector<8x256xbf16>
      tpu.vector_store %arg16[%c0_15, %c0_16], %28 {strides = array<i32>} : memref<8x256xbf16, #tpu.memory_space<vmem>>, vector<8x256xbf16>,
    } else {
    }
    %c1_i32_4 = arith.constant 1 : i32
    %9 = arith.cmpi sge, %arg1, %c1_i32_4 : i32
    %10 = arith.extui %9 : i1 to i32
    %c0_i32_5 = arith.constant 0 : i32
    %11 = arith.cmpi ne, %10, %c0_i32_5 : i32
    scf.if %11 {
      %c0 = arith.constant 0 : index
      %c0_8 = arith.constant 0 : index
      %15 = vector.load %arg16[%c0, %c0_8] : memref<8x256xbf16, #tpu.memory_space<vmem>>, vector<8x256xbf16>
      %c0_9 = arith.constant 0 : index
      %c0_10 = arith.constant 0 : index
      %16 = vector.load %arg11[%c0_9, %c0_10] : memref<256x512xbf16, #tpu.memory_space<vmem>>, vector<256x512xbf16>
      %cst = arith.constant dense<0.000000e+00> : vector<8x512xf32>
      %17 = tpu.matmul %15, %16, %cst {dimension_numbers = #tpu.dot_dimension_numbers<[1], [0], [0], [1], [0, 0, 1, 1], [], []>} : vector<8x256xbf16>, vector<256x512xbf16>, vector<8x512xf32> -> vector<8x512xf32>
      %c0_11 = arith.constant 0 : index
      %c0_12 = arith.constant 0 : index
      %18 = vector.load %arg12[%c0_11, %c0_12] : memref<1x512xf32, #tpu.memory_space<vmem>>, vector<1x512xf32>
      %19 = vector.broadcast %18 : vector<1x512xf32> to vector<8x512xf32>
      %20 = arith.addf %17, %19 : vector<8x512xf32>
      %c0_13 = arith.constant 0 : index
      %c0_14 = arith.constant 0 : index
      %21 = vector.load %arg13[%c0_13, %c0_14] : memref<8x512xbf16, #tpu.memory_space<vmem>>, vector<8x512xbf16>
      %22 = arith.extf %21 : vector<8x512xbf16> to vector<8x512xf32>
      %23 = arith.subf %22, %20 : vector<8x512xf32>
      %c0_15 = arith.constant 0 : index
      %c0_16 = arith.constant 0 : index
      %24 = vector.load %arg17[%c0_15, %c0_16] : memref<8x1xf32, #tpu.memory_space<vmem>>, vector<8x1xf32>
      %25 = arith.mulf %23, %23 : vector<8x512xf32>
      %cst_17 = arith.constant dense<0.000000e+00> : vector<8xf32>
      %26 = vector.multi_reduction <add>, %25, %cst_17 [1] : vector<8x512xf32> to vector<8xf32>
      %27 = vector.shape_cast %26 : vector<8xf32> to vector<8x1xf32>
      %28 = arith.addf %24, %27 : vector<8x1xf32>
      %c0_18 = arith.constant 0 : index
      %c0_19 = arith.constant 0 : index
      %29 = vector.load %arg17[%c0_18, %c0_19] : memref<8x1xf32, #tpu.memory_space<vmem>>, vector<8x1xf32>
      tpu.vector_store %arg17[%c0_18, %c0_19], %28 {strides = array<i32>} : memref<8x1xf32, #tpu.memory_space<vmem>>, vector<8x1xf32>,
    } else {
    }
    %c1_i32_6 = arith.constant 1 : i32
    %12 = arith.cmpi eq, %arg1, %c1_i32_6 : i32
    %13 = arith.extui %12 : i1 to i32
    %c0_i32_7 = arith.constant 0 : i32
    %14 = arith.cmpi ne, %13, %c0_i32_7 : i32
    scf.if %14 {
      %c0 = arith.constant 0 : index
      %c0_8 = arith.constant 0 : index
      %15 = vector.load %arg17[%c0, %c0_8] : memref<8x1xf32, #tpu.memory_space<vmem>>, vector<8x1xf32>
      %c0_9 = arith.constant 0 : index
      %c0_10 = arith.constant 0 : index
      %16 = vector.load %arg14[%c0_9, %c0_10] : memref<8x1xf32, #tpu.memory_space<vmem>>, vector<8x1xf32>
      tpu.vector_store %arg14[%c0_9, %c0_10], %15 {strides = array<i32>} : memref<8x1xf32, #tpu.memory_space<vmem>>, vector<8x1xf32>,
    } else {
    }
    return
  }
  func.func @transform_0(%arg0: i32, %arg1: i32) -> (i32, i32) {
    %c0_i32 = arith.constant 0 : i32
    %0 = arith.minsi %arg1, %c0_i32 : i32
    %c0_i32_0 = arith.constant 0 : i32
    return %arg0, %0 : i32, i32
  }
  func.func @transform_1(%arg0: i32, %arg1: i32) -> (i32, i32) {
    %c1_i32 = arith.constant 1 : i32
    %0 = arith.addi %arg0, %c1_i32 : i32
    %c0_i32 = arith.constant 0 : i32
    %1 = arith.minsi %arg1, %c0_i32 : i32
    %c0_i32_0 = arith.constant 0 : i32
    return %0, %1 : i32, i32
  }
  func.func @transform_2(%arg0: i32, %arg1: i32) -> (i32, i32) {
    %c1_i32 = arith.constant 1 : i32
    %0 = arith.addi %arg0, %c1_i32 : i32
    %c0_i32 = arith.constant 0 : i32
    %1 = arith.minsi %arg1, %c0_i32 : i32
    %c0_i32_0 = arith.constant 0 : i32
    return %0, %1 : i32, i32
  }
  func.func @transform_3(%arg0: i32, %arg1: i32) -> (i32, i32) {
    %c0_i32 = arith.constant 0 : i32
    %0 = arith.minsi %arg1, %c0_i32 : i32
    %c0_i32_0 = arith.constant 0 : i32
    %c0_i32_1 = arith.constant 0 : i32
    return %0, %c0_i32_0 : i32, i32
  }
  func.func @transform_4(%arg0: i32, %arg1: i32) -> (i32, i32) {
    %c0_i32 = arith.constant 0 : i32
    %0 = arith.minsi %arg1, %c0_i32 : i32
    %c0_i32_0 = arith.constant 0 : i32
    %c0_i32_1 = arith.constant 0 : i32
    return %0, %c0_i32_0 : i32, i32
  }
  func.func @transform_5(%arg0: i32, %arg1: i32) -> (i32, i32) {
    %c0_i32 = arith.constant 0 : i32
    %0 = arith.minsi %arg1, %c0_i32 : i32
    %c0_i32_0 = arith.constant 0 : i32
    %c0_i32_1 = arith.constant 0 : i32
    return %0, %c0_i32_0 : i32, i32
  }
  func.func @transform_6(%arg0: i32, %arg1: i32) -> (i32, i32) {
    %c0_i32 = arith.constant 0 : i32
    %c0_i32_0 = arith.constant 0 : i32
    return %arg0, %c0_i32 : i32, i32
  }
  func.func @transform_7(%arg0: i32, %arg1: i32) -> (i32, i32) {
    %c0_i32 = arith.constant 0 : i32
    %c0_i32_0 = arith.constant 0 : i32
    %c0_i32_1 = arith.constant 0 : i32
    return %c0_i32, %c0_i32_0 : i32, i32
  }
  func.func @transform_8(%arg0: i32, %arg1: i32) -> (i32, i32) {
    %c0_i32 = arith.constant 0 : i32
    %c0_i32_0 = arith.constant 0 : i32
    %c0_i32_1 = arith.constant 0 : i32
    return %c0_i32, %c0_i32_0 : i32, i32
  }
  func.func @transform_9(%arg0: i32, %arg1: i32) -> (i32, i32) {
    %c1_i32 = arith.constant 1 : i32
    %0 = arith.subi %arg1, %c1_i32 : i32
    %c0_i32 = arith.constant 0 : i32
    %1 = arith.maxsi %0, %c0_i32 : i32
    %c0_i32_0 = arith.constant 0 : i32
    %c0_i32_1 = arith.constant 0 : i32
    return %c0_i32_0, %1 : i32, i32
  }
  func.func @transform_10(%arg0: i32, %arg1: i32) -> (i32, i32) {
    %c1_i32 = arith.constant 1 : i32
    %0 = arith.subi %arg1, %c1_i32 : i32
    %c0_i32 = arith.constant 0 : i32
    %1 = arith.maxsi %0, %c0_i32 : i32
    %c0_i32_0 = arith.constant 0 : i32
    %c0_i32_1 = arith.constant 0 : i32
    return %c0_i32_0, %1 : i32, i32
  }
  func.func @transform_11(%arg0: i32, %arg1: i32) -> (i32, i32) {
    %c1_i32 = arith.constant 1 : i32
    %0 = arith.subi %arg1, %c1_i32 : i32
    %c0_i32 = arith.constant 0 : i32
    %1 = arith.maxsi %0, %c0_i32 : i32
    %c0_i32_0 = arith.constant 0 : i32
    return %arg0, %1 : i32, i32
  }
  func.func @transform_12(%arg0: i32, %arg1: i32) -> (i32, i32) {
    %c0_i32 = arith.constant 0 : i32
    %c0_i32_0 = arith.constant 0 : i32
    return %arg0, %c0_i32 : i32, i32
  }
}

</mosaic_0001>

<llo_original>
// kernel: forward.3
$region0: #{forward.3}
  #allocation0 [shape = 'u32[]', space=smem, size = 0x4, offset = 0x4, fixed_abs, tag = 'smem constant byte address 0x4 - core index']
  #allocation1 [shape = 'u32[72,128]{1,0:T(1,128)}', space=vmem, size = 0x9000, scoped, tag = 'internal scratch']
  #allocation2 [shape = 'f32[16,128]{1,0:T(8,128)}', space=vmem, size = 0x2000, scoped, tag = 'scratch operand']
  %s0 = inlined_call_operand.vmem [shape: bf16[16,512], index: 0, kind: input, shape index: {}]
  %s1 = inlined_call_operand.hbm [shape: bf16[512,128], index: 1, kind: input, shape index: {}]
  %s2 = inlined_call_operand.vmem [shape: bf16[16,128], index: 2, kind: output, shape index: {}]
  %s3 = sld [smem:[#allocation0]]
  $region30: #{forward.3} parent=0
    _
  %s5 = ssub.s32 1, %s3
  %s6 = scalar_select 0, %s5, %s3
  $region1: #{forward.3} parent=0
    #allocation3 [shape = 'u8[131072]{0}', space=vmem, size = 0x20000, scoped, tag = 'input window, operand 1, single buffered']
    #allocation4 [shape = 's32[1]{0}', space=sflag, size = 0x4, scoped, tag = 'scoped memory for forward.3']
    %7 = vsyncpa [#allocation4], 0
    // Predicated region
    $region2: #{forward.3} parent=1 // pred_check
      _
    $region3: #{forward.3} parent=1 // pred_check_branch
      %9 = sbr.rel (0) target = $region5
    $region4: #{forward.3} parent=1 // pred_region
      _
    $region5: #{forward.3} parent=1 // pred_fallthru
      _
    // Predicated region
    $region6: #{forward.3} parent=1 // pred_check
      _
    $region7: #{forward.3} parent=1 // pred_check_branch
      %11 = sbr.rel (0) target = $region9
    $region8: #{forward.3} parent=1 // pred_region
      %13 = vsyncadd [#allocation4], 0
      %s14 = sshll.u32 %s1, 4
      %s15 = int_to_ptr.hbm [resolvable:$true] %s14
      %s16 = sshll.u32 [#allocation3], 4
      %s17 = int_to_ptr.vmem [resolvable:$true] %s16
      %22 = dma.hbm_to_vmem [thread:$0]  %s15, 4096, %s17, [#allocation4], 64, 64, 4
    $region9: #{forward.3} parent=1 // pred_fallthru
      _
    // Predicated region
    $region10: #{forward.3} parent=1 // pred_check
      _
    $region11: #{forward.3} parent=1 // pred_check_branch
      %24 = sbr.rel (0) target = $region13
    $region12: #{forward.3} parent=1 // pred_region
      %26 = dma.done [#allocation4], 4096
    $region13: #{forward.3} parent=1 // pred_fallthru
      _
    %p27 = scmp.eq.s32.totalorder 0, 0
    // Predicated region
    $region14: #{forward.3} parent=1 // pred_check
      %p28 = pneg %p27
    $region15: #{forward.3} parent=1 // pred_check_branch
      %30 = sbr.rel (%p28) target = $region17
    $region16: #{forward.3} parent=1 // pred_region
      %31 = vst [vmem:[#allocation2] sm:$0xff] 0.0
      %32 = vst [vmem:[#allocation2 + $0x8] sm:$0xff] 0.0
    $region17: #{forward.3} parent=1 // pred_fallthru
      _
    %v33 = vld [vmem:[#allocation2] sm:$0xff]
    %v34 = vld [vmem:[#allocation2 + $0x8] sm:$0xff]
    %v35 = vld [vmem:[%s0] sm:$0xff]
    %v36 = vld [vmem:[%s0 + $0x8] sm:$0xff]
    %v37 = vld [vmem:[%s0 + $0x10] sm:$0xff]
    %v38 = vld [vmem:[%s0 + $0x18] sm:$0xff]
    %v39 = vld [vmem:[#allocation3] sm:$0xf]
    %v40 = vld [vmem:[#allocation3 + $0x4] sm:$0xf]
    %v41 = vld [vmem:[#allocation3 + $0x8] sm:$0xf]
    %v42 = vld [vmem:[#allocation3 + $0xc] sm:$0xf]
    %v43 = vld [vmem:[#allocation3 + $0x10] sm:$0xf]
    %v44 = vld [vmem:[#allocation3 + $0x14] sm:$0xf]
    %v45 = vld [vmem:[#allocation3 + $0x18] sm:$0xf]
    %v46 = vld [vmem:[#allocation3 + $0x1c] sm:$0xf]
    %v47 = vld [vmem:[#allocation3 + $0x20] sm:$0xf]
    %v48 = vld [vmem:[#allocation3 + $0x24] sm:$0xf]
    %v49 = vld [vmem:[#allocation3 + $0x28] sm:$0xf]
    %v50 = vld [vmem:[#allocation3 + $0x2c] sm:$0xf]
    %v51 = vld [vmem:[#allocation3 + $0x30] sm:$0xf]
    %v52 = vld [vmem:[#allocation3 + $0x34] sm:$0xf]
    %v53 = vld [vmem:[#allocation3 + $0x38] sm:$0xf]
    %v54 = vld [vmem:[#allocation3 + $0x3c] sm:$0xf]
    %v55 = vld [vmem:[#allocation3 + $0x40] sm:$0xf]
    %v56 = vld [vmem:[#allocation3 + $0x44] sm:$0xf]
    %v57 = vld [vmem:[#allocation3 + $0x48] sm:$0xf]
    %v58 = vld [vmem:[#allocation3 + $0x4c] sm:$0xf]
    %v59 = vld [vmem:[#allocation3 + $0x50] sm:$0xf]
    %v60 = vld [vmem:[#allocation3 + $0x54] sm:$0xf]
    %v61 = vld [vmem:[#allocation3 + $0x58] sm:$0xf]
    %v62 = vld [vmem:[#allocation3 + $0x5c] sm:$0xf]
    %v63 = vld [vmem:[#allocation3 + $0x60] sm:$0xf]
    %v64 = vld [vmem:[#allocation3 + $0x64] sm:$0xf]
    %v65 = vld [vmem:[#allocation3 + $0x68] sm:$0xf]
    %v66 = vld [vmem:[#allocation3 + $0x6c] sm:$0xf]
    %v67 = vld [vmem:[#allocation3 + $0x70] sm:$0xf]
    %v68 = vld [vmem:[#allocation3 + $0x74] sm:$0xf]
    %v69 = vld [vmem:[#allocation3 + $0x78] sm:$0xf]
    %v70 = vld [vmem:[#allocation3 + $0x7c] sm:$0xf]
    %v71 = vld [vmem:[#allocation3 + $0x80] sm:$0xf]
    %v72 = vld [vmem:[#allocation3 + $0x84] sm:$0xf]
    %v73 = vld [vmem:[#allocation3 + $0x88] sm:$0xf]
    %v74 = vld [vmem:[#allocation3 + $0x8c] sm:$0xf]
    %v75 = vld [vmem:[#allocation3 + $0x90] sm:$0xf]
    %v76 = vld [vmem:[#allocation3 + $0x94] sm:$0xf]
    %v77 = vld [vmem:[#allocation3 + $0x98] sm:$0xf]
    %v78 = vld [vmem:[#allocation3 + $0x9c] sm:$0xf]
    %v79 = vld [vmem:[#allocation3 + $0xa0] sm:$0xf]
    %v80 = vld [vmem:[#allocation3 + $0xa4] sm:$0xf]
    %v81 = vld [vmem:[#allocation3 + $0xa8] sm:$0xf]
    %v82 = vld [vmem:[#allocation3 + $0xac] sm:$0xf]
    %v83 = vld [vmem:[#allocation3 + $0xb0] sm:$0xf]
    %v84 = vld [vmem:[#allocation3 + $0xb4] sm:$0xf]
    %v85 = vld [vmem:[#allocation3 + $0xb8] sm:$0xf]
    %v86 = vld [vmem:[#allocation3 + $0xbc] sm:$0xf]
    %v87 = vld [vmem:[#allocation3 + $0xc0] sm:$0xf]
    %v88 = vld [vmem:[#allocation3 + $0xc4] sm:$0xf]
    %v89 = vld [vmem:[#allocation3 + $0xc8] sm:$0xf]
    %v90 = vld [vmem:[#allocation3 + $0xcc] sm:$0xf]
    %v91 = vld [vmem:[#allocation3 + $0xd0] sm:$0xf]
    %v92 = vld [vmem:[#allocation3 + $0xd4] sm:$0xf]
    %v93 = vld [vmem:[#allocation3 + $0xd8] sm:$0xf]
    %v94 = vld [vmem:[#allocation3 + $0xdc] sm:$0xf]
    %v95 = vld [vmem:[#allocation3 + $0xe0] sm:$0xf]
    %v96 = vld [vmem:[#allocation3 + $0xe4] sm:$0xf]
    %v97 = vld [vmem:[#allocation3 + $0xe8] sm:$0xf]
    %v98 = vld [vmem:[#allocation3 + $0xec] sm:$0xf]
    %v99 = vld [vmem:[#allocation3 + $0xf0] sm:$0xf]
    %v100 = vld [vmem:[#allocation3 + $0xf4] sm:$0xf]
    %v101 = vld [vmem:[#allocation3 + $0xf8] sm:$0xf]
    %v102 = vld [vmem:[#allocation3 + $0xfc] sm:$0xf]
    %v107 = vunpack.c.l.b16 %v35
    %v108 = vunpack.c.h.b16 %v35
    %v109 = vunpack.c.l.b16 %v36
    %v110 = vunpack.c.h.b16 %v36
    %v111 = vunpack.c.l.b16 %v37
    %v112 = vunpack.c.h.b16 %v37
    %v113 = vunpack.c.l.b16 %v38
    %v114 = vunpack.c.h.b16 %v38
    %v115 = vpack.c.b16 %v111, %v107
    %v116 = vpack.c.b16 %v112, %v108
    %v117 = vpack.c.b16 %v113, %v109
    %v118 = vpack.c.b16 %v114, %v110
    %v187 = vunpack.c.l.b16 %v39
    %v188 = vunpack.c.l.b16 %v40
    %v189 = vunpack.c.l.b16 %v41
    %v190 = vunpack.c.l.b16 %v42
    %v191 = vunpack.c.l.b16 %v43
    %v192 = vunpack.c.l.b16 %v44
    %v193 = vunpack.c.l.b16 %v45
    %v194 = vunpack.c.l.b16 %v46
    %v195 = vunpack.c.l.b16 %v47
    %v196 = vunpack.c.l.b16 %v48
    %v197 = vunpack.c.l.b16 %v49
    %v198 = vunpack.c.l.b16 %v50
    %v199 = vunpack.c.l.b16 %v51
    %v200 = vunpack.c.l.b16 %v52
    %v201 = vunpack.c.l.b16 %v53
    %v202 = vunpack.c.l.b16 %v54
    %v203 = vunpack.c.l.b16 %v55
    %v204 = vunpack.c.l.b16 %v56
    %v205 = vunpack.c.l.b16 %v57
    %v206 = vunpack.c.l.b16 %v58
    %v207 = vunpack.c.l.b16 %v59
    %v208 = vunpack.c.l.b16 %v60
    %v209 = vunpack.c.l.b16 %v61
    %v210 = vunpack.c.l.b16 %v62
    %v211 = vunpack.c.l.b16 %v63
    %v212 = vunpack.c.l.b16 %v64
    %v213 = vunpack.c.l.b16 %v65
    %v214 = vunpack.c.l.b16 %v66
    %v215 = vunpack.c.l.b16 %v67
    %v216 = vunpack.c.l.b16 %v68
    %v217 = vunpack.c.l.b16 %v69
    %v218 = vunpack.c.l.b16 %v70
    %v219 = vunpack.c.l.b16 %v71
    %v220 = vunpack.c.l.b16 %v72
    %v221 = vunpack.c.l.b16 %v73
    %v222 = vunpack.c.l.b16 %v74
    %v223 = vunpack.c.l.b16 %v75
    %v224 = vunpack.c.l.b16 %v76
    %v225 = vunpack.c.l.b16 %v77
    %v226 = vunpack.c.l.b16 %v78
    %v227 = vunpack.c.l.b16 %v79
    %v228 = vunpack.c.l.b16 %v80
    %v229 = vunpack.c.l.b16 %v81
    %v230 = vunpack.c.l.b16 %v82
    %v231 = vunpack.c.l.b16 %v83
    %v232 = vunpack.c.l.b16 %v84
    %v233 = vunpack.c.l.b16 %v85
    %v234 = vunpack.c.l.b16 %v86
    %v235 = vunpack.c.l.b16 %v87
    %v236 = vunpack.c.l.b16 %v88
    %v237 = vunpack.c.l.b16 %v89
    %v238 = vunpack.c.l.b16 %v90
    %v239 = vunpack.c.l.b16 %v91
    %v240 = vunpack.c.l.b16 %v92
    %v241 = vunpack.c.l.b16 %v93
    %v242 = vunpack.c.l.b16 %v94
    %v243 = vunpack.c.l.b16 %v95
    %v244 = vunpack.c.l.b16 %v96
    %v245 = vunpack.c.l.b16 %v97
    %v246 = vunpack.c.l.b16 %v98
    %v247 = vunpack.c.l.b16 %v99
    %v248 = vunpack.c.l.b16 %v100
    %v249 = vunpack.c.l.b16 %v101
    %v250 = vunpack.c.l.b16 %v102
    %v251 = vpack.c.b16 %v188, %v187
    %v252 = vpack.c.b16 %v190, %v189
    %v253 = vpack.c.b16 %v192, %v191
    %v254 = vpack.c.b16 %v194, %v193
    %v255 = vpack.c.b16 %v196, %v195
    %v256 = vpack.c.b16 %v198, %v197
    %v257 = vpack.c.b16 %v200, %v199
    %v258 = vpack.c.b16 %v202, %v201
    %v259 = vpack.c.b16 %v204, %v203
    %v260 = vpack.c.b16 %v206, %v205
    %v261 = vpack.c.b16 %v208, %v207
    %v262 = vpack.c.b16 %v210, %v209
    %v263 = vpack.c.b16 %v212, %v211
    %v264 = vpack.c.b16 %v214, %v213
    %v265 = vpack.c.b16 %v216, %v215
    %v266 = vpack.c.b16 %v218, %v217
    %v267 = vpack.c.b16 %v220, %v219
    %v268 = vpack.c.b16 %v222, %v221
    %v269 = vpack.c.b16 %v224, %v223
    %v270 = vpack.c.b16 %v226, %v225
    %v271 = vpack.c.b16 %v228, %v227
    %v272 = vpack.c.b16 %v230, %v229
    %v273 = vpack.c.b16 %v232, %v231
    %v274 = vpack.c.b16 %v234, %v233
    %v275 = vpack.c.b16 %v236, %v235
    %v276 = vpack.c.b16 %v238, %v237
    %v277 = vpack.c.b16 %v240, %v239
    %v278 = vpack.c.b16 %v242, %v241
    %v279 = vpack.c.b16 %v244, %v243
    %v280 = vpack.c.b16 %v246, %v245
    %v281 = vpack.c.b16 %v248, %v247
    %v282 = vpack.c.b16 %v250, %v249
    %315 = vmatpush.bf16.msra.mxu0 %v258
    %316 = vmatpush.bf16.msra.mxu0 %v257
    %317 = vmatpush.bf16.msra.mxu0 %v256
    %318 = vmatpush.bf16.msra.mxu0 %v255
    %319 = vmatpush.bf16.msra.mxu0 %v254
    %320 = vmatpush.bf16.msra.mxu0 %v253
    %321 = vmatpush.bf16.msra.mxu0 %v252
    %322 = vmatpush.bf16.msra.mxu0 %v251
    %323 = vmatmul.bf16.gmra.mxu0 %v115
    %v324 = vpop.f32.mrf.mxu0
    %v325 = vadd.f32 0.0, %v324
    %v326 = vpop.f32.mrf.mxu0
    %v327 = vadd.f32 0.0, %v326
    %328 = vdwg.mxu0
    %329 = vmatpush.bf16.msra.mxu0 %v266
    %330 = vmatpush.bf16.msra.mxu0 %v265
    %331 = vmatpush.bf16.msra.mxu0 %v264
    %332 = vmatpush.bf16.msra.mxu0 %v263
    %333 = vmatpush.bf16.msra.mxu0 %v262
    %334 = vmatpush.bf16.msra.mxu0 %v261
    %335 = vmatpush.bf16.msra.mxu0 %v260
    %336 = vmatpush.bf16.msra.mxu0 %v259
    %337 = vmatmul.bf16.gmra.mxu0 %v116
    %v338 = vpop.f32.mrf.mxu0
    %v339 = vadd.f32 %v325, %v338
    %v340 = vpop.f32.mrf.mxu0
    %v341 = vadd.f32 %v327, %v340
    %342 = vdwg.mxu0
    %343 = vmatpush.bf16.msra.mxu0 %v274
    %344 = vmatpush.bf16.msra.mxu0 %v273
    %345 = vmatpush.bf16.msra.mxu0 %v272
    %346 = vmatpush.bf16.msra.mxu0 %v271
    %347 = vmatpush.bf16.msra.mxu0 %v270
    %348 = vmatpush.bf16.msra.mxu0 %v269
    %349 = vmatpush.bf16.msra.mxu0 %v268
    %350 = vmatpush.bf16.msra.mxu0 %v267
    %351 = vmatmul.bf16.gmra.mxu0 %v117
    %v352 = vpop.f32.mrf.mxu0
    %v353 = vadd.f32 %v339, %v352
    %v354 = vpop.f32.mrf.mxu0
    %v355 = vadd.f32 %v341, %v354
    %356 = vdwg.mxu0
    %357 = vmatpush.bf16.msra.mxu0 %v282
    %358 = vmatpush.bf16.msra.mxu0 %v281
    %359 = vmatpush.bf16.msra.mxu0 %v280
    %360 = vmatpush.bf16.msra.mxu0 %v279
    %361 = vmatpush.bf16.msra.mxu0 %v278
    %362 = vmatpush.bf16.msra.mxu0 %v277
    %363 = vmatpush.bf16.msra.mxu0 %v276
    %364 = vmatpush.bf16.msra.mxu0 %v275
    %365 = vmatmul.bf16.gmra.mxu0 %v118
    %v366 = vpop.f32.mrf.mxu0
    %v367 = vadd.f32 %v353, %v366
    %v368 = vpop.f32.mrf.mxu0
    %v369 = vadd.f32 %v355, %v368
    %370 = vdwg.mxu0
    %v371 = vadd.f32 %v33, %v367
    %v372 = vadd.f32 %v34, %v369
    %373 = vst [vmem:[#allocation2] sm:$0xff] %v371
    %374 = vst [vmem:[#allocation2 + $0x8] sm:$0xff] %v372
    // Predicated region
    $region18: #{forward.3} parent=1 // pred_check
      %p375 = pneg %p27
    $region19: #{forward.3} parent=1 // pred_check_branch
      %377 = sbr.rel (%p375) target = $region21
    $region20: #{forward.3} parent=1 // pred_region
      %v378 = vld [vmem:[#allocation2] sm:$0xff]
      %v379 = vld [vmem:[#allocation2 + $0x8] sm:$0xff]
      %v380 = vpack.c.bf16 %v378, %v378
      %v381 = vpack.c.bf16 %v379, %v379
      %382 = vst [vmem:[%s2] sm:$0xf] %v380
      %383 = vst [vmem:[%s2 + $0x4] sm:$0xf] %v381
    $region21: #{forward.3} parent=1 // pred_fallthru
      _
    // Predicated region
    $region22: #{forward.3} parent=1 // pred_check
      _
    $region23: #{forward.3} parent=1 // pred_check_branch
      %385 = sbr.rel (0) target = $region25
    $region24: #{forward.3} parent=1 // pred_region
      _
    $region25: #{forward.3} parent=1 // pred_fallthru
      _
    // Predicated region
    $region26: #{forward.3} parent=1 // pred_check
      _
    $region27: #{forward.3} parent=1 // pred_check_branch
      %387 = sbr.rel (0) target = $region29
    $region28: #{forward.3} parent=1 // pred_region
      _
    $region29: #{forward.3} parent=1 // pred_fallthru
      _
    %388 = vsyncpa [#allocation4], 1

// kernel: forward.4
$region0: #{forward.4}
  #allocation0 [shape = 'u32[]', space=smem, size = 0x4, offset = 0x4, fixed_abs, tag = 'smem constant byte address 0x4 - core index']
  #allocation1 [shape = 'u32[72,128]{1,0:T(1,128)}', space=vmem, size = 0x9000, scoped, tag = 'internal scratch']
  #allocation2 [shape = 'f32[16,512]{1,0:T(8,128)}', space=vmem, size = 0x8000, scoped, tag = 'scratch operand']
  %s0 = inlined_call_operand.vmem [shape: bf16[16,128], index: 0, kind: input, shape index: {}]
  %s1 = inlined_call_operand.hbm [shape: bf16[128,512], index: 1, kind: input, shape index: {}]
  %s2 = inlined_call_operand.vmem [shape: bf16[16,512], index: 2, kind: input, shape index: {}]
  %s3 = inlined_call_operand.vmem [shape: f32[16,1], index: 3, kind: input, shape index: {}]
  %s4 = inlined_call_operand.vmem [shape: bf16[16,512], index: 4, kind: input, shape index: {}]
  %s5 = inlined_call_operand.vmem [shape: bf16[16,512], index: 5, kind: output, shape index: {}]
  %s6 = sld [smem:[#allocation0]]
  $region42: #{forward.4} parent=0
    _
  %s8 = ssub.s32 1, %s6
  %s9 = scalar_select 0, %s8, %s6
  $region1: #{forward.4} parent=0
    #allocation3 [shape = 'u8[131072]{0}', space=vmem, size = 0x20000, scoped, tag = 'input window, operand 1, single buffered']
    #allocation4 [shape = 's32[1]{0}', space=sflag, size = 0x4, scoped, tag = 'scoped memory for forward.4']
    %10 = vsyncpa [#allocation4], 0
    // Predicated region
    $region2: #{forward.4} parent=1 // pred_check
      _
    $region3: #{forward.4} parent=1 // pred_check_branch
      %12 = sbr.rel (0) target = $region5
    $region4: #{forward.4} parent=1 // pred_region
      _
    $region5: #{forward.4} parent=1 // pred_fallthru
      _
    // Predicated region
    $region6: #{forward.4} parent=1 // pred_check
      _
    $region7: #{forward.4} parent=1 // pred_check_branch
      %14 = sbr.rel (0) target = $region9
    $region8: #{forward.4} parent=1 // pred_region
      %16 = vsyncadd [#allocation4], 0
      %s17 = sshll.u32 %s1, 4
      %s18 = int_to_ptr.hbm [resolvable:$true] %s17
      %s19 = sshll.u32 [#allocation3], 4
      %s20 = int_to_ptr.vmem [resolvable:$true] %s19
      %25 = dma.hbm_to_vmem [thread:$0]  %s18, 4096, %s20, [#allocation4], 256, 256, 16
    $region9: #{forward.4} parent=1 // pred_fallthru
      _
    // Predicated region
    $region10: #{forward.4} parent=1 // pred_check
      _
    $region11: #{forward.4} parent=1 // pred_check_branch
      %27 = sbr.rel (0) target = $region13
    $region12: #{forward.4} parent=1 // pred_region
      _
    $region13: #{forward.4} parent=1 // pred_fallthru
      _
    // Predicated region
    $region14: #{forward.4} parent=1 // pred_check
      _
    $region15: #{forward.4} parent=1 // pred_check_branch
      %29 = sbr.rel (0) target = $region17
    $region16: #{forward.4} parent=1 // pred_region
      _
    $region17: #{forward.4} parent=1 // pred_fallthru
      _
    // Predicated region
    $region18: #{forward.4} parent=1 // pred_check
      _
    $region19: #{forward.4} parent=1 // pred_check_branch
      %31 = sbr.rel (0) target = $region21
    $region20: #{forward.4} parent=1 // pred_region
      _
    $region21: #{forward.4} parent=1 // pred_fallthru
      _
    // Predicated region
    $region22: #{forward.4} parent=1 // pred_check
      _
    $region23: #{forward.4} parent=1 // pred_check_branch
      %33 = sbr.rel (0) target = $region25
    $region24: #{forward.4} parent=1 // pred_region
      %35 = dma.done [#allocation4], 4096
    $region25: #{forward.4} parent=1 // pred_fallthru
      _
    %p36 = scmp.eq.s32.totalorder 0, 0
    // Predicated region
    $region26: #{forward.4} parent=1 // pred_check
      %p37 = pneg %p36
    $region27: #{forward.4} parent=1 // pred_check_branch
      %39 = sbr.rel (%p37) target = $region29
    $region28: #{forward.4} parent=1 // pred_region
      %40 = vst [vmem:[#allocation2] sm:$0xff] 0.0
      %41 = vst [vmem:[#allocation2 + $0x8] sm:$0xff] 0.0
      %42 = vst [vmem:[#allocation2 + $0x10] sm:$0xff] 0.0
      %43 = vst [vmem:[#allocation2 + $0x18] sm:$0xff] 0.0
      %44 = vst [vmem:[#allocation2 + $0x20] sm:$0xff] 0.0
      %45 = vst [vmem:[#allocation2 + $0x28] sm:$0xff] 0.0
      %46 = vst [vmem:[#allocation2 + $0x30] sm:$0xff] 0.0
      %47 = vst [vmem:[#allocation2 + $0x38] sm:$0xff] 0.0
    $region29: #{forward.4} parent=1 // pred_fallthru
      _
    %v48 = vld [vmem:[#allocation2] sm:$0xff]
    %v49 = vld [vmem:[#allocation2 + $0x8] sm:$0xff]
    %v50 = vld [vmem:[#allocation2 + $0x10] sm:$0xff]
    %v51 = vld [vmem:[#allocation2 + $0x18] sm:$0xff]
    %v52 = vld [vmem:[#allocation2 + $0x20] sm:$0xff]
    %v53 = vld [vmem:[#allocation2 + $0x28] sm:$0xff]
    %v54 = vld [vmem:[#allocation2 + $0x30] sm:$0xff]
    %v55 = vld [vmem:[#allocation2 + $0x38] sm:$0xff]
    %v56 = vld [vmem:[%s0] sm:$0xf]
    %v57 = vld [vmem:[%s0 + $0x4] sm:$0xf]
    %v58 = vld [vmem:[#allocation3] sm:$0xff]
    %v59 = vld [vmem:[#allocation3 + $0x8] sm:$0xff]
    %v60 = vld [vmem:[#allocation3 + $0x10] sm:$0xff]
    %v61 = vld [vmem:[#allocation3 + $0x18] sm:$0xff]
    %v62 = vld [vmem:[#allocation3 + $0x20] sm:$0xff]
    %v63 = vld [vmem:[#allocation3 + $0x28] sm:$0xff]
    %v64 = vld [vmem:[#allocation3 + $0x30] sm:$0xff]
    %v65 = vld [vmem:[#allocation3 + $0x38] sm:$0xff]
    %v66 = vld [vmem:[#allocation3 + $0x40] sm:$0xff]
    %v67 = vld [vmem:[#allocation3 + $0x48] sm:$0xff]
    %v68 = vld [vmem:[#allocation3 + $0x50] sm:$0xff]
    %v69 = vld [vmem:[#allocation3 + $0x58] sm:$0xff]
    %v70 = vld [vmem:[#allocation3 + $0x60] sm:$0xff]
    %v71 = vld [vmem:[#allocation3 + $0x68] sm:$0xff]
    %v72 = vld [vmem:[#allocation3 + $0x70] sm:$0xff]
    %v73 = vld [vmem:[#allocation3 + $0x78] sm:$0xff]
    %v74 = vld [vmem:[#allocation3 + $0x80] sm:$0xff]
    %v75 = vld [vmem:[#allocation3 + $0x88] sm:$0xff]
    %v76 = vld [vmem:[#allocation3 + $0x90] sm:$0xff]
    %v77 = vld [vmem:[#allocation3 + $0x98] sm:$0xff]
    %v78 = vld [vmem:[#allocation3 + $0xa0] sm:$0xff]
    %v79 = vld [vmem:[#allocation3 + $0xa8] sm:$0xff]
    %v80 = vld [vmem:[#allocation3 + $0xb0] sm:$0xff]
    %v81 = vld [vmem:[#allocation3 + $0xb8] sm:$0xff]
    %v82 = vld [vmem:[#allocation3 + $0xc0] sm:$0xff]
    %v83 = vld [vmem:[#allocation3 + $0xc8] sm:$0xff]
    %v84 = vld [vmem:[#allocation3 + $0xd0] sm:$0xff]
    %v85 = vld [vmem:[#allocation3 + $0xd8] sm:$0xff]
    %v86 = vld [vmem:[#allocation3 + $0xe0] sm:$0xff]
    %v87 = vld [vmem:[#allocation3 + $0xe8] sm:$0xff]
    %v88 = vld [vmem:[#allocation3 + $0xf0] sm:$0xff]
    %v89 = vld [vmem:[#allocation3 + $0xf8] sm:$0xff]
    %v92 = vunpack.c.l.b16 %v56
    %v93 = vunpack.c.l.b16 %v57
    %v94 = vpack.c.b16 %v93, %v92
    %v128 = vunpack.c.l.b16 %v58
    %v129 = vunpack.c.h.b16 %v58
    %v130 = vunpack.c.l.b16 %v59
    %v131 = vunpack.c.h.b16 %v59
    %v132 = vunpack.c.l.b16 %v60
    %v133 = vunpack.c.h.b16 %v60
    %v134 = vunpack.c.l.b16 %v61
    %v135 = vunpack.c.h.b16 %v61
    %v136 = vunpack.c.l.b16 %v62
    %v137 = vunpack.c.h.b16 %v62
    %v138 = vunpack.c.l.b16 %v63
    %v139 = vunpack.c.h.b16 %v63
    %v140 = vunpack.c.l.b16 %v64
    %v141 = vunpack.c.h.b16 %v64
    %v142 = vunpack.c.l.b16 %v65
    %v143 = vunpack.c.h.b16 %v65
    %v144 = vunpack.c.l.b16 %v66
    %v145 = vunpack.c.h.b16 %v66
    %v146 = vunpack.c.l.b16 %v67
    %v147 = vunpack.c.h.b16 %v67
    %v148 = vunpack.c.l.b16 %v68
    %v149 = vunpack.c.h.b16 %v68
    %v150 = vunpack.c.l.b16 %v69
    %v151 = vunpack.c.h.b16 %v69
    %v152 = vunpack.c.l.b16 %v70
    %v153 = vunpack.c.h.b16 %v70
    %v154 = vunpack.c.l.b16 %v71
    %v155 = vunpack.c.h.b16 %v71
    %v156 = vunpack.c.l.b16 %v72
    %v157 = vunpack.c.h.b16 %v72
    %v158 = vunpack.c.l.b16 %v73
    %v159 = vunpack.c.h.b16 %v73
    %v160 = vunpack.c.l.b16 %v74
    %v161 = vunpack.c.h.b16 %v74
    %v162 = vunpack.c.l.b16 %v75
    %v163 = vunpack.c.h.b16 %v75
    %v164 = vunpack.c.l.b16 %v76
    %v165 = vunpack.c.h.b16 %v76
    %v166 = vunpack.c.l.b16 %v77
    %v167 = vunpack.c.h.b16 %v77
    %v168 = vunpack.c.l.b16 %v78
    %v169 = vunpack.c.h.b16 %v78
    %v170 = vunpack.c.l.b16 %v79
    %v171 = vunpack.c.h.b16 %v79
    %v172 = vunpack.c.l.b16 %v80
    %v173 = vunpack.c.h.b16 %v80
    %v174 = vunpack.c.l.b16 %v81
    %v175 = vunpack.c.h.b16 %v81
    %v176 = vunpack.c.l.b16 %v82
    %v177 = vunpack.c.h.b16 %v82
    %v178 = vunpack.c.l.b16 %v83
    %v179 = vunpack.c.h.b16 %v83
    %v180 = vunpack.c.l.b16 %v84
    %v181 = vunpack.c.h.b16 %v84
    %v182 = vunpack.c.l.b16 %v85
    %v183 = vunpack.c.h.b16 %v85
    %v184 = vunpack.c.l.b16 %v86
    %v185 = vunpack.c.h.b16 %v86
    %v186 = vunpack.c.l.b16 %v87
    %v187 = vunpack.c.h.b16 %v87
    %v188 = vunpack.c.l.b16 %v88
    %v189 = vunpack.c.h.b16 %v88
    %v190 = vunpack.c.l.b16 %v89
    %v191 = vunpack.c.h.b16 %v89
    %v192 = vpack.c.b16 %v132, %v128
    %v193 = vpack.c.b16 %v133, %v129
    %v194 = vpack.c.b16 %v134, %v130
    %v195 = vpack.c.b16 %v135, %v131
    %v196 = vpack.c.b16 %v140, %v136
    %v197 = vpack.c.b16 %v141, %v137
    %v198 = vpack.c.b16 %v142, %v138
    %v199 = vpack.c.b16 %v143, %v139
    %v200 = vpack.c.b16 %v148, %v144
    %v201 = vpack.c.b16 %v149, %v145
    %v202 = vpack.c.b16 %v150, %v146
    %v203 = vpack.c.b16 %v151, %v147
    %v204 = vpack.c.b16 %v156, %v152
    %v205 = vpack.c.b16 %v157, %v153
    %v206 = vpack.c.b16 %v158, %v154
    %v207 = vpack.c.b16 %v159, %v155
    %v208 = vpack.c.b16 %v164, %v160
    %v209 = vpack.c.b16 %v165, %v161
    %v210 = vpack.c.b16 %v166, %v162
    %v211 = vpack.c.b16 %v167, %v163
    %v212 = vpack.c.b16 %v172, %v168
    %v213 = vpack.c.b16 %v173, %v169
    %v214 = vpack.c.b16 %v174, %v170
    %v215 = vpack.c.b16 %v175, %v171
    %v216 = vpack.c.b16 %v180, %v176
    %v217 = vpack.c.b16 %v181, %v177
    %v218 = vpack.c.b16 %v182, %v178
    %v219 = vpack.c.b16 %v183, %v179
    %v220 = vpack.c.b16 %v188, %v184
    %v221 = vpack.c.b16 %v189, %v185
    %v222 = vpack.c.b16 %v190, %v186
    %v223 = vpack.c.b16 %v191, %v187
    %256 = vmatpush.bf16.msra.mxu0 %v220
    %257 = vmatpush.bf16.msra.mxu0 %v216
    %258 = vmatpush.bf16.msra.mxu0 %v212
    %259 = vmatpush.bf16.msra.mxu0 %v208
    %260 = vmatpush.bf16.msra.mxu0 %v204
    %261 = vmatpush.bf16.msra.mxu0 %v200
    %262 = vmatpush.bf16.msra.mxu0 %v196
    %263 = vmatpush.bf16.msra.mxu0 %v192
    %264 = vmatmul.bf16.gmra.mxu0 %v94
    %v265 = vpop.f32.mrf.mxu0
    %v266 = vadd.f32 0.0, %v265
    %v267 = vpop.f32.mrf.mxu0
    %v268 = vadd.f32 0.0, %v267
    %269 = vdwg.mxu0
    %270 = vmatpush.bf16.msra.mxu0 %v221
    %271 = vmatpush.bf16.msra.mxu0 %v217
    %272 = vmatpush.bf16.msra.mxu0 %v213
    %273 = vmatpush.bf16.msra.mxu0 %v209
    %274 = vmatpush.bf16.msra.mxu0 %v205
    %275 = vmatpush.bf16.msra.mxu0 %v201
    %276 = vmatpush.bf16.msra.mxu0 %v197
    %277 = vmatpush.bf16.msra.mxu0 %v193
    %278 = vmatmul.bf16.gmra.mxu0 %v94
    %v279 = vpop.f32.mrf.mxu0
    %v280 = vadd.f32 0.0, %v279
    %v281 = vpop.f32.mrf.mxu0
    %v282 = vadd.f32 0.0, %v281
    %283 = vdwg.mxu0
    %284 = vmatpush.bf16.msra.mxu0 %v222
    %285 = vmatpush.bf16.msra.mxu0 %v218
    %286 = vmatpush.bf16.msra.mxu0 %v214
    %287 = vmatpush.bf16.msra.mxu0 %v210
    %288 = vmatpush.bf16.msra.mxu0 %v206
    %289 = vmatpush.bf16.msra.mxu0 %v202
    %290 = vmatpush.bf16.msra.mxu0 %v198
    %291 = vmatpush.bf16.msra.mxu0 %v194
    %292 = vmatmul.bf16.gmra.mxu0 %v94
    %v293 = vpop.f32.mrf.mxu0
    %v294 = vadd.f32 0.0, %v293
    %v295 = vpop.f32.mrf.mxu0
    %v296 = vadd.f32 0.0, %v295
    %297 = vdwg.mxu0
    %298 = vmatpush.bf16.msra.mxu0 %v223
    %299 = vmatpush.bf16.msra.mxu0 %v219
    %300 = vmatpush.bf16.msra.mxu0 %v215
    %301 = vmatpush.bf16.msra.mxu0 %v211
    %302 = vmatpush.bf16.msra.mxu0 %v207
    %303 = vmatpush.bf16.msra.mxu0 %v203
    %304 = vmatpush.bf16.msra.mxu0 %v199
    %305 = vmatpush.bf16.msra.mxu0 %v195
    %306 = vmatmul.bf16.gmra.mxu0 %v94
    %v307 = vpop.f32.mrf.mxu0
    %v308 = vadd.f32 0.0, %v307
    %v309 = vpop.f32.mrf.mxu0
    %v310 = vadd.f32 0.0, %v309
    %311 = vdwg.mxu0
    %v312 = vadd.f32 %v48, %v266
    %v313 = vadd.f32 %v49, %v280
    %v314 = vadd.f32 %v50, %v294
    %v315 = vadd.f32 %v51, %v308
    %v316 = vadd.f32 %v52, %v268
    %v317 = vadd.f32 %v53, %v282
    %v318 = vadd.f32 %v54, %v296
    %v319 = vadd.f32 %v55, %v310
    %320 = vst [vmem:[#allocation2] sm:$0xff] %v312
    %321 = vst [vmem:[#allocation2 + $0x8] sm:$0xff] %v313
    %322 = vst [vmem:[#allocation2 + $0x10] sm:$0xff] %v314
    %323 = vst [vmem:[#allocation2 + $0x18] sm:$0xff] %v315
    %324 = vst [vmem:[#allocation2 + $0x20] sm:$0xff] %v316
    %325 = vst [vmem:[#allocation2 + $0x28] sm:$0xff] %v317
    %326 = vst [vmem:[#allocation2 + $0x30] sm:$0xff] %v318
    %327 = vst [vmem:[#allocation2 + $0x38] sm:$0xff] %v319
    // Predicated region
    $region30: #{forward.4} parent=1 // pred_check
      %p328 = pneg %p36
    $region31: #{forward.4} parent=1 // pred_check_branch
      %330 = sbr.rel (%p328) target = $region33
    $region32: #{forward.4} parent=1 // pred_region
      %v331 = vld [vmem:[#allocation2] sm:$0xff]
      %v332 = vld [vmem:[#allocation2 + $0x8] sm:$0xff]
      %v333 = vld [vmem:[#allocation2 + $0x10] sm:$0xff]
      %v334 = vld [vmem:[#allocation2 + $0x18] sm:$0xff]
      %v335 = vld [vmem:[#allocation2 + $0x20] sm:$0xff]
      %v336 = vld [vmem:[#allocation2 + $0x28] sm:$0xff]
      %v337 = vld [vmem:[#allocation2 + $0x30] sm:$0xff]
      %v338 = vld [vmem:[#allocation2 + $0x38] sm:$0xff]
      %v339 = vmul.f32 %v331, 0.08027374
      %v340 = vmul.f32 %v332, 0.08027374
      %v341 = vmul.f32 %v333, 0.08027374
      %v342 = vmul.f32 %v334, 0.08027374
      %v343 = vmul.f32 %v335, 0.08027374
      %v344 = vmul.f32 %v336, 0.08027374
      %v345 = vmul.f32 %v337, 0.08027374
      %v346 = vmul.f32 %v338, 0.08027374
      %v347 = vld [vmem:[%s2] sm:$0xff]
      %v348 = vld [vmem:[%s2 + $0x8] sm:$0xff]
      %v349 = vld [vmem:[%s2 + $0x10] sm:$0xff]
      %v350 = vld [vmem:[%s2 + $0x18] sm:$0xff]
      %v351 = vunpack.c.l.bf16 %v347
      %v352 = vunpack.c.h.bf16 %v347
      %v353 = vunpack.c.l.bf16 %v348
      %v354 = vunpack.c.h.bf16 %v348
      %v355 = vunpack.c.l.bf16 %v349
      %v356 = vunpack.c.h.bf16 %v349
      %v357 = vunpack.c.l.bf16 %v350
      %v358 = vunpack.c.h.bf16 %v350
      %v359 = vld [vmem:[%s3] sm:$0xff]
      %v360 = vld [vmem:[%s3 + $0x8] sm:$0xff]
      %v361 = vmul.f32 %v359, 1.25
      %v362 = vmul.f32 %v360, 1.25
      %v363 = vsub.f32 %v339, %v351
      %v364 = vsub.f32 %v340, %v352
      %v365 = vsub.f32 %v341, %v353
      %v366 = vsub.f32 %v342, %v354
      %v367 = vsub.f32 %v343, %v355
      %v368 = vsub.f32 %v344, %v356
      %v369 = vsub.f32 %v345, %v357
      %v370 = vsub.f32 %v346, %v358
      %372 = vset.pattern.permute.xlu0 0
      %373 = vperm.xlu0 %372, %v361
      %v374 = vpop.permute.xlu0 %373
      %377 = vset.pattern.permute.xlu0 0
      %378 = vperm.xlu0 %377, %v362
      %v379 = vpop.permute.xlu0 %378
      %v381 = vmul.f32 %v374, %v363
      %v382 = vmul.f32 %v374, %v364
      %v383 = vmul.f32 %v374, %v365
      %v384 = vmul.f32 %v374, %v366
      %v385 = vmul.f32 %v379, %v367
      %v386 = vmul.f32 %v379, %v368
      %v387 = vmul.f32 %v379, %v369
      %v388 = vmul.f32 %v379, %v370
      %v389 = vadd.f32 %v351, %v381
      %v390 = vadd.f32 %v352, %v382
      %v391 = vadd.f32 %v353, %v383
      %v392 = vadd.f32 %v354, %v384
      %v393 = vadd.f32 %v355, %v385
      %v394 = vadd.f32 %v356, %v386
      %v395 = vadd.f32 %v357, %v387
      %v396 = vadd.f32 %v358, %v388
      %v397 = vld [vmem:[%s4] sm:$0xff]
      %v398 = vld [vmem:[%s4 + $0x8] sm:$0xff]
      %v399 = vld [vmem:[%s4 + $0x10] sm:$0xff]
      %v400 = vld [vmem:[%s4 + $0x18] sm:$0xff]
      %v401 = vunpack.c.l.bf16 %v397
      %v402 = vunpack.c.h.bf16 %v397
      %v403 = vunpack.c.l.bf16 %v398
      %v404 = vunpack.c.h.bf16 %v398
      %v405 = vunpack.c.l.bf16 %v399
      %v406 = vunpack.c.h.bf16 %v399
      %v407 = vunpack.c.l.bf16 %v400
      %v408 = vunpack.c.h.bf16 %v400
      %v409 = vadd.f32 %v389, %v401
      %v410 = vadd.f32 %v390, %v402
      %v411 = vadd.f32 %v391, %v403
      %v412 = vadd.f32 %v392, %v404
      %v413 = vadd.f32 %v393, %v405
      %v414 = vadd.f32 %v394, %v406
      %v415 = vadd.f32 %v395, %v407
      %v416 = vadd.f32 %v396, %v408
      %s417 = smul.u32 0, 16
      %v418 = vlaneseq
      %v419 = vshrl.u32 %v418, 7
      %v420 = vadd.s32 %v419, 8
      %v421 = vstv %s417
      %v422 = vadd.s32 %v421, %v419
      %v423 = vadd.s32 %v421, %v420
      %vm424 = vcmp.lt.s32.totalorder %v422, 8
      %vm425 = vcmp.lt.s32.totalorder %v423, 8
      %v426 = vsel %vm424, 1, 0
      %v427 = vsel %vm425, 1, 0
      %vm428 = vcmp.eq.s32.totalorder %v426, 1
      %vm429 = vcmp.eq.s32.totalorder %v427, 1
      %v430 = vsel %vm428, %v409, %v339
      %v431 = vsel %vm428, %v410, %v340
      %v432 = vsel %vm428, %v411, %v341
      %v433 = vsel %vm428, %v412, %v342
      %v434 = vsel %vm429, %v413, %v343
      %v435 = vsel %vm429, %v414, %v344
      %v436 = vsel %vm429, %v415, %v345
      %v437 = vsel %vm429, %v416, %v346
      %v438 = vpack.c.bf16 %v431, %v430
      %v439 = vpack.c.bf16 %v433, %v432
      %v440 = vpack.c.bf16 %v435, %v434
      %v441 = vpack.c.bf16 %v437, %v436
      %442 = vst [vmem:[%s5] sm:$0xff] %v438
      %443 = vst [vmem:[%s5 + $0x8] sm:$0xff] %v439
      %444 = vst [vmem:[%s5 + $0x10] sm:$0xff] %v440
      %445 = vst [vmem:[%s5 + $0x18] sm:$0xff] %v441
    $region33: #{forward.4} parent=1 // pred_fallthru
      _
    // Predicated region
    $region34: #{forward.4} parent=1 // pred_check
      _
    $region35: #{forward.4} parent=1 // pred_check_branch
      %447 = sbr.rel (0) target = $region37
    $region36: #{forward.4} parent=1 // pred_region
      _
    $region37: #{forward.4} parent=1 // pred_fallthru
      _
    // Predicated region
    $region38: #{forward.4} parent=1 // pred_check
      _
    $region39: #{forward.4} parent=1 // pred_check_branch
      %449 = sbr.rel (0) target = $region41
    $region40: #{forward.4} parent=1 // pred_region
      _
    $region41: #{forward.4} parent=1 // pred_fallthru
      _
    %450 = vsyncpa [#allocation4], 1

// kernel: forward.5
$region0: #{forward.5}
  #allocation0 [shape = 'u32[]', space=smem, size = 0x4, offset = 0x4, fixed_abs, tag = 'smem constant byte address 0x4 - core index']
  #allocation1 [shape = 'u32[72,128]{1,0:T(1,128)}', space=vmem, size = 0x9000, scoped, tag = 'internal scratch']
  #allocation2 [shape = 'f32[8,256]{1,0:T(8,128)}', space=vmem, size = 0x2000, scoped, tag = 'scratch operand']
  #allocation3 [shape = 'bf16[8,256]{1,0:T(8,128)(2,1)}', space=vmem, size = 0x1000, scoped, tag = 'scratch operand']
  #allocation4 [shape = 'f32[8,1]{1,0:T(8,128)}', space=vmem, size = 0x1000, scoped, tag = 'scratch operand']
  %s0 = inlined_call_operand.vmem [shape: bf16[16,512], index: 0, kind: input, shape index: {}, may-alias: {0,2}]
  %s1 = inlined_call_operand.vmem [shape: bf16[16,512], index: 1, kind: input, shape index: {}, may-alias: {1,11}]
  %s2 = inlined_call_operand.vmem [shape: bf16[16,512], index: 2, kind: input, shape index: {}, may-alias: {0,2}]
  %s3 = inlined_call_operand.hbm [shape: bf16[512,256], index: 3, kind: input, shape index: {}]
  %s4 = inlined_call_operand.hbm [shape: bf16[512,256], index: 4, kind: input, shape index: {}]
  %s5 = inlined_call_operand.hbm [shape: bf16[512,256], index: 5, kind: input, shape index: {}]
  %s6 = inlined_call_operand.vmem [shape: f32[8,1], index: 6, kind: input, shape index: {}]
  %s7 = inlined_call_operand.vmem [shape: f32[1,256], index: 7, kind: input, shape index: {}]
  %s8 = inlined_call_operand.vmem [shape: f32[1,256], index: 8, kind: input, shape index: {}]
  %s9 = inlined_call_operand.hbm [shape: bf16[256,512], index: 9, kind: input, shape index: {}]
  %s10 = inlined_call_operand.vmem [shape: f32[1,512], index: 10, kind: input, shape index: {}]
  %s11 = inlined_call_operand.vmem [shape: bf16[16,512], index: 11, kind: input, shape index: {}, may-alias: {1,11}]
  %s12 = inlined_call_operand.vmem [shape: f32[8,1], index: 12, kind: output, shape index: {}]
  %s13 = sld [smem:[#allocation0]]
  $region117: #{forward.5} parent=0
    _
  %s15 = ssub.s32 1, %s13
  %s16 = scalar_select 0, %s15, %s13
  $region1: #{forward.5} parent=0
    #allocation5 [shape = 'u8[524288]{0}', space=vmem, size = 0x80000, scoped, tag = 'input window, operand 3']
    #allocation6 [shape = 's32[2]{0}', space=sflag, size = 0x8, scoped, tag = 'scoped memory for forward.5']
    #allocation7 [shape = 'u8[524288]{0}', space=vmem, size = 0x80000, scoped, tag = 'input window, operand 4']
    #allocation8 [shape = 's32[2]{0}', space=sflag, size = 0x8, scoped, tag = 'scoped memory for forward.5']
    #allocation9 [shape = 'u8[524288]{0}', space=vmem, size = 0x80000, scoped, tag = 'input window, operand 5']
    #allocation10 [shape = 'u8[524288]{0}', space=vmem, size = 0x80000, scoped, tag = 'input window, operand 9']
    #allocation11 [shape = 's32[2]{0}', space=sflag, size = 0x8, scoped, tag = 'scoped memory for forward.5']
    %17 = vsyncpa [#allocation6], 0
    %s18 = scalar_lea.sflag [#allocation6], 1
    %19 = vsyncpa %s18, 0
    %20 = vsyncpa [#allocation8], 0
    %s21 = scalar_lea.sflag [#allocation8], 1
    %22 = vsyncpa %s21, 0
    %23 = vsyncpa [#allocation11], 0
    %s24 = scalar_lea.sflag [#allocation11], 1
    %25 = vsyncpa %s24, 0
    loop: start=0, step=1, limit=4
    $region2: #{forward.5} parent=1 // loop_pre_header
      _
    $region3: #{forward.5} parent=1 // loop_header
      %s27 = sphi 0, %s31
      %p28 = scmp.ge.s32.totalorder %s27, 4
      %s34 = sphi 0, %s46
      %s35 = sphi 0, %s42
      %s36 = sphi 0, %s34
      %s37 = sphi 0, %s35
      %s38 = sphi 0, %s36
      %s39 = sphi 0, %s37
      %s55 = sphi 0, %s57
      %s58 = sphi 0, %s55
      %s59 = sphi 0, %s58
      %s75 = sphi 0, %s59
      %s89 = sphi 0, %s91
      %s92 = sphi 0, %s89
      %s93 = sphi 0, %s92
      %s109 = sphi 0, %s93
      %s123 = sphi 0, %s125
      %s126 = sphi 0, %s123
      %s127 = sphi 0, %s126
      %s143 = sphi 0, %s127
      %s153 = sphi 0, %s155
      %s156 = sphi 0, %s153
      %s157 = sphi 0, %s156
      %s173 = sphi 0, %s157
      %s183 = sphi 0, %s185
      %s186 = sphi 0, %s183
      %s187 = sphi 0, %s186
      %s203 = sphi 0, %s187
      %s213 = sphi 0, %s215
      %s216 = sphi 0, %s213
      %s217 = sphi 0, %s216
      %s233 = sphi 0, %s217
      %s239 = sphi 0, %s241
      %s242 = sphi 0, %s239
      %s243 = sphi 0, %s242
      %s259 = sphi 0, %s243
      %s263 = sphi 0, %s263
      %s265 = sphi 0, %s263
      %s266 = sphi 0, %s265
      %s280 = sphi 0, %s266
      %s284 = sphi 0, %s284
      %s286 = sphi 0, %s284
      %s287 = sphi 0, %s286
      %s301 = sphi 0, %s287
      %s313 = sphi 0, %s315
      %s316 = sphi 0, %s313
      %s317 = sphi 0, %s316
      %s333 = sphi 0, %s317
      %s345 = sphi 0, %s347
      %s348 = sphi 0, %s345
      %s349 = sphi 0, %s348
      %s365 = sphi 0, %s349
      %s379 = sphi 0, %s381
      %s382 = sphi 0, %s379
      %s383 = sphi 0, %s382
      %s399 = sphi 0, %s383
      %s405 = sphi 0, %s407
      %s408 = sphi 0, %s405
      %s409 = sphi 0, %s408
      %s425 = sphi 0, %s409
    $region4: #{forward.5} parent=1 // loop_header_branch
      %30 = sbr.rel (%p28) target = $region8
    $region5: #{forward.5} parent=1 // loop_body
      %s32 = ssub.s32 %s27, 1
      %s33 = ssub.s32 %s27, 2
      %s40 = sadd.s32 1, %s35
      %p41 = scmp.ge.s32.totalorder %s40, 2
      %s42 = scalar_select %p41, 0, %s40
      %s43 = sadd.s32 1, %s34
      %s44 = scalar_select %p41, %s43, %s34
      %p45 = scmp.ge.s32.totalorder %s44, 1
      %s46 = scalar_select %p45, 0, %s44
      %p47 = scmp.lt.s32.totalorder %s35, 0
      %s48 = scalar_select %p47, %s35, 0
      %p49 = scmp.lt.s32.totalorder %s42, 0
      %s50 = scalar_select %p49, %s42, 0
      %s51 = ssub.s32 %s34, %s46
      %s52 = ssub.s32 %s48, %s50
      %s53 = sor.u32 %s51, %s52
      %p54 = scmp.eq.s32.totalorder %s53, 0
      %s56 = sadd.s32 %s55, 1
      %s57 = scalar_select %p54, %s55, %s56
      %p60 = pneg %p54
      %p61 = scmp.eq.s32.totalorder %s27, 1
      %p62 = por %p60, %p61
      %p63 = scmp.ne.s32.totalorder %s55, %s58
      %p64 = scmp.eq.s32.totalorder %s27, 0
      %p65 = por %p63, %p64
      %p66 = scmp.ne.s32.totalorder %s55, %s58
      %p67 = scmp.eq.s32.totalorder %s32, 1
      %p68 = por %p66, %p67
      %p69 = scmp.ne.s32.totalorder %s58, %s59
      %p70 = scmp.eq.s32.totalorder %s32, 0
      %p71 = por %p69, %p70
      %p72 = scmp.ne.s32.totalorder %s58, %s59
      %p73 = scmp.eq.s32.totalorder %s33, 1
      %p74 = por %p72, %p73
      %p76 = scmp.ne.s32.totalorder %s59, %s75
      %p77 = scmp.eq.s32.totalorder %s33, 0
      %p78 = por %p76, %p77
      %s79 = sadd.s32 %s34, 1
      %p80 = scmp.lt.s32.totalorder %s35, 0
      %s81 = scalar_select %p80, %s35, 0
      %s82 = sadd.s32 %s46, 1
      %p83 = scmp.lt.s32.totalorder %s42, 0
      %s84 = scalar_select %p83, %s42, 0
      %s85 = ssub.s32 %s79, %s82
      %s86 = ssub.s32 %s81, %s84
      %s87 = sor.u32 %s85, %s86
      %p88 = scmp.eq.s32.totalorder %s87, 0
      %s90 = sadd.s32 %s89, 1
      %s91 = scalar_select %p88, %s89, %s90
      %p94 = pneg %p88
      %p95 = scmp.eq.s32.totalorder %s27, 1
      %p96 = por %p94, %p95
      %p97 = scmp.ne.s32.totalorder %s89, %s92
      %p98 = scmp.eq.s32.totalorder %s27, 0
      %p99 = por %p97, %p98
      %p100 = scmp.ne.s32.totalorder %s89, %s92
      %p101 = scmp.eq.s32.totalorder %s32, 1
      %p102 = por %p100, %p101
      %p103 = scmp.ne.s32.totalorder %s92, %s93
      %p104 = scmp.eq.s32.totalorder %s32, 0
      %p105 = por %p103, %p104
      %p106 = scmp.ne.s32.totalorder %s92, %s93
      %p107 = scmp.eq.s32.totalorder %s33, 1
      %p108 = por %p106, %p107
      %p110 = scmp.ne.s32.totalorder %s93, %s109
      %p111 = scmp.eq.s32.totalorder %s33, 0
      %p112 = por %p110, %p111
      %s113 = sadd.s32 %s34, 1
      %p114 = scmp.lt.s32.totalorder %s35, 0
      %s115 = scalar_select %p114, %s35, 0
      %s116 = sadd.s32 %s46, 1
      %p117 = scmp.lt.s32.totalorder %s42, 0
      %s118 = scalar_select %p117, %s42, 0
      %s119 = ssub.s32 %s113, %s116
      %s120 = ssub.s32 %s115, %s118
      %s121 = sor.u32 %s119, %s120
      %p122 = scmp.eq.s32.totalorder %s121, 0
      %s124 = sadd.s32 %s123, 1
      %s125 = scalar_select %p122, %s123, %s124
      %p128 = pneg %p122
      %p129 = scmp.eq.s32.totalorder %s27, 1
      %p130 = por %p128, %p129
      %p131 = scmp.ne.s32.totalorder %s123, %s126
      %p132 = scmp.eq.s32.totalorder %s27, 0
      %p133 = por %p131, %p132
      %p134 = scmp.ne.s32.totalorder %s123, %s126
      %p135 = scmp.eq.s32.totalorder %s32, 1
      %p136 = por %p134, %p135
      %p137 = scmp.ne.s32.totalorder %s126, %s127
      %p138 = scmp.eq.s32.totalorder %s32, 0
      %p139 = por %p137, %p138
      %p140 = scmp.ne.s32.totalorder %s126, %s127
      %p141 = scmp.eq.s32.totalorder %s33, 1
      %p142 = por %p140, %p141
      %p144 = scmp.ne.s32.totalorder %s127, %s143
      %p145 = scmp.eq.s32.totalorder %s33, 0
      %p146 = por %p144, %p145
      %p147 = scmp.lt.s32.totalorder %s35, 0
      %s148 = scalar_select %p147, %s35, 0
      %p149 = scmp.lt.s32.totalorder %s42, 0
      %s150 = scalar_select %p149, %s42, 0
      %s151 = ssub.s32 %s148, %s150
      %p152 = scmp.eq.s32.totalorder %s151, 0
      %s154 = sadd.s32 %s153, 1
      %s155 = scalar_select %p152, %s153, %s154
      %p158 = pneg %p152
      %p159 = scmp.eq.s32.totalorder %s27, 1
      %p160 = por %p158, %p159
      %p161 = scmp.ne.s32.totalorder %s153, %s156
      %p162 = scmp.eq.s32.totalorder %s27, 0
      %p163 = por %p161, %p162
      %p164 = scmp.ne.s32.totalorder %s153, %s156
      %p165 = scmp.eq.s32.totalorder %s32, 1
      %p166 = por %p164, %p165
      %p167 = scmp.ne.s32.totalorder %s156, %s157
      %p168 = scmp.eq.s32.totalorder %s32, 0
      %p169 = por %p167, %p168
      %p170 = scmp.ne.s32.totalorder %s156, %s157
      %p171 = scmp.eq.s32.totalorder %s33, 1
      %p172 = por %p170, %p171
      %p174 = scmp.ne.s32.totalorder %s157, %s173
      %p175 = scmp.eq.s32.totalorder %s33, 0
      %p176 = por %p174, %p175
      %p177 = scmp.lt.s32.totalorder %s35, 0
      %s178 = scalar_select %p177, %s35, 0
      %p179 = scmp.lt.s32.totalorder %s42, 0
      %s180 = scalar_select %p179, %s42, 0
      %s181 = ssub.s32 %s178, %s180
      %p182 = scmp.eq.s32.totalorder %s181, 0
      %s184 = sadd.s32 %s183, 1
      %s185 = scalar_select %p182, %s183, %s184
      %p188 = pneg %p182
      %p189 = scmp.eq.s32.totalorder %s27, 1
      %p190 = por %p188, %p189
      %p191 = scmp.ne.s32.totalorder %s183, %s186
      %p192 = scmp.eq.s32.totalorder %s27, 0
      %p193 = por %p191, %p192
      %p194 = scmp.ne.s32.totalorder %s183, %s186
      %p195 = scmp.eq.s32.totalorder %s32, 1
      %p196 = por %p194, %p195
      %p197 = scmp.ne.s32.totalorder %s186, %s187
      %p198 = scmp.eq.s32.totalorder %s32, 0
      %p199 = por %p197, %p198
      %p200 = scmp.ne.s32.totalorder %s186, %s187
      %p201 = scmp.eq.s32.totalorder %s33, 1
      %p202 = por %p200, %p201
      %p204 = scmp.ne.s32.totalorder %s187, %s203
      %p205 = scmp.eq.s32.totalorder %s33, 0
      %p206 = por %p204, %p205
      %p207 = scmp.lt.s32.totalorder %s35, 0
      %s208 = scalar_select %p207, %s35, 0
      %p209 = scmp.lt.s32.totalorder %s42, 0
      %s210 = scalar_select %p209, %s42, 0
      %s211 = ssub.s32 %s208, %s210
      %p212 = scmp.eq.s32.totalorder %s211, 0
      %s214 = sadd.s32 %s213, 1
      %s215 = scalar_select %p212, %s213, %s214
      %p218 = pneg %p212
      %p219 = scmp.eq.s32.totalorder %s27, 1
      %p220 = por %p218, %p219
      %p221 = scmp.ne.s32.totalorder %s213, %s216
      %p222 = scmp.eq.s32.totalorder %s27, 0
      %p223 = por %p221, %p222
      %p224 = scmp.ne.s32.totalorder %s213, %s216
      %p225 = scmp.eq.s32.totalorder %s32, 1
      %p226 = por %p224, %p225
      %p227 = scmp.ne.s32.totalorder %s216, %s217
      %p228 = scmp.eq.s32.totalorder %s32, 0
      %p229 = por %p227, %p228
      %p230 = scmp.ne.s32.totalorder %s216, %s217
      %p231 = scmp.eq.s32.totalorder %s33, 1
      %p232 = por %p230, %p231
      %p234 = scmp.ne.s32.totalorder %s217, %s233
      %p235 = scmp.eq.s32.totalorder %s33, 0
      %p236 = por %p234, %p235
      %s237 = ssub.s32 %s34, %s46
      %p238 = scmp.eq.s32.totalorder %s237, 0
      %s240 = sadd.s32 %s239, 1
      %s241 = scalar_select %p238, %s239, %s240
      %p244 = pneg %p238
      %p245 = scmp.eq.s32.totalorder %s27, 1
      %p246 = por %p244, %p245
      %p247 = scmp.ne.s32.totalorder %s239, %s242
      %p248 = scmp.eq.s32.totalorder %s27, 0
      %p249 = por %p247, %p248
      %p250 = scmp.ne.s32.totalorder %s239, %s242
      %p251 = scmp.eq.s32.totalorder %s32, 1
      %p252 = por %p250, %p251
      %p253 = scmp.ne.s32.totalorder %s242, %s243
      %p254 = scmp.eq.s32.totalorder %s32, 0
      %p255 = por %p253, %p254
      %p256 = scmp.ne.s32.totalorder %s242, %s243
      %p257 = scmp.eq.s32.totalorder %s33, 1
      %p258 = por %p256, %p257
      %p260 = scmp.ne.s32.totalorder %s243, %s259
      %p261 = scmp.eq.s32.totalorder %s33, 0
      %p262 = por %p260, %p261
      %s264 = sadd.s32 %s263, 1
      %p267 = scmp.eq.s32.totalorder %s27, 1
      %p268 = scmp.ne.s32.totalorder %s263, %s265
      %p269 = scmp.eq.s32.totalorder %s27, 0
      %p270 = por %p268, %p269
      %p271 = scmp.ne.s32.totalorder %s263, %s265
      %p272 = scmp.eq.s32.totalorder %s32, 1
      %p273 = por %p271, %p272
      %p274 = scmp.ne.s32.totalorder %s265, %s266
      %p275 = scmp.eq.s32.totalorder %s32, 0
      %p276 = por %p274, %p275
      %p277 = scmp.ne.s32.totalorder %s265, %s266
      %p278 = scmp.eq.s32.totalorder %s33, 1
      %p279 = por %p277, %p278
      %p281 = scmp.ne.s32.totalorder %s266, %s280
      %p282 = scmp.eq.s32.totalorder %s33, 0
      %p283 = por %p281, %p282
      %s285 = sadd.s32 %s284, 1
      %p288 = scmp.eq.s32.totalorder %s27, 1
      %p289 = scmp.ne.s32.totalorder %s284, %s286
      %p290 = scmp.eq.s32.totalorder %s27, 0
      %p291 = por %p289, %p290
      %p292 = scmp.ne.s32.totalorder %s284, %s286
      %p293 = scmp.eq.s32.totalorder %s32, 1
      %p294 = por %p292, %p293
      %p295 = scmp.ne.s32.totalorder %s286, %s287
      %p296 = scmp.eq.s32.totalorder %s32, 0
      %p297 = por %p295, %p296
      %p298 = scmp.ne.s32.totalorder %s286, %s287
      %p299 = scmp.eq.s32.totalorder %s33, 1
      %p300 = por %p298, %p299
      %p302 = scmp.ne.s32.totalorder %s287, %s301
      %p303 = scmp.eq.s32.totalorder %s33, 0
      %p304 = por %p302, %p303
      %s305 = ssub.s32 %s35, 1
      %p306 = scmp.gt.s32.totalorder %s305, 0
      %s307 = scalar_select %p306, %s305, 0
      %s308 = ssub.s32 %s42, 1
      %p309 = scmp.gt.s32.totalorder %s308, 0
      %s310 = scalar_select %p309, %s308, 0
      %s311 = ssub.s32 %s307, %s310
      %p312 = scmp.eq.s32.totalorder %s311, 0
      %s314 = sadd.s32 %s313, 1
      %s315 = scalar_select %p312, %s313, %s314
      %p318 = pneg %p312
      %p319 = scmp.eq.s32.totalorder %s27, 1
      %p320 = por %p318, %p319
      %p321 = scmp.ne.s32.totalorder %s313, %s316
      %p322 = scmp.eq.s32.totalorder %s27, 0
      %p323 = por %p321, %p322
      %p324 = scmp.ne.s32.totalorder %s313, %s316
      %p325 = scmp.eq.s32.totalorder %s32, 1
      %p326 = por %p324, %p325
      %p327 = scmp.ne.s32.totalorder %s316, %s317
      %p328 = scmp.eq.s32.totalorder %s32, 0
      %p329 = por %p327, %p328
      %p330 = scmp.ne.s32.totalorder %s316, %s317
      %p331 = scmp.eq.s32.totalorder %s33, 1
      %p332 = por %p330, %p331
      %p334 = scmp.ne.s32.totalorder %s317, %s333
      %p335 = scmp.eq.s32.totalorder %s33, 0
      %p336 = por %p334, %p335
      %s337 = ssub.s32 %s35, 1
      %p338 = scmp.gt.s32.totalorder %s337, 0
      %s339 = scalar_select %p338, %s337, 0
      %s340 = ssub.s32 %s42, 1
      %p341 = scmp.gt.s32.totalorder %s340, 0
      %s342 = scalar_select %p341, %s340, 0
      %s343 = ssub.s32 %s339, %s342
      %p344 = scmp.eq.s32.totalorder %s343, 0
      %s346 = sadd.s32 %s345, 1
      %s347 = scalar_select %p344, %s345, %s346
      %p350 = pneg %p344
      %p351 = scmp.eq.s32.totalorder %s27, 1
      %p352 = por %p350, %p351
      %p353 = scmp.ne.s32.totalorder %s345, %s348
      %p354 = scmp.eq.s32.totalorder %s27, 0
      %p355 = por %p353, %p354
      %p356 = scmp.ne.s32.totalorder %s345, %s348
      %p357 = scmp.eq.s32.totalorder %s32, 1
      %p358 = por %p356, %p357
      %p359 = scmp.ne.s32.totalorder %s348, %s349
      %p360 = scmp.eq.s32.totalorder %s32, 0
      %p361 = por %p359, %p360
      %p362 = scmp.ne.s32.totalorder %s348, %s349
      %p363 = scmp.eq.s32.totalorder %s33, 1
      %p364 = por %p362, %p363
      %p366 = scmp.ne.s32.totalorder %s349, %s365
      %p367 = scmp.eq.s32.totalorder %s33, 0
      %p368 = por %p366, %p367
      %s369 = ssub.s32 %s35, 1
      %p370 = scmp.gt.s32.totalorder %s369, 0
      %s371 = scalar_select %p370, %s369, 0
      %s372 = ssub.s32 %s42, 1
      %p373 = scmp.gt.s32.totalorder %s372, 0
      %s374 = scalar_select %p373, %s372, 0
      %s375 = ssub.s32 %s34, %s46
      %s376 = ssub.s32 %s371, %s374
      %s377 = sor.u32 %s375, %s376
      %p378 = scmp.eq.s32.totalorder %s377, 0
      %s380 = sadd.s32 %s379, 1
      %s381 = scalar_select %p378, %s379, %s380
      %p384 = pneg %p378
      %p385 = scmp.eq.s32.totalorder %s27, 1
      %p386 = por %p384, %p385
      %p387 = scmp.ne.s32.totalorder %s379, %s382
      %p388 = scmp.eq.s32.totalorder %s27, 0
      %p389 = por %p387, %p388
      %p390 = scmp.ne.s32.totalorder %s379, %s382
      %p391 = scmp.eq.s32.totalorder %s32, 1
      %p392 = por %p390, %p391
      %p393 = scmp.ne.s32.totalorder %s382, %s383
      %p394 = scmp.eq.s32.totalorder %s32, 0
      %p395 = por %p393, %p394
      %p396 = scmp.ne.s32.totalorder %s382, %s383
      %p397 = scmp.eq.s32.totalorder %s33, 1
      %p398 = por %p396, %p397
      %p400 = scmp.ne.s32.totalorder %s383, %s399
      %p401 = scmp.eq.s32.totalorder %s33, 0
      %p402 = por %p400, %p401
      %s403 = ssub.s32 %s34, %s46
      %p404 = scmp.eq.s32.totalorder %s403, 0
      %s406 = sadd.s32 %s405, 1
      %s407 = scalar_select %p404, %s405, %s406
      %p410 = pneg %p404
      %p411 = scmp.eq.s32.totalorder %s27, 1
      %p412 = por %p410, %p411
      %p413 = scmp.ne.s32.totalorder %s405, %s408
      %p414 = scmp.eq.s32.totalorder %s27, 0
      %p415 = por %p413, %p414
      %p416 = scmp.ne.s32.totalorder %s405, %s408
      %p417 = scmp.eq.s32.totalorder %s32, 1
      %p418 = por %p416, %p417
      %p419 = scmp.ne.s32.totalorder %s408, %s409
      %p420 = scmp.eq.s32.totalorder %s32, 0
      %p421 = por %p419, %p420
      %p422 = scmp.ne.s32.totalorder %s408, %s409
      %p423 = scmp.eq.s32.totalorder %s33, 1
      %p424 = por %p422, %p423
      %p426 = scmp.ne.s32.totalorder %s409, %s425
      %p427 = scmp.eq.s32.totalorder %s33, 0
      %p428 = por %p426, %p427
      %p429 = scmp.le.s32.totalorder 1, %s27
      %p430 = scmp.lt.s32.totalorder %s27, 3
      %p431 = pnand %p429, %p430
      %p432 = pneg %p431
      // Predicated region
      $region9: #{forward.5} parent=5 // pred_check
        _
      $region10: #{forward.5} parent=5 // pred_check_branch
        %434 = sbr.rel (%p431) target = $region12
      $region11: #{forward.5} parent=5 // pred_region
        %s435 = ssub.s32 %s27, 1
        // Predicated region
        $region13: #{forward.5} parent=11 // pred_check
          %p436 = pneg %p255
        $region14: #{forward.5} parent=11 // pred_check_branch
          %438 = sbr.rel (%p436) target = $region16
        $region15: #{forward.5} parent=11 // pred_region
          %p439 = scmp.lt.s32.totalorder %s36, 0
          %s440 = scalar_select %p439, %s36, 0
          %s441 = smul.addr %s440, 8
          %s442 = scalar_lea.vmem %s6, %s441
        $region16: #{forward.5} parent=11 // pred_fallthru
          _
        // Predicated region
        $region17: #{forward.5} parent=11 // pred_check
          %p443 = pneg %p276
        $region18: #{forward.5} parent=11 // pred_check_branch
          %445 = sbr.rel (%p443) target = $region20
        $region19: #{forward.5} parent=11 // pred_region
          _
        $region20: #{forward.5} parent=11 // pred_fallthru
          _
        // Predicated region
        $region21: #{forward.5} parent=11 // pred_check
          %p446 = pneg %p297
        $region22: #{forward.5} parent=11 // pred_check_branch
          %448 = sbr.rel (%p446) target = $region24
        $region23: #{forward.5} parent=11 // pred_region
          _
        $region24: #{forward.5} parent=11 // pred_fallthru
          _
      $region12: #{forward.5} parent=5 // pred_fallthru
        _
      %p449 = scmp.lt.s32.totalorder %s27, 2
      // Predicated region
      $region25: #{forward.5} parent=5 // pred_check
        %p450 = pneg %p449
      $region26: #{forward.5} parent=5 // pred_check_branch
        %452 = sbr.rel (%p450) target = $region28
      $region27: #{forward.5} parent=5 // pred_region
        // Predicated region
        $region29: #{forward.5} parent=27 // pred_check
          %p453 = pneg %p65
        $region30: #{forward.5} parent=27 // pred_check_branch
          %455 = sbr.rel (%p453) target = $region32
        $region31: #{forward.5} parent=27 // pred_region
          %p456 = scmp.lt.s32.totalorder %s35, 0
          %s457 = scalar_select %p456, %s35, 0
          %s458 = smul.u32 4, %s457
          %p459 = scmp.lt.s32.totalorder %s34, 1
          %s460 = scalar_select %p459, %s34, 1
          %p461 = scmp.lt.s32.totalorder %s458, 3
          %s462 = scalar_select %p461, %s458, 3
          %s463 = smul.addr %s460, 4
          %s464 = sadd.s32 %s462, %s463
          %s465 = smul.addr %s464, 4
          %s466 = scalar_lea.vmem %s0, %s465
          %p467 = scmp.lt.s32.totalorder %s35, 0
          %s468 = scalar_select %p467, %s35, 0
          %s469 = smul.u32 4, %s468
        $region32: #{forward.5} parent=27 // pred_fallthru
          _
        // Predicated region
        $region33: #{forward.5} parent=27 // pred_check
          %p470 = pneg %p99
        $region34: #{forward.5} parent=27 // pred_check_branch
          %472 = sbr.rel (%p470) target = $region36
        $region35: #{forward.5} parent=27 // pred_region
          %s473 = sadd.s32 %s34, 1
          %p474 = scmp.lt.s32.totalorder %s35, 0
          %s475 = scalar_select %p474, %s35, 0
          %s476 = smul.u32 4, %s475
          %p477 = scmp.lt.s32.totalorder %s473, 1
          %s478 = scalar_select %p477, %s473, 1
          %p479 = scmp.lt.s32.totalorder %s476, 3
          %s480 = scalar_select %p479, %s476, 3
          %s481 = smul.addr %s478, 4
          %s482 = sadd.s32 %s480, %s481
          %s483 = smul.addr %s482, 4
          %s484 = scalar_lea.vmem %s1, %s483
          %s485 = sadd.s32 %s34, 1
          %p486 = scmp.lt.s32.totalorder %s35, 0
          %s487 = scalar_select %p486, %s35, 0
          %s488 = smul.u32 4, %s487
        $region36: #{forward.5} parent=27 // pred_fallthru
          _
        // Predicated region
        $region37: #{forward.5} parent=27 // pred_check
          %p489 = pneg %p133
        $region38: #{forward.5} parent=27 // pred_check_branch
          %491 = sbr.rel (%p489) target = $region40
        $region39: #{forward.5} parent=27 // pred_region
          %s492 = sadd.s32 %s34, 1
          %p493 = scmp.lt.s32.totalorder %s35, 0
          %s494 = scalar_select %p493, %s35, 0
          %s495 = smul.u32 4, %s494
          %p496 = scmp.lt.s32.totalorder %s492, 1
          %s497 = scalar_select %p496, %s492, 1
          %p498 = scmp.lt.s32.totalorder %s495, 3
          %s499 = scalar_select %p498, %s495, 3
          %s500 = smul.addr %s497, 4
          %s501 = sadd.s32 %s499, %s500
          %s502 = smul.addr %s501, 4
          %s503 = scalar_lea.vmem %s2, %s502
          %s504 = sadd.s32 %s34, 1
          %p505 = scmp.lt.s32.totalorder %s35, 0
          %s506 = scalar_select %p505, %s35, 0
          %s507 = smul.u32 4, %s506
        $region40: #{forward.5} parent=27 // pred_fallthru
          _
        // Predicated region
        $region41: #{forward.5} parent=27 // pred_check
          %p508 = pneg %p163
        $region42: #{forward.5} parent=27 // pred_check_branch
          %510 = sbr.rel (%p508) target = $region44
        $region43: #{forward.5} parent=27 // pred_region
          %s511 = sand.u32 %s153, 1
          %s512 = scalar_lea.sflag [#allocation6], %s511
          %s513 = sand.u32 %s153, 1
          %s514 = smul.addr %s513, 512
          %s515 = scalar_lea.vmem [#allocation5], %s514
          %p516 = scmp.lt.s32.totalorder %s35, 0
          %s517 = scalar_select %p516, %s35, 0
          %s518 = smul.u32 64, %s517
          %520 = vsyncadd %s512, 0
          %s521 = smul.addr %s518, 2
          %s522 = smul.addr %s521, 4
          %s523 = scalar_lea.hbm %s3, %s522
          %s524 = sshll.u32 %s523, 4
          %s525 = int_to_ptr.hbm [resolvable:$true] %s524
          %s526 = sshll.u32 %s515, 4
          %s527 = int_to_ptr.vmem [resolvable:$true] %s526
          %532 = dma.hbm_to_vmem [thread:$0]  %s525, 8192, %s527, %s512, 128, 128, 8
        $region44: #{forward.5} parent=27 // pred_fallthru
          _
        // Predicated region
        $region45: #{forward.5} parent=27 // pred_check
          %p533 = pneg %p193
        $region46: #{forward.5} parent=27 // pred_check_branch
          %535 = sbr.rel (%p533) target = $region48
        $region47: #{forward.5} parent=27 // pred_region
          %s536 = sand.u32 %s27, 1
          %s537 = scalar_lea.sflag [#allocation8], %s536
          %s538 = sand.u32 %s183, 1
          %s539 = smul.addr %s538, 512
          %s540 = scalar_lea.vmem [#allocation7], %s539
          %p541 = scmp.lt.s32.totalorder %s35, 0
          %s542 = scalar_select %p541, %s35, 0
          %s543 = smul.u32 64, %s542
          %545 = vsyncadd %s537, 0
          %s546 = smul.addr %s543, 2
          %s547 = smul.addr %s546, 4
          %s548 = scalar_lea.hbm %s4, %s547
          %s549 = sshll.u32 %s548, 4
          %s550 = int_to_ptr.hbm [resolvable:$true] %s549
          %s551 = sshll.u32 %s540, 4
          %s552 = int_to_ptr.vmem [resolvable:$true] %s551
          %557 = dma.hbm_to_vmem [thread:$0]  %s550, 8192, %s552, %s537, 128, 128, 8
        $region48: #{forward.5} parent=27 // pred_fallthru
          _
        // Predicated region
        $region49: #{forward.5} parent=27 // pred_check
          %p558 = pneg %p223
        $region50: #{forward.5} parent=27 // pred_check_branch
          %560 = sbr.rel (%p558) target = $region52
        $region51: #{forward.5} parent=27 // pred_region
          %s561 = sand.u32 %s27, 1
          %s562 = scalar_lea.sflag [#allocation8], %s561
          %s563 = sand.u32 %s213, 1
          %s564 = smul.addr %s563, 512
          %s565 = scalar_lea.vmem [#allocation9], %s564
          %p566 = scmp.lt.s32.totalorder %s35, 0
          %s567 = scalar_select %p566, %s35, 0
          %s568 = smul.u32 64, %s567
          %570 = vsyncadd %s562, 0
          %s571 = smul.addr %s568, 2
          %s572 = smul.addr %s571, 4
          %s573 = scalar_lea.hbm %s5, %s572
          %s574 = sshll.u32 %s573, 4
          %s575 = int_to_ptr.hbm [resolvable:$true] %s574
          %s576 = sshll.u32 %s565, 4
          %s577 = int_to_ptr.vmem [resolvable:$true] %s576
          %582 = dma.hbm_to_vmem [thread:$0]  %s575, 8192, %s577, %s562, 128, 128, 8
        $region52: #{forward.5} parent=27 // pred_fallthru
          _
        // Predicated region
        $region53: #{forward.5} parent=27 // pred_check
          %p583 = pneg %p323
        $region54: #{forward.5} parent=27 // pred_check_branch
          %585 = sbr.rel (%p583) target = $region56
        $region55: #{forward.5} parent=27 // pred_region
          %s586 = sand.u32 %s313, 1
          %s587 = scalar_lea.sflag [#allocation11], %s586
          %s588 = sand.u32 %s313, 1
          %s589 = smul.addr %s588, 512
          %s590 = scalar_lea.vmem [#allocation10], %s589
          %s591 = ssub.s32 %s35, 1
          %p592 = scmp.gt.s32.totalorder %s591, 0
          %s593 = scalar_select %p592, %s591, 0
          %s594 = smul.u32 4, %s593
          %596 = vsyncadd %s587, 0
          %s597 = smul.addr %s594, 4
          %s598 = scalar_lea.hbm %s9, %s597
          %s599 = sshll.u32 %s598, 4
          %s600 = int_to_ptr.hbm [resolvable:$true] %s599
          %s601 = sshll.u32 %s590, 4
          %s602 = int_to_ptr.vmem [resolvable:$true] %s601
          %607 = dma.hbm_to_vmem [thread:$0]  %s600, 8192, %s602, %s587, 256, 256, 16
        $region56: #{forward.5} parent=27 // pred_fallthru
          _
        // Predicated region
        $region57: #{forward.5} parent=27 // pred_check
          %p608 = pneg %p355
        $region58: #{forward.5} parent=27 // pred_check_branch
          %610 = sbr.rel (%p608) target = $region60
        $region59: #{forward.5} parent=27 // pred_region
          %s611 = ssub.s32 %s35, 1
          %p612 = scmp.gt.s32.totalorder %s611, 0
          %s613 = scalar_select %p612, %s611, 0
          %s614 = smul.u32 4, %s613
          %p615 = scmp.lt.s32.totalorder %s614, 3
          %s616 = scalar_select %p615, %s614, 3
          %s617 = scalar_lea.vmem %s10, %s616
          %s618 = ssub.s32 %s35, 1
          %p619 = scmp.gt.s32.totalorder %s618, 0
          %s620 = scalar_select %p619, %s618, 0
          %s621 = smul.u32 4, %s620
        $region60: #{forward.5} parent=27 // pred_fallthru
          _
        // Predicated region
        $region61: #{forward.5} parent=27 // pred_check
          %p622 = pneg %p389
        $region62: #{forward.5} parent=27 // pred_check_branch
          %624 = sbr.rel (%p622) target = $region64
        $region63: #{forward.5} parent=27 // pred_region
          %s625 = ssub.s32 %s35, 1
          %p626 = scmp.gt.s32.totalorder %s625, 0
          %s627 = scalar_select %p626, %s625, 0
          %s628 = smul.u32 4, %s627
          %p629 = scmp.lt.s32.totalorder %s34, 1
          %s630 = scalar_select %p629, %s34, 1
          %p631 = scmp.lt.s32.totalorder %s628, 3
          %s632 = scalar_select %p631, %s628, 3
          %s633 = smul.addr %s630, 4
          %s634 = sadd.s32 %s632, %s633
          %s635 = smul.addr %s634, 4
          %s636 = scalar_lea.vmem %s11, %s635
          %s637 = ssub.s32 %s35, 1
          %p638 = scmp.gt.s32.totalorder %s637, 0
          %s639 = scalar_select %p638, %s637, 0
          %s640 = smul.u32 4, %s639
        $region64: #{forward.5} parent=27 // pred_fallthru
          _
      $region28: #{forward.5} parent=5 // pred_fallthru
        _
      %p641 = scmp.le.s32.totalorder 1, %s27
      %p642 = scmp.lt.s32.totalorder %s27, 3
      %p643 = pnand %p641, %p642
      %p644 = pneg %p643
      // Predicated region
      $region65: #{forward.5} parent=5 // pred_check
        _
      $region66: #{forward.5} parent=5 // pred_check_branch
        %646 = sbr.rel (%p643) target = $region68
      $region67: #{forward.5} parent=5 // pred_region
        %s647 = ssub.s32 %s27, 1
        %s648 = sand.u32 %s156, 1
        %s649 = scalar_lea.sflag [#allocation6], %s648
        %s650 = sand.u32 %s156, 1
        %s651 = smul.addr %s650, 512
        %s652 = scalar_lea.vmem [#allocation5], %s651
        // Predicated region
        $region69: #{forward.5} parent=67 // pred_check
          %p653 = pneg %p169
        $region70: #{forward.5} parent=67 // pred_check_branch
          %655 = sbr.rel (%p653) target = $region72
        $region71: #{forward.5} parent=67 // pred_region
          %657 = dma.done %s649, 8192
        $region72: #{forward.5} parent=67 // pred_fallthru
          _
        %s658 = sand.u32 %s32, 1
        %s659 = scalar_lea.sflag [#allocation8], %s658
        %s660 = sand.u32 %s186, 1
        %s661 = smul.addr %s660, 512
        %s662 = scalar_lea.vmem [#allocation7], %s661
        // Predicated region
        $region73: #{forward.5} parent=67 // pred_check
          %p663 = pneg %p199
        $region74: #{forward.5} parent=67 // pred_check_branch
          %665 = sbr.rel (%p663) target = $region76
        $region75: #{forward.5} parent=67 // pred_region
          %667 = dma.done %s659, 8192
        $region76: #{forward.5} parent=67 // pred_fallthru
          _
        %s668 = sand.u32 %s32, 1
        %s669 = scalar_lea.sflag [#allocation8], %s668
        %s670 = sand.u32 %s216, 1
        %s671 = smul.addr %s670, 512
        %s672 = scalar_lea.vmem [#allocation9], %s671
        // Predicated region
        $region77: #{forward.5} parent=67 // pred_check
          %p673 = pneg %p229
        $region78: #{forward.5} parent=67 // pred_check_branch
          %675 = sbr.rel (%p673) target = $region80
        $region79: #{forward.5} parent=67 // pred_region
          %677 = dma.done %s669, 8192
        $region80: #{forward.5} parent=67 // pred_fallthru
          _
        %s678 = sand.u32 %s316, 1
        %s679 = scalar_lea.sflag [#allocation11], %s678
        %s680 = sand.u32 %s316, 1
        %s681 = smul.addr %s680, 512
        %s682 = scalar_lea.vmem [#allocation10], %s681
        // Predicated region
        $region81: #{forward.5} parent=67 // pred_check
          %p683 = pneg %p329
        $region82: #{forward.5} parent=67 // pred_check_branch
          %685 = sbr.rel (%p683) target = $region84
        $region83: #{forward.5} parent=67 // pred_region
          %687 = dma.done %s679, 8192
        $region84: #{forward.5} parent=67 // pred_fallthru
          _
        %p688 = scmp.lt.s32.totalorder %s37, 0
        %s689 = scalar_select %p688, %s37, 0
        %s690 = smul.u32 4, %s689
        %p691 = scmp.lt.s32.totalorder %s36, 1
        %s692 = scalar_select %p691, %s36, 1
        %p693 = scmp.lt.s32.totalorder %s690, 3
        %s694 = scalar_select %p693, %s690, 3
        %s695 = smul.addr %s692, 4
        %s696 = sadd.s32 %s694, %s695
        %s697 = smul.addr %s696, 4
        %s698 = scalar_lea.vmem %s0, %s697
        %p699 = pneg %p71
        %p700 = pneg %p68
        %s701 = sadd.s32 %s36, 1
        %p702 = scmp.lt.s32.totalorder %s37, 0
        %s703 = scalar_select %p702, %s37, 0
        %s704 = smul.u32 4, %s703
        %p705 = scmp.lt.s32.totalorder %s701, 1
        %s706 = scalar_select %p705, %s701, 1
        %p707 = scmp.lt.s32.totalorder %s704, 3
        %s708 = scalar_select %p707, %s704, 3
        %s709 = smul.addr %s706, 4
        %s710 = sadd.s32 %s708, %s709
        %s711 = smul.addr %s710, 4
        %s712 = scalar_lea.vmem %s1, %s711
        %p713 = pneg %p105
        %p714 = pneg %p102
        %s715 = sadd.s32 %s36, 1
        %p716 = scmp.lt.s32.totalorder %s37, 0
        %s717 = scalar_select %p716, %s37, 0
        %s718 = smul.u32 4, %s717
        %p719 = scmp.lt.s32.totalorder %s715, 1
        %s720 = scalar_select %p719, %s715, 1
        %p721 = scmp.lt.s32.totalorder %s718, 3
        %s722 = scalar_select %p721, %s718, 3
        %s723 = smul.addr %s720, 4
        %s724 = sadd.s32 %s722, %s723
        %s725 = smul.addr %s724, 4
        %s726 = scalar_lea.vmem %s2, %s725
        %p727 = pneg %p139
        %p728 = pneg %p136
        %s729 = sand.u32 %s156, 1
        %s730 = scalar_lea.sflag [#allocation6], %s729
        %s731 = sand.u32 %s156, 1
        %s732 = smul.addr %s731, 512
        %s733 = scalar_lea.vmem [#allocation5], %s732
        %p734 = pneg %p169
        %p735 = pneg %p166
        %s736 = sand.u32 %s32, 1
        %s737 = scalar_lea.sflag [#allocation8], %s736
        %s738 = sand.u32 %s186, 1
        %s739 = smul.addr %s738, 512
        %s740 = scalar_lea.vmem [#allocation7], %s739
        %p741 = pneg %p199
        %p742 = pneg %p196
        %s743 = sand.u32 %s32, 1
        %s744 = scalar_lea.sflag [#allocation8], %s743
        %s745 = sand.u32 %s216, 1
        %s746 = smul.addr %s745, 512
        %s747 = scalar_lea.vmem [#allocation9], %s746
        %p748 = pneg %p229
        %p749 = pneg %p226
        %p750 = scmp.lt.s32.totalorder %s36, 0
        %s751 = scalar_select %p750, %s36, 0
        %s752 = smul.addr %s751, 8
        %s753 = scalar_lea.vmem %s6, %s752
        %p754 = pneg %p255
        %p755 = pneg %p252
        %p756 = pneg %p276
        %p757 = pneg %p273
        %p758 = pneg %p297
        %p759 = pneg %p294
        %s760 = sand.u32 %s316, 1
        %s761 = scalar_lea.sflag [#allocation11], %s760
        %s762 = sand.u32 %s316, 1
        %s763 = smul.addr %s762, 512
        %s764 = scalar_lea.vmem [#allocation10], %s763
        %p765 = pneg %p329
        %p766 = pneg %p326
        %s767 = ssub.s32 %s37, 1
        %p768 = scmp.gt.s32.totalorder %s767, 0
        %s769 = scalar_select %p768, %s767, 0
        %s770 = smul.u32 4, %s769
        %p771 = scmp.lt.s32.totalorder %s770, 3
        %s772 = scalar_select %p771, %s770, 3
        %s773 = scalar_lea.vmem %s10, %s772
        %p774 = pneg %p361
        %p775 = pneg %p358
        %s776 = ssub.s32 %s37, 1
        %p777 = scmp.gt.s32.totalorder %s776, 0
        %s778 = scalar_select %p777, %s776, 0
        %s779 = smul.u32 4, %s778
        %p780 = scmp.lt.s32.totalorder %s36, 1
        %s781 = scalar_select %p780, %s36, 1
        %p782 = scmp.lt.s32.totalorder %s779, 3
        %s783 = scalar_select %p782, %s779, 3
        %s784 = smul.addr %s781, 4
        %s785 = sadd.s32 %s783, %s784
        %s786 = smul.addr %s785, 4
        %s787 = scalar_lea.vmem %s11, %s786
        %p788 = pneg %p395
        %p789 = pneg %p392
        %p790 = pneg %p421
        %p791 = pneg %p418
        %p792 = scmp.lt.s32.totalorder %s36, 0
        %s793 = scalar_select %p792, %s36, 0
        %s794 = smul.addr %s793, 8
        %s795 = scalar_lea.vmem %s12, %s794
        %p796 = scmp.lt.s32.totalorder %s37, 0
        %s797 = scalar_select %p796, %s37, 0
        %s798 = smul.u32 4, %s797
        %p799 = scmp.lt.s32.totalorder %s36, 1
        %s800 = scalar_select %p799, %s36, 1
        %p801 = scmp.lt.s32.totalorder %s798, 3
        %s802 = scalar_select %p801, %s798, 3
        %s803 = smul.addr %s800, 4
        %s804 = sadd.s32 %s802, %s803
        %s805 = smul.addr %s804, 4
        %s806 = scalar_lea.vmem %s0, %s805
        %p807 = scmp.lt.s32.totalorder %s37, 0
        %s808 = scalar_select %p807, %s37, 0
        %s809 = smul.u32 4, %s808
        %s810 = sadd.s32 %s36, 1
        %p811 = scmp.lt.s32.totalorder %s37, 0
        %s812 = scalar_select %p811, %s37, 0
        %s813 = smul.u32 4, %s812
        %p814 = scmp.lt.s32.totalorder %s810, 1
        %s815 = scalar_select %p814, %s810, 1
        %p816 = scmp.lt.s32.totalorder %s813, 3
        %s817 = scalar_select %p816, %s813, 3
        %s818 = smul.addr %s815, 4
        %s819 = sadd.s32 %s817, %s818
        %s820 = smul.addr %s819, 4
        %s821 = scalar_lea.vmem %s1, %s820
        %s822 = sadd.s32 %s36, 1
        %p823 = scmp.lt.s32.totalorder %s37, 0
        %s824 = scalar_select %p823, %s37, 0
        %s825 = smul.u32 4, %s824
        %s826 = sadd.s32 %s36, 1
        %p827 = scmp.lt.s32.totalorder %s37, 0
        %s828 = scalar_select %p827, %s37, 0
        %s829 = smul.u32 4, %s828
        %p830 = scmp.lt.s32.totalorder %s826, 1
        %s831 = scalar_select %p830, %s826, 1
        %p832 = scmp.lt.s32.totalorder %s829, 3
        %s833 = scalar_select %p832, %s829, 3
        %s834 = smul.addr %s831, 4
        %s835 = sadd.s32 %s833, %s834
        %s836 = smul.addr %s835, 4
        %s837 = scalar_lea.vmem %s2, %s836
        %s838 = sadd.s32 %s36, 1
        %p839 = scmp.lt.s32.totalorder %s37, 0
        %s840 = scalar_select %p839, %s37, 0
        %s841 = smul.u32 4, %s840
        %p842 = scmp.lt.s32.totalorder %s37, 0
        %s843 = scalar_select %p842, %s37, 0
        %s844 = smul.u32 64, %s843
        %p845 = scmp.lt.s32.totalorder %s37, 0
        %s846 = scalar_select %p845, %s37, 0
        %s847 = smul.u32 64, %s846
        %p848 = scmp.lt.s32.totalorder %s37, 0
        %s849 = scalar_select %p848, %s37, 0
        %s850 = smul.u32 64, %s849
        %p851 = scmp.lt.s32.totalorder %s36, 0
        %s852 = scalar_select %p851, %s36, 0
        %s853 = smul.addr %s852, 8
        %s854 = scalar_lea.vmem %s6, %s853
        %s855 = ssub.s32 %s37, 1
        %p856 = scmp.gt.s32.totalorder %s855, 0
        %s857 = scalar_select %p856, %s855, 0
        %s858 = smul.u32 4, %s857
        %s859 = ssub.s32 %s37, 1
        %p860 = scmp.gt.s32.totalorder %s859, 0
        %s861 = scalar_select %p860, %s859, 0
        %s862 = smul.u32 4, %s861
        %p863 = scmp.lt.s32.totalorder %s862, 3
        %s864 = scalar_select %p863, %s862, 3
        %s865 = scalar_lea.vmem %s10, %s864
        %s866 = ssub.s32 %s37, 1
        %p867 = scmp.gt.s32.totalorder %s866, 0
        %s868 = scalar_select %p867, %s866, 0
        %s869 = smul.u32 4, %s868
        %s870 = ssub.s32 %s37, 1
        %p871 = scmp.gt.s32.totalorder %s870, 0
        %s872 = scalar_select %p871, %s870, 0
        %s873 = smul.u32 4, %s872
        %p874 = scmp.lt.s32.totalorder %s36, 1
        %s875 = scalar_select %p874, %s36, 1
        %p876 = scmp.lt.s32.totalorder %s873, 3
        %s877 = scalar_select %p876, %s873, 3
        %s878 = smul.addr %s875, 4
        %s879 = sadd.s32 %s877, %s878
        %s880 = smul.addr %s879, 4
        %s881 = scalar_lea.vmem %s11, %s880
        %s882 = ssub.s32 %s37, 1
        %p883 = scmp.gt.s32.totalorder %s882, 0
        %s884 = scalar_select %p883, %s882, 0
        %s885 = smul.u32 4, %s884
        %p886 = scmp.lt.s32.totalorder %s36, 0
        %s887 = scalar_select %p886, %s36, 0
        %s888 = smul.addr %s887, 8
        %s889 = scalar_lea.vmem %s12, %s888
        %p890 = scmp.eq.s32.totalorder %s37, 0
        // Predicated region
        $region85: #{forward.5} parent=67 // pred_check
          %p891 = pneg %p890
        $region86: #{forward.5} parent=67 // pred_check_branch
          %893 = sbr.rel (%p891) target = $region88
        $region87: #{forward.5} parent=67 // pred_region
          %894 = vst [vmem:[#allocation2] sm:$0xff] 0.0
          %895 = vst [vmem:[#allocation2 + $0x8] sm:$0xff] 0.0
          %vm896 = vcmask 7168
          %897 = vst.msk [vmem:[#allocation4] sm:$0xff] %vm896, 0.0
        $region88: #{forward.5} parent=67 // pred_fallthru
          _
        %p898 = scmp.lt.s32.totalorder %s37, 1
        // Predicated region
        $region89: #{forward.5} parent=67 // pred_check
          %p899 = pneg %p898
        $region90: #{forward.5} parent=67 // pred_check_branch
          %901 = sbr.rel (%p899) target = $region92
        $region91: #{forward.5} parent=67 // pred_region
          %v902 = vld [vmem:[#allocation2] sm:$0xff]
          %v903 = vld [vmem:[#allocation2 + $0x8] sm:$0xff]
          %v904 = vld [vmem:[%s806] sm:$0xff]
          %v905 = vld [vmem:[%s806 + $0x8] sm:$0xff]
          %v906 = vld [vmem:[%s652] sm:$0xff]
          %v907 = vld [vmem:[%s652 + $0x8] sm:$0xff]
          %v908 = vld [vmem:[%s652 + $0x10] sm:$0xff]
          %v909 = vld [vmem:[%s652 + $0x18] sm:$0xff]
          %v910 = vld [vmem:[%s652 + $0x20] sm:$0xff]
          %v911 = vld [vmem:[%s652 + $0x28] sm:$0xff]
          %v912 = vld [vmem:[%s652 + $0x30] sm:$0xff]
          %v913 = vld [vmem:[%s652 + $0x38] sm:$0xff]
          %v914 = vld [vmem:[%s652 + $0x40] sm:$0xff]
          %v915 = vld [vmem:[%s652 + $0x48] sm:$0xff]
          %v916 = vld [vmem:[%s652 + $0x50] sm:$0xff]
          %v917 = vld [vmem:[%s652 + $0x58] sm:$0xff]
          %v918 = vld [vmem:[%s652 + $0x60] sm:$0xff]
          %v919 = vld [vmem:[%s652 + $0x68] sm:$0xff]
          %v920 = vld [vmem:[%s652 + $0x70] sm:$0xff]
          %v921 = vld [vmem:[%s652 + $0x78] sm:$0xff]
          %v922 = vld [vmem:[%s652 + $0x80] sm:$0xff]
          %v923 = vld [vmem:[%s652 + $0x88] sm:$0xff]
          %v924 = vld [vmem:[%s652 + $0x90] sm:$0xff]
          %v925 = vld [vmem:[%s652 + $0x98] sm:$0xff]
          %v926 = vld [vmem:[%s652 + $0xa0] sm:$0xff]
          %v927 = vld [vmem:[%s652 + $0xa8] sm:$0xff]
          %v928 = vld [vmem:[%s652 + $0xb0] sm:$0xff]
          %v929 = vld [vmem:[%s652 + $0xb8] sm:$0xff]
          %v930 = vld [vmem:[%s652 + $0xc0] sm:$0xff]
          %v931 = vld [vmem:[%s652 + $0xc8] sm:$0xff]
          %v932 = vld [vmem:[%s652 + $0xd0] sm:$0xff]
          %v933 = vld [vmem:[%s652 + $0xd8] sm:$0xff]
          %v934 = vld [vmem:[%s652 + $0xe0] sm:$0xff]
          %v935 = vld [vmem:[%s652 + $0xe8] sm:$0xff]
          %v936 = vld [vmem:[%s652 + $0xf0] sm:$0xff]
          %v937 = vld [vmem:[%s652 + $0xf8] sm:$0xff]
          %v938 = vld [vmem:[%s652 + $0x100] sm:$0xff]
          %v939 = vld [vmem:[%s652 + $0x108] sm:$0xff]
          %v940 = vld [vmem:[%s652 + $0x110] sm:$0xff]
          %v941 = vld [vmem:[%s652 + $0x118] sm:$0xff]
          %v942 = vld [vmem:[%s652 + $0x120] sm:$0xff]
          %v943 = vld [vmem:[%s652 + $0x128] sm:$0xff]
          %v944 = vld [vmem:[%s652 + $0x130] sm:$0xff]
          %v945 = vld [vmem:[%s652 + $0x138] sm:$0xff]
          %v946 = vld [vmem:[%s652 + $0x140] sm:$0xff]
          %v947 = vld [vmem:[%s652 + $0x148] sm:$0xff]
          %v948 = vld [vmem:[%s652 + $0x150] sm:$0xff]
          %v949 = vld [vmem:[%s652 + $0x158] sm:$0xff]
          %v950 = vld [vmem:[%s652 + $0x160] sm:$0xff]
          %v951 = vld [vmem:[%s652 + $0x168] sm:$0xff]
          %v952 = vld [vmem:[%s652 + $0x170] sm:$0xff]
          %v953 = vld [vmem:[%s652 + $0x178] sm:$0xff]
          %v954 = vld [vmem:[%s652 + $0x180] sm:$0xff]
          %v955 = vld [vmem:[%s652 + $0x188] sm:$0xff]
          %v956 = vld [vmem:[%s652 + $0x190] sm:$0xff]
          %v957 = vld [vmem:[%s652 + $0x198] sm:$0xff]
          %v958 = vld [vmem:[%s652 + $0x1a0] sm:$0xff]
          %v959 = vld [vmem:[%s652 + $0x1a8] sm:$0xff]
          %v960 = vld [vmem:[%s652 + $0x1b0] sm:$0xff]
          %v961 = vld [vmem:[%s652 + $0x1b8] sm:$0xff]
          %v962 = vld [vmem:[%s652 + $0x1c0] sm:$0xff]
          %v963 = vld [vmem:[%s652 + $0x1c8] sm:$0xff]
          %v964 = vld [vmem:[%s652 + $0x1d0] sm:$0xff]
          %v965 = vld [vmem:[%s652 + $0x1d8] sm:$0xff]
          %v966 = vld [vmem:[%s652 + $0x1e0] sm:$0xff]
          %v967 = vld [vmem:[%s652 + $0x1e8] sm:$0xff]
          %v968 = vld [vmem:[%s652 + $0x1f0] sm:$0xff]
          %v969 = vld [vmem:[%s652 + $0x1f8] sm:$0xff]
          %v970 = vld [vmem:[%s821] sm:$0xff]
          %v971 = vld [vmem:[%s821 + $0x8] sm:$0xff]
          %v972 = vld [vmem:[%s662] sm:$0xff]
          %v973 = vld [vmem:[%s662 + $0x8] sm:$0xff]
          %v974 = vld [vmem:[%s662 + $0x10] sm:$0xff]
          %v975 = vld [vmem:[%s662 + $0x18] sm:$0xff]
          %v976 = vld [vmem:[%s662 + $0x20] sm:$0xff]
          %v977 = vld [vmem:[%s662 + $0x28] sm:$0xff]
          %v978 = vld [vmem:[%s662 + $0x30] sm:$0xff]
          %v979 = vld [vmem:[%s662 + $0x38] sm:$0xff]
          %v980 = vld [vmem:[%s662 + $0x40] sm:$0xff]
          %v981 = vld [vmem:[%s662 + $0x48] sm:$0xff]
          %v982 = vld [vmem:[%s662 + $0x50] sm:$0xff]
          %v983 = vld [vmem:[%s662 + $0x58] sm:$0xff]
          %v984 = vld [vmem:[%s662 + $0x60] sm:$0xff]
          %v985 = vld [vmem:[%s662 + $0x68] sm:$0xff]
          %v986 = vld [vmem:[%s662 + $0x70] sm:$0xff]
          %v987 = vld [vmem:[%s662 + $0x78] sm:$0xff]
          %v988 = vld [vmem:[%s662 + $0x80] sm:$0xff]
          %v989 = vld [vmem:[%s662 + $0x88] sm:$0xff]
          %v990 = vld [vmem:[%s662 + $0x90] sm:$0xff]
          %v991 = vld [vmem:[%s662 + $0x98] sm:$0xff]
          %v992 = vld [vmem:[%s662 + $0xa0] sm:$0xff]
          %v993 = vld [vmem:[%s662 + $0xa8] sm:$0xff]
          %v994 = vld [vmem:[%s662 + $0xb0] sm:$0xff]
          %v995 = vld [vmem:[%s662 + $0xb8] sm:$0xff]
          %v996 = vld [vmem:[%s662 + $0xc0] sm:$0xff]
          %v997 = vld [vmem:[%s662 + $0xc8] sm:$0xff]
          %v998 = vld [vmem:[%s662 + $0xd0] sm:$0xff]
          %v999 = vld [vmem:[%s662 + $0xd8] sm:$0xff]
          %v1000 = vld [vmem:[%s662 + $0xe0] sm:$0xff]
          %v1001 = vld [vmem:[%s662 + $0xe8] sm:$0xff]
          %v1002 = vld [vmem:[%s662 + $0xf0] sm:$0xff]
          %v1003 = vld [vmem:[%s662 + $0xf8] sm:$0xff]
          %v1004 = vld [vmem:[%s662 + $0x100] sm:$0xff]
          %v1005 = vld [vmem:[%s662 + $0x108] sm:$0xff]
          %v1006 = vld [vmem:[%s662 + $0x110] sm:$0xff]
          %v1007 = vld [vmem:[%s662 + $0x118] sm:$0xff]
          %v1008 = vld [vmem:[%s662 + $0x120] sm:$0xff]
          %v1009 = vld [vmem:[%s662 + $0x128] sm:$0xff]
          %v1010 = vld [vmem:[%s662 + $0x130] sm:$0xff]
          %v1011 = vld [vmem:[%s662 + $0x138] sm:$0xff]
          %v1012 = vld [vmem:[%s662 + $0x140] sm:$0xff]
          %v1013 = vld [vmem:[%s662 + $0x148] sm:$0xff]
          %v1014 = vld [vmem:[%s662 + $0x150] sm:$0xff]
          %v1015 = vld [vmem:[%s662 + $0x158] sm:$0xff]
          %v1016 = vld [vmem:[%s662 + $0x160] sm:$0xff]
          %v1017 = vld [vmem:[%s662 + $0x168] sm:$0xff]
          %v1018 = vld [vmem:[%s662 + $0x170] sm:$0xff]
          %v1019 = vld [vmem:[%s662 + $0x178] sm:$0xff]
          %v1020 = vld [vmem:[%s662 + $0x180] sm:$0xff]
          %v1021 = vld [vmem:[%s662 + $0x188] sm:$0xff]
          %v1022 = vld [vmem:[%s662 + $0x190] sm:$0xff]
          %v1023 = vld [vmem:[%s662 + $0x198] sm:$0xff]
          %v1024 = vld [vmem:[%s662 + $0x1a0] sm:$0xff]
          %v1025 = vld [vmem:[%s662 + $0x1a8] sm:$0xff]
          %v1026 = vld [vmem:[%s662 + $0x1b0] sm:$0xff]
          %v1027 = vld [vmem:[%s662 + $0x1b8] sm:$0xff]
          %v1028 = vld [vmem:[%s662 + $0x1c0] sm:$0xff]
          %v1029 = vld [vmem:[%s662 + $0x1c8] sm:$0xff]
          %v1030 = vld [vmem:[%s662 + $0x1d0] sm:$0xff]
          %v1031 = vld [vmem:[%s662 + $0x1d8] sm:$0xff]
          %v1032 = vld [vmem:[%s662 + $0x1e0] sm:$0xff]
          %v1033 = vld [vmem:[%s662 + $0x1e8] sm:$0xff]
          %v1034 = vld [vmem:[%s662 + $0x1f0] sm:$0xff]
          %v1035 = vld [vmem:[%s662 + $0x1f8] sm:$0xff]
          %v1038 = vunpack.c.l.b16 %v970
          %v1039 = vunpack.c.h.b16 %v970
          %v1040 = vunpack.c.l.b16 %v971
          %v1041 = vunpack.c.h.b16 %v971
          %v1042 = vpack.c.b16 %v1038, %v1038
          %v1043 = vpack.c.b16 %v1039, %v1039
          %v1044 = vpack.c.b16 %v1040, %v1040
          %v1045 = vpack.c.b16 %v1041, %v1041
          %v1114 = vunpack.c.l.b16 %v972
          %v1115 = vunpack.c.h.b16 %v972
          %v1116 = vunpack.c.l.b16 %v973
          %v1117 = vunpack.c.h.b16 %v973
          %v1118 = vunpack.c.l.b16 %v974
          %v1119 = vunpack.c.h.b16 %v974
          %v1120 = vunpack.c.l.b16 %v975
          %v1121 = vunpack.c.h.b16 %v975
          %v1122 = vunpack.c.l.b16 %v976
          %v1123 = vunpack.c.h.b16 %v976
          %v1124 = vunpack.c.l.b16 %v977
          %v1125 = vunpack.c.h.b16 %v977
          %v1126 = vunpack.c.l.b16 %v978
          %v1127 = vunpack.c.h.b16 %v978
          %v1128 = vunpack.c.l.b16 %v979
          %v1129 = vunpack.c.h.b16 %v979
          %v1130 = vunpack.c.l.b16 %v980
          %v1131 = vunpack.c.h.b16 %v980
          %v1132 = vunpack.c.l.b16 %v981
          %v1133 = vunpack.c.h.b16 %v981
          %v1134 = vunpack.c.l.b16 %v982
          %v1135 = vunpack.c.h.b16 %v982
          %v1136 = vunpack.c.l.b16 %v983
          %v1137 = vunpack.c.h.b16 %v983
          %v1138 = vunpack.c.l.b16 %v984
          %v1139 = vunpack.c.h.b16 %v984
          %v1140 = vunpack.c.l.b16 %v985
          %v1141 = vunpack.c.h.b16 %v985
          %v1142 = vunpack.c.l.b16 %v986
          %v1143 = vunpack.c.h.b16 %v986
          %v1144 = vunpack.c.l.b16 %v987
          %v1145 = vunpack.c.h.b16 %v987
          %v1146 = vunpack.c.l.b16 %v988
          %v1147 = vunpack.c.h.b16 %v988
          %v1148 = vunpack.c.l.b16 %v989
          %v1149 = vunpack.c.h.b16 %v989
          %v1150 = vunpack.c.l.b16 %v990
          %v1151 = vunpack.c.h.b16 %v990
          %v1152 = vunpack.c.l.b16 %v991
          %v1153 = vunpack.c.h.b16 %v991
          %v1154 = vunpack.c.l.b16 %v992
          %v1155 = vunpack.c.h.b16 %v992
          %v1156 = vunpack.c.l.b16 %v993
          %v1157 = vunpack.c.h.b16 %v993
          %v1158 = vunpack.c.l.b16 %v994
          %v1159 = vunpack.c.h.b16 %v994
          %v1160 = vunpack.c.l.b16 %v995
          %v1161 = vunpack.c.h.b16 %v995
          %v1162 = vunpack.c.l.b16 %v996
          %v1163 = vunpack.c.h.b16 %v996
          %v1164 = vunpack.c.l.b16 %v997
          %v1165 = vunpack.c.h.b16 %v997
          %v1166 = vunpack.c.l.b16 %v998
          %v1167 = vunpack.c.h.b16 %v998
          %v1168 = vunpack.c.l.b16 %v999
          %v1169 = vunpack.c.h.b16 %v999
          %v1170 = vunpack.c.l.b16 %v1000
          %v1171 = vunpack.c.h.b16 %v1000
          %v1172 = vunpack.c.l.b16 %v1001
          %v1173 = vunpack.c.h.b16 %v1001
          %v1174 = vunpack.c.l.b16 %v1002
          %v1175 = vunpack.c.h.b16 %v1002
          %v1176 = vunpack.c.l.b16 %v1003
          %v1177 = vunpack.c.h.b16 %v1003
          %v1178 = vunpack.c.l.b16 %v1004
          %v1179 = vunpack.c.h.b16 %v1004
          %v1180 = vunpack.c.l.b16 %v1005
          %v1181 = vunpack.c.h.b16 %v1005
          %v1182 = vunpack.c.l.b16 %v1006
          %v1183 = vunpack.c.h.b16 %v1006
          %v1184 = vunpack.c.l.b16 %v1007
          %v1185 = vunpack.c.h.b16 %v1007
          %v1186 = vunpack.c.l.b16 %v1008
          %v1187 = vunpack.c.h.b16 %v1008
          %v1188 = vunpack.c.l.b16 %v1009
          %v1189 = vunpack.c.h.b16 %v1009
          %v1190 = vunpack.c.l.b16 %v1010
          %v1191 = vunpack.c.h.b16 %v1010
          %v1192 = vunpack.c.l.b16 %v1011
          %v1193 = vunpack.c.h.b16 %v1011
          %v1194 = vunpack.c.l.b16 %v1012
          %v1195 = vunpack.c.h.b16 %v1012
          %v1196 = vunpack.c.l.b16 %v1013
          %v1197 = vunpack.c.h.b16 %v1013
          %v1198 = vunpack.c.l.b16 %v1014
          %v1199 = vunpack.c.h.b16 %v1014
          %v1200 = vunpack.c.l.b16 %v1015
          %v1201 = vunpack.c.h.b16 %v1015
          %v1202 = vunpack.c.l.b16 %v1016
          %v1203 = vunpack.c.h.b16 %v1016
          %v1204 = vunpack.c.l.b16 %v1017
          %v1205 = vunpack.c.h.b16 %v1017
          %v1206 = vunpack.c.l.b16 %v1018
          %v1207 = vunpack.c.h.b16 %v1018
          %v1208 = vunpack.c.l.b16 %v1019
          %v1209 = vunpack.c.h.b16 %v1019
          %v1210 = vunpack.c.l.b16 %v1020
          %v1211 = vunpack.c.h.b16 %v1020
          %v1212 = vunpack.c.l.b16 %v1021
          %v1213 = vunpack.c.h.b16 %v1021
          %v1214 = vunpack.c.l.b16 %v1022
          %v1215 = vunpack.c.h.b16 %v1022
          %v1216 = vunpack.c.l.b16 %v1023
          %v1217 = vunpack.c.h.b16 %v1023
          %v1218 = vunpack.c.l.b16 %v1024
          %v1219 = vunpack.c.h.b16 %v1024
          %v1220 = vunpack.c.l.b16 %v1025
          %v1221 = vunpack.c.h.b16 %v1025
          %v1222 = vunpack.c.l.b16 %v1026
          %v1223 = vunpack.c.h.b16 %v1026
          %v1224 = vunpack.c.l.b16 %v1027
          %v1225 = vunpack.c.h.b16 %v1027
          %v1226 = vunpack.c.l.b16 %v1028
          %v1227 = vunpack.c.h.b16 %v1028
          %v1228 = vunpack.c.l.b16 %v1029
          %v1229 = vunpack.c.h.b16 %v1029
          %v1230 = vunpack.c.l.b16 %v1030
          %v1231 = vunpack.c.h.b16 %v1030
          %v1232 = vunpack.c.l.b16 %v1031
          %v1233 = vunpack.c.h.b16 %v1031
          %v1234 = vunpack.c.l.b16 %v1032
          %v1235 = vunpack.c.h.b16 %v1032
          %v1236 = vunpack.c.l.b16 %v1033
          %v1237 = vunpack.c.h.b16 %v1033
          %v1238 = vunpack.c.l.b16 %v1034
          %v1239 = vunpack.c.h.b16 %v1034
          %v1240 = vunpack.c.l.b16 %v1035
          %v1241 = vunpack.c.h.b16 %v1035
          %v1242 = vpack.c.b16 %v1116, %v1114
          %v1243 = vpack.c.b16 %v1117, %v1115
          %v1244 = vpack.c.b16 %v1120, %v1118
          %v1245 = vpack.c.b16 %v1121, %v1119
          %v1246 = vpack.c.b16 %v1124, %v1122
          %v1247 = vpack.c.b16 %v1125, %v1123
          %v1248 = vpack.c.b16 %v1128, %v1126
          %v1249 = vpack.c.b16 %v1129, %v1127
          %v1250 = vpack.c.b16 %v1132, %v1130
          %v1251 = vpack.c.b16 %v1133, %v1131
          %v1252 = vpack.c.b16 %v1136, %v1134
          %v1253 = vpack.c.b16 %v1137, %v1135
          %v1254 = vpack.c.b16 %v1140, %v1138
          %v1255 = vpack.c.b16 %v1141, %v1139
          %v1256 = vpack.c.b16 %v1144, %v1142
          %v1257 = vpack.c.b16 %v1145, %v1143
          %v1258 = vpack.c.b16 %v1148, %v1146
          %v1259 = vpack.c.b16 %v1149, %v1147
          %v1260 = vpack.c.b16 %v1152, %v1150
          %v1261 = vpack.c.b16 %v1153, %v1151
          %v1262 = vpack.c.b16 %v1156, %v1154
          %v1263 = vpack.c.b16 %v1157, %v1155
          %v1264 = vpack.c.b16 %v1160, %v1158
          %v1265 = vpack.c.b16 %v1161, %v1159
          %v1266 = vpack.c.b16 %v1164, %v1162
          %v1267 = vpack.c.b16 %v1165, %v1163
          %v1268 = vpack.c.b16 %v1168, %v1166
          %v1269 = vpack.c.b16 %v1169, %v1167
          %v1270 = vpack.c.b16 %v1172, %v1170
          %v1271 = vpack.c.b16 %v1173, %v1171
          %v1272 = vpack.c.b16 %v1176, %v1174
          %v1273 = vpack.c.b16 %v1177, %v1175
          %v1274 = vpack.c.b16 %v1180, %v1178
          %v1275 = vpack.c.b16 %v1181, %v1179
          %v1276 = vpack.c.b16 %v1184, %v1182
          %v1277 = vpack.c.b16 %v1185, %v1183
          %v1278 = vpack.c.b16 %v1188, %v1186
          %v1279 = vpack.c.b16 %v1189, %v1187
          %v1280 = vpack.c.b16 %v1192, %v1190
          %v1281 = vpack.c.b16 %v1193, %v1191
          %v1282 = vpack.c.b16 %v1196, %v1194
          %v1283 = vpack.c.b16 %v1197, %v1195
          %v1284 = vpack.c.b16 %v1200, %v1198
          %v1285 = vpack.c.b16 %v1201, %v1199
          %v1286 = vpack.c.b16 %v1204, %v1202
          %v1287 = vpack.c.b16 %v1205, %v1203
          %v1288 = vpack.c.b16 %v1208, %v1206
          %v1289 = vpack.c.b16 %v1209, %v1207
          %v1290 = vpack.c.b16 %v1212, %v1210
          %v1291 = vpack.c.b16 %v1213, %v1211
          %v1292 = vpack.c.b16 %v1216, %v1214
          %v1293 = vpack.c.b16 %v1217, %v1215
          %v1294 = vpack.c.b16 %v1220, %v1218
          %v1295 = vpack.c.b16 %v1221, %v1219
          %v1296 = vpack.c.b16 %v1224, %v1222
          %v1297 = vpack.c.b16 %v1225, %v1223
          %v1298 = vpack.c.b16 %v1228, %v1226
          %v1299 = vpack.c.b16 %v1229, %v1227
          %v1300 = vpack.c.b16 %v1232, %v1230
          %v1301 = vpack.c.b16 %v1233, %v1231
          %v1302 = vpack.c.b16 %v1236, %v1234
          %v1303 = vpack.c.b16 %v1237, %v1235
          %v1304 = vpack.c.b16 %v1240, %v1238
          %v1305 = vpack.c.b16 %v1241, %v1239
          %1370 = vmatpush.bf16.msra.mxu0 %v1256
          %1371 = vmatpush.bf16.msra.mxu0 %v1254
          %1372 = vmatpush.bf16.msra.mxu0 %v1252
          %1373 = vmatpush.bf16.msra.mxu0 %v1250
          %1374 = vmatpush.bf16.msra.mxu0 %v1248
          %1375 = vmatpush.bf16.msra.mxu0 %v1246
          %1376 = vmatpush.bf16.msra.mxu0 %v1244
          %1377 = vmatpush.bf16.msra.mxu0 %v1242
          %1378 = vmatmul.bf16.gmra.mxu0 %v1042
          %v1379 = vpop.f32.mrf.mxu0
          %v1380 = vadd.f32 0.0, %v1379
          %v1381 = vpop.f32.mrf.mxu0
          %1382 = vdwg.mxu0
          %1383 = vmatpush.bf16.msra.mxu0 %v1272
          %1384 = vmatpush.bf16.msra.mxu0 %v1270
          %1385 = vmatpush.bf16.msra.mxu0 %v1268
          %1386 = vmatpush.bf16.msra.mxu0 %v1266
          %1387 = vmatpush.bf16.msra.mxu0 %v1264
          %1388 = vmatpush.bf16.msra.mxu0 %v1262
          %1389 = vmatpush.bf16.msra.mxu0 %v1260
          %1390 = vmatpush.bf16.msra.mxu0 %v1258
          %1391 = vmatmul.bf16.gmra.mxu0 %v1043
          %v1392 = vpop.f32.mrf.mxu0
          %v1393 = vadd.f32 %v1380, %v1392
          %v1394 = vpop.f32.mrf.mxu0
          %1395 = vdwg.mxu0
          %1396 = vmatpush.bf16.msra.mxu0 %v1288
          %1397 = vmatpush.bf16.msra.mxu0 %v1286
          %1398 = vmatpush.bf16.msra.mxu0 %v1284
          %1399 = vmatpush.bf16.msra.mxu0 %v1282
          %1400 = vmatpush.bf16.msra.mxu0 %v1280
          %1401 = vmatpush.bf16.msra.mxu0 %v1278
          %1402 = vmatpush.bf16.msra.mxu0 %v1276
          %1403 = vmatpush.bf16.msra.mxu0 %v1274
          %1404 = vmatmul.bf16.gmra.mxu0 %v1044
          %v1405 = vpop.f32.mrf.mxu0
          %v1406 = vadd.f32 %v1393, %v1405
          %v1407 = vpop.f32.mrf.mxu0
          %1408 = vdwg.mxu0
          %1409 = vmatpush.bf16.msra.mxu0 %v1304
          %1410 = vmatpush.bf16.msra.mxu0 %v1302
          %1411 = vmatpush.bf16.msra.mxu0 %v1300
          %1412 = vmatpush.bf16.msra.mxu0 %v1298
          %1413 = vmatpush.bf16.msra.mxu0 %v1296
          %1414 = vmatpush.bf16.msra.mxu0 %v1294
          %1415 = vmatpush.bf16.msra.mxu0 %v1292
          %1416 = vmatpush.bf16.msra.mxu0 %v1290
          %1417 = vmatmul.bf16.gmra.mxu0 %v1045
          %v1418 = vpop.f32.mrf.mxu0
          %v1419 = vadd.f32 %v1406, %v1418
          %v1420 = vpop.f32.mrf.mxu0
          %1421 = vdwg.mxu0
          %1422 = vmatpush.bf16.msra.mxu0 %v1257
          %1423 = vmatpush.bf16.msra.mxu0 %v1255
          %1424 = vmatpush.bf16.msra.mxu0 %v1253
          %1425 = vmatpush.bf16.msra.mxu0 %v1251
          %1426 = vmatpush.bf16.msra.mxu0 %v1249
          %1427 = vmatpush.bf16.msra.mxu0 %v1247
          %1428 = vmatpush.bf16.msra.mxu0 %v1245
          %1429 = vmatpush.bf16.msra.mxu0 %v1243
          %1430 = vmatmul.bf16.gmra.mxu0 %v1042
          %v1431 = vpop.f32.mrf.mxu0
          %v1432 = vadd.f32 0.0, %v1431
          %v1433 = vpop.f32.mrf.mxu0
          %1434 = vdwg.mxu0
          %1435 = vmatpush.bf16.msra.mxu0 %v1273
          %1436 = vmatpush.bf16.msra.mxu0 %v1271
          %1437 = vmatpush.bf16.msra.mxu0 %v1269
          %1438 = vmatpush.bf16.msra.mxu0 %v1267
          %1439 = vmatpush.bf16.msra.mxu0 %v1265
          %1440 = vmatpush.bf16.msra.mxu0 %v1263
          %1441 = vmatpush.bf16.msra.mxu0 %v1261
          %1442 = vmatpush.bf16.msra.mxu0 %v1259
          %1443 = vmatmul.bf16.gmra.mxu0 %v1043
          %v1444 = vpop.f32.mrf.mxu0
          %v1445 = vadd.f32 %v1432, %v1444
          %v1446 = vpop.f32.mrf.mxu0
          %1447 = vdwg.mxu0
          %1448 = vmatpush.bf16.msra.mxu0 %v1289
          %1449 = vmatpush.bf16.msra.mxu0 %v1287
          %1450 = vmatpush.bf16.msra.mxu0 %v1285
          %1451 = vmatpush.bf16.msra.mxu0 %v1283
          %1452 = vmatpush.bf16.msra.mxu0 %v1281
          %1453 = vmatpush.bf16.msra.mxu0 %v1279
          %1454 = vmatpush.bf16.msra.mxu0 %v1277
          %1455 = vmatpush.bf16.msra.mxu0 %v1275
          %1456 = vmatmul.bf16.gmra.mxu0 %v1044
          %v1457 = vpop.f32.mrf.mxu0
          %v1458 = vadd.f32 %v1445, %v1457
          %v1459 = vpop.f32.mrf.mxu0
          %1460 = vdwg.mxu0
          %1461 = vmatpush.bf16.msra.mxu0 %v1305
          %1462 = vmatpush.bf16.msra.mxu0 %v1303
          %1463 = vmatpush.bf16.msra.mxu0 %v1301
          %1464 = vmatpush.bf16.msra.mxu0 %v1299
          %1465 = vmatpush.bf16.msra.mxu0 %v1297
          %1466 = vmatpush.bf16.msra.mxu0 %v1295
          %1467 = vmatpush.bf16.msra.mxu0 %v1293
          %1468 = vmatpush.bf16.msra.mxu0 %v1291
          %1469 = vmatmul.bf16.gmra.mxu0 %v1045
          %v1470 = vpop.f32.mrf.mxu0
          %v1471 = vadd.f32 %v1458, %v1470
          %v1472 = vpop.f32.mrf.mxu0
          %1473 = vdwg.mxu0
          %v1476 = vunpack.c.l.b16 %v904
          %v1477 = vunpack.c.h.b16 %v904
          %v1478 = vunpack.c.l.b16 %v905
          %v1479 = vunpack.c.h.b16 %v905
          %v1480 = vpack.c.b16 %v1476, %v1476
          %v1481 = vpack.c.b16 %v1477, %v1477
          %v1482 = vpack.c.b16 %v1478, %v1478
          %v1483 = vpack.c.b16 %v1479, %v1479
          %v1552 = vunpack.c.l.b16 %v906
          %v1553 = vunpack.c.h.b16 %v906
          %v1554 = vunpack.c.l.b16 %v907
          %v1555 = vunpack.c.h.b16 %v907
          %v1556 = vunpack.c.l.b16 %v908
          %v1557 = vunpack.c.h.b16 %v908
          %v1558 = vunpack.c.l.b16 %v909
          %v1559 = vunpack.c.h.b16 %v909
          %v1560 = vunpack.c.l.b16 %v910
          %v1561 = vunpack.c.h.b16 %v910
          %v1562 = vunpack.c.l.b16 %v911
          %v1563 = vunpack.c.h.b16 %v911
          %v1564 = vunpack.c.l.b16 %v912
          %v1565 = vunpack.c.h.b16 %v912
          %v1566 = vunpack.c.l.b16 %v913
          %v1567 = vunpack.c.h.b16 %v913
          %v1568 = vunpack.c.l.b16 %v914
          %v1569 = vunpack.c.h.b16 %v914
          %v1570 = vunpack.c.l.b16 %v915
          %v1571 = vunpack.c.h.b16 %v915
          %v1572 = vunpack.c.l.b16 %v916
          %v1573 = vunpack.c.h.b16 %v916
          %v1574 = vunpack.c.l.b16 %v917
          %v1575 = vunpack.c.h.b16 %v917
          %v1576 = vunpack.c.l.b16 %v918
          %v1577 = vunpack.c.h.b16 %v918
          %v1578 = vunpack.c.l.b16 %v919
          %v1579 = vunpack.c.h.b16 %v919
          %v1580 = vunpack.c.l.b16 %v920
          %v1581 = vunpack.c.h.b16 %v920
          %v1582 = vunpack.c.l.b16 %v921
          %v1583 = vunpack.c.h.b16 %v921
          %v1584 = vunpack.c.l.b16 %v922
          %v1585 = vunpack.c.h.b16 %v922
          %v1586 = vunpack.c.l.b16 %v923
          %v1587 = vunpack.c.h.b16 %v923
          %v1588 = vunpack.c.l.b16 %v924
          %v1589 = vunpack.c.h.b16 %v924
          %v1590 = vunpack.c.l.b16 %v925
          %v1591 = vunpack.c.h.b16 %v925
          %v1592 = vunpack.c.l.b16 %v926
          %v1593 = vunpack.c.h.b16 %v926
          %v1594 = vunpack.c.l.b16 %v927
          %v1595 = vunpack.c.h.b16 %v927
          %v1596 = vunpack.c.l.b16 %v928
          %v1597 = vunpack.c.h.b16 %v928
          %v1598 = vunpack.c.l.b16 %v929
          %v1599 = vunpack.c.h.b16 %v929
          %v1600 = vunpack.c.l.b16 %v930
          %v1601 = vunpack.c.h.b16 %v930
          %v1602 = vunpack.c.l.b16 %v931
          %v1603 = vunpack.c.h.b16 %v931
          %v1604 = vunpack.c.l.b16 %v932
          %v1605 = vunpack.c.h.b16 %v932
          %v1606 = vunpack.c.l.b16 %v933
          %v1607 = vunpack.c.h.b16 %v933
          %v1608 = vunpack.c.l.b16 %v934
          %v1609 = vunpack.c.h.b16 %v934
          %v1610 = vunpack.c.l.b16 %v935
          %v1611 = vunpack.c.h.b16 %v935
          %v1612 = vunpack.c.l.b16 %v936
          %v1613 = vunpack.c.h.b16 %v936
          %v1614 = vunpack.c.l.b16 %v937
          %v1615 = vunpack.c.h.b16 %v937
          %v1616 = vunpack.c.l.b16 %v938
          %v1617 = vunpack.c.h.b16 %v938
          %v1618 = vunpack.c.l.b16 %v939
          %v1619 = vunpack.c.h.b16 %v939
          %v1620 = vunpack.c.l.b16 %v940
          %v1621 = vunpack.c.h.b16 %v940
          %v1622 = vunpack.c.l.b16 %v941
          %v1623 = vunpack.c.h.b16 %v941
          %v1624 = vunpack.c.l.b16 %v942
          %v1625 = vunpack.c.h.b16 %v942
          %v1626 = vunpack.c.l.b16 %v943
          %v1627 = vunpack.c.h.b16 %v943
          %v1628 = vunpack.c.l.b16 %v944
          %v1629 = vunpack.c.h.b16 %v944
          %v1630 = vunpack.c.l.b16 %v945
          %v1631 = vunpack.c.h.b16 %v945
          %v1632 = vunpack.c.l.b16 %v946
          %v1633 = vunpack.c.h.b16 %v946
          %v1634 = vunpack.c.l.b16 %v947
          %v1635 = vunpack.c.h.b16 %v947
          %v1636 = vunpack.c.l.b16 %v948
          %v1637 = vunpack.c.h.b16 %v948
          %v1638 = vunpack.c.l.b16 %v949
          %v1639 = vunpack.c.h.b16 %v949
          %v1640 = vunpack.c.l.b16 %v950
          %v1641 = vunpack.c.h.b16 %v950
          %v1642 = vunpack.c.l.b16 %v951
          %v1643 = vunpack.c.h.b16 %v951
          %v1644 = vunpack.c.l.b16 %v952
          %v1645 = vunpack.c.h.b16 %v952
          %v1646 = vunpack.c.l.b16 %v953
          %v1647 = vunpack.c.h.b16 %v953
          %v1648 = vunpack.c.l.b16 %v954
          %v1649 = vunpack.c.h.b16 %v954
          %v1650 = vunpack.c.l.b16 %v955
          %v1651 = vunpack.c.h.b16 %v955
          %v1652 = vunpack.c.l.b16 %v956
          %v1653 = vunpack.c.h.b16 %v956
          %v1654 = vunpack.c.l.b16 %v957
          %v1655 = vunpack.c.h.b16 %v957
          %v1656 = vunpack.c.l.b16 %v958
          %v1657 = vunpack.c.h.b16 %v958
          %v1658 = vunpack.c.l.b16 %v959
          %v1659 = vunpack.c.h.b16 %v959
          %v1660 = vunpack.c.l.b16 %v960
          %v1661 = vunpack.c.h.b16 %v960
          %v1662 = vunpack.c.l.b16 %v961
          %v1663 = vunpack.c.h.b16 %v961
          %v1664 = vunpack.c.l.b16 %v962
          %v1665 = vunpack.c.h.b16 %v962
          %v1666 = vunpack.c.l.b16 %v963
          %v1667 = vunpack.c.h.b16 %v963
          %v1668 = vunpack.c.l.b16 %v964
          %v1669 = vunpack.c.h.b16 %v964
          %v1670 = vunpack.c.l.b16 %v965
          %v1671 = vunpack.c.h.b16 %v965
          %v1672 = vunpack.c.l.b16 %v966
          %v1673 = vunpack.c.h.b16 %v966
          %v1674 = vunpack.c.l.b16 %v967
          %v1675 = vunpack.c.h.b16 %v967
          %v1676 = vunpack.c.l.b16 %v968
          %v1677 = vunpack.c.h.b16 %v968
          %v1678 = vunpack.c.l.b16 %v969
          %v1679 = vunpack.c.h.b16 %v969
          %v1680 = vpack.c.b16 %v1554, %v1552
          %v1681 = vpack.c.b16 %v1555, %v1553
          %v1682 = vpack.c.b16 %v1558, %v1556
          %v1683 = vpack.c.b16 %v1559, %v1557
          %v1684 = vpack.c.b16 %v1562, %v1560
          %v1685 = vpack.c.b16 %v1563, %v1561
          %v1686 = vpack.c.b16 %v1566, %v1564
          %v1687 = vpack.c.b16 %v1567, %v1565
          %v1688 = vpack.c.b16 %v1570, %v1568
          %v1689 = vpack.c.b16 %v1571, %v1569
          %v1690 = vpack.c.b16 %v1574, %v1572
          %v1691 = vpack.c.b16 %v1575, %v1573
          %v1692 = vpack.c.b16 %v1578, %v1576
          %v1693 = vpack.c.b16 %v1579, %v1577
          %v1694 = vpack.c.b16 %v1582, %v1580
          %v1695 = vpack.c.b16 %v1583, %v1581
          %v1696 = vpack.c.b16 %v1586, %v1584
          %v1697 = vpack.c.b16 %v1587, %v1585
          %v1698 = vpack.c.b16 %v1590, %v1588
          %v1699 = vpack.c.b16 %v1591, %v1589
          %v1700 = vpack.c.b16 %v1594, %v1592
          %v1701 = vpack.c.b16 %v1595, %v1593
          %v1702 = vpack.c.b16 %v1598, %v1596
          %v1703 = vpack.c.b16 %v1599, %v1597
          %v1704 = vpack.c.b16 %v1602, %v1600
          %v1705 = vpack.c.b16 %v1603, %v1601
          %v1706 = vpack.c.b16 %v1606, %v1604
          %v1707 = vpack.c.b16 %v1607, %v1605
          %v1708 = vpack.c.b16 %v1610, %v1608
          %v1709 = vpack.c.b16 %v1611, %v1609
          %v1710 = vpack.c.b16 %v1614, %v1612
          %v1711 = vpack.c.b16 %v1615, %v1613
          %v1712 = vpack.c.b16 %v1618, %v1616
          %v1713 = vpack.c.b16 %v1619, %v1617
          %v1714 = vpack.c.b16 %v1622, %v1620
          %v1715 = vpack.c.b16 %v1623, %v1621
          %v1716 = vpack.c.b16 %v1626, %v1624
          %v1717 = vpack.c.b16 %v1627, %v1625
          %v1718 = vpack.c.b16 %v1630, %v1628
          %v1719 = vpack.c.b16 %v1631, %v1629
          %v1720 = vpack.c.b16 %v1634, %v1632
          %v1721 = vpack.c.b16 %v1635, %v1633
          %v1722 = vpack.c.b16 %v1638, %v1636
          %v1723 = vpack.c.b16 %v1639, %v1637
          %v1724 = vpack.c.b16 %v1642, %v1640
          %v1725 = vpack.c.b16 %v1643, %v1641
          %v1726 = vpack.c.b16 %v1646, %v1644
          %v1727 = vpack.c.b16 %v1647, %v1645
          %v1728 = vpack.c.b16 %v1650, %v1648
          %v1729 = vpack.c.b16 %v1651, %v1649
          %v1730 = vpack.c.b16 %v1654, %v1652
          %v1731 = vpack.c.b16 %v1655, %v1653
          %v1732 = vpack.c.b16 %v1658, %v1656
          %v1733 = vpack.c.b16 %v1659, %v1657
          %v1734 = vpack.c.b16 %v1662, %v1660
          %v1735 = vpack.c.b16 %v1663, %v1661
          %v1736 = vpack.c.b16 %v1666, %v1664
          %v1737 = vpack.c.b16 %v1667, %v1665
          %v1738 = vpack.c.b16 %v1670, %v1668
          %v1739 = vpack.c.b16 %v1671, %v1669
          %v1740 = vpack.c.b16 %v1674, %v1672
          %v1741 = vpack.c.b16 %v1675, %v1673
          %v1742 = vpack.c.b16 %v1678, %v1676
          %v1743 = vpack.c.b16 %v1679, %v1677
          %1808 = vmatpush.bf16.msra.mxu0 %v1694
          %1809 = vmatpush.bf16.msra.mxu0 %v1692
          %1810 = vmatpush.bf16.msra.mxu0 %v1690
          %1811 = vmatpush.bf16.msra.mxu0 %v1688
          %1812 = vmatpush.bf16.msra.mxu0 %v1686
          %1813 = vmatpush.bf16.msra.mxu0 %v1684
          %1814 = vmatpush.bf16.msra.mxu0 %v1682
          %1815 = vmatpush.bf16.msra.mxu0 %v1680
          %1816 = vmatmul.bf16.gmra.mxu0 %v1480
          %v1817 = vpop.f32.mrf.mxu0
          %v1818 = vadd.f32 %v1419, %v1817
          %v1819 = vpop.f32.mrf.mxu0
          %1820 = vdwg.mxu0
          %1821 = vmatpush.bf16.msra.mxu0 %v1710
          %1822 = vmatpush.bf16.msra.mxu0 %v1708
          %1823 = vmatpush.bf16.msra.mxu0 %v1706
          %1824 = vmatpush.bf16.msra.mxu0 %v1704
          %1825 = vmatpush.bf16.msra.mxu0 %v1702
          %1826 = vmatpush.bf16.msra.mxu0 %v1700
          %1827 = vmatpush.bf16.msra.mxu0 %v1698
          %1828 = vmatpush.bf16.msra.mxu0 %v1696
          %1829 = vmatmul.bf16.gmra.mxu0 %v1481
          %v1830 = vpop.f32.mrf.mxu0
          %v1831 = vadd.f32 %v1818, %v1830
          %v1832 = vpop.f32.mrf.mxu0
          %1833 = vdwg.mxu0
          %1834 = vmatpush.bf16.msra.mxu0 %v1726
          %1835 = vmatpush.bf16.msra.mxu0 %v1724
          %1836 = vmatpush.bf16.msra.mxu0 %v1722
          %1837 = vmatpush.bf16.msra.mxu0 %v1720
          %1838 = vmatpush.bf16.msra.mxu0 %v1718
          %1839 = vmatpush.bf16.msra.mxu0 %v1716
          %1840 = vmatpush.bf16.msra.mxu0 %v1714
          %1841 = vmatpush.bf16.msra.mxu0 %v1712
          %1842 = vmatmul.bf16.gmra.mxu0 %v1482
          %v1843 = vpop.f32.mrf.mxu0
          %v1844 = vadd.f32 %v1831, %v1843
          %v1845 = vpop.f32.mrf.mxu0
          %1846 = vdwg.mxu0
          %1847 = vmatpush.bf16.msra.mxu0 %v1742
          %1848 = vmatpush.bf16.msra.mxu0 %v1740
          %1849 = vmatpush.bf16.msra.mxu0 %v1738
          %1850 = vmatpush.bf16.msra.mxu0 %v1736
          %1851 = vmatpush.bf16.msra.mxu0 %v1734
          %1852 = vmatpush.bf16.msra.mxu0 %v1732
          %1853 = vmatpush.bf16.msra.mxu0 %v1730
          %1854 = vmatpush.bf16.msra.mxu0 %v1728
          %1855 = vmatmul.bf16.gmra.mxu0 %v1483
          %v1856 = vpop.f32.mrf.mxu0
          %v1857 = vadd.f32 %v1844, %v1856
          %v1858 = vpop.f32.mrf.mxu0
          %1859 = vdwg.mxu0
          %1860 = vmatpush.bf16.msra.mxu0 %v1695
          %1861 = vmatpush.bf16.msra.mxu0 %v1693
          %1862 = vmatpush.bf16.msra.mxu0 %v1691
          %1863 = vmatpush.bf16.msra.mxu0 %v1689
          %1864 = vmatpush.bf16.msra.mxu0 %v1687
          %1865 = vmatpush.bf16.msra.mxu0 %v1685
          %1866 = vmatpush.bf16.msra.mxu0 %v1683
          %1867 = vmatpush.bf16.msra.mxu0 %v1681
          %1868 = vmatmul.bf16.gmra.mxu0 %v1480
          %v1869 = vpop.f32.mrf.mxu0
          %v1870 = vadd.f32 %v1471, %v1869
          %v1871 = vpop.f32.mrf.mxu0
          %1872 = vdwg.mxu0
          %1873 = vmatpush.bf16.msra.mxu0 %v1711
          %1874 = vmatpush.bf16.msra.mxu0 %v1709
          %1875 = vmatpush.bf16.msra.mxu0 %v1707
          %1876 = vmatpush.bf16.msra.mxu0 %v1705
          %1877 = vmatpush.bf16.msra.mxu0 %v1703
          %1878 = vmatpush.bf16.msra.mxu0 %v1701
          %1879 = vmatpush.bf16.msra.mxu0 %v1699
          %1880 = vmatpush.bf16.msra.mxu0 %v1697
          %1881 = vmatmul.bf16.gmra.mxu0 %v1481
          %v1882 = vpop.f32.mrf.mxu0
          %v1883 = vadd.f32 %v1870, %v1882
          %v1884 = vpop.f32.mrf.mxu0
          %1885 = vdwg.mxu0
          %1886 = vmatpush.bf16.msra.mxu0 %v1727
          %1887 = vmatpush.bf16.msra.mxu0 %v1725
          %1888 = vmatpush.bf16.msra.mxu0 %v1723
          %1889 = vmatpush.bf16.msra.mxu0 %v1721
          %1890 = vmatpush.bf16.msra.mxu0 %v1719
          %1891 = vmatpush.bf16.msra.mxu0 %v1717
          %1892 = vmatpush.bf16.msra.mxu0 %v1715
          %1893 = vmatpush.bf16.msra.mxu0 %v1713
          %1894 = vmatmul.bf16.gmra.mxu0 %v1482
          %v1895 = vpop.f32.mrf.mxu0
          %v1896 = vadd.f32 %v1883, %v1895
          %v1897 = vpop.f32.mrf.mxu0
          %1898 = vdwg.mxu0
          %1899 = vmatpush.bf16.msra.mxu0 %v1743
          %1900 = vmatpush.bf16.msra.mxu0 %v1741
          %1901 = vmatpush.bf16.msra.mxu0 %v1739
          %1902 = vmatpush.bf16.msra.mxu0 %v1737
          %1903 = vmatpush.bf16.msra.mxu0 %v1735
          %1904 = vmatpush.bf16.msra.mxu0 %v1733
          %1905 = vmatpush.bf16.msra.mxu0 %v1731
          %1906 = vmatpush.bf16.msra.mxu0 %v1729
          %1907 = vmatmul.bf16.gmra.mxu0 %v1483
          %v1908 = vpop.f32.mrf.mxu0
          %v1909 = vadd.f32 %v1896, %v1908
          %v1910 = vpop.f32.mrf.mxu0
          %1911 = vdwg.mxu0
          %v1912 = vld [vmem:[%s837] sm:$0xff]
          %v1913 = vld [vmem:[%s837 + $0x8] sm:$0xff]
          %v1914 = vld [vmem:[%s672] sm:$0xff]
          %v1915 = vld [vmem:[%s672 + $0x8] sm:$0xff]
          %v1916 = vld [vmem:[%s672 + $0x10] sm:$0xff]
          %v1917 = vld [vmem:[%s672 + $0x18] sm:$0xff]
          %v1918 = vld [vmem:[%s672 + $0x20] sm:$0xff]
          %v1919 = vld [vmem:[%s672 + $0x28] sm:$0xff]
          %v1920 = vld [vmem:[%s672 + $0x30] sm:$0xff]
          %v1921 = vld [vmem:[%s672 + $0x38] sm:$0xff]
          %v1922 = vld [vmem:[%s672 + $0x40] sm:$0xff]
          %v1923 = vld [vmem:[%s672 + $0x48] sm:$0xff]
          %v1924 = vld [vmem:[%s672 + $0x50] sm:$0xff]
          %v1925 = vld [vmem:[%s672 + $0x58] sm:$0xff]
          %v1926 = vld [vmem:[%s672 + $0x60] sm:$0xff]
          %v1927 = vld [vmem:[%s672 + $0x68] sm:$0xff]
          %v1928 = vld [vmem:[%s672 + $0x70] sm:$0xff]
          %v1929 = vld [vmem:[%s672 + $0x78] sm:$0xff]
          %v1930 = vld [vmem:[%s672 + $0x80] sm:$0xff]
          %v1931 = vld [vmem:[%s672 + $0x88] sm:$0xff]
          %v1932 = vld [vmem:[%s672 + $0x90] sm:$0xff]
          %v1933 = vld [vmem:[%s672 + $0x98] sm:$0xff]
          %v1934 = vld [vmem:[%s672 + $0xa0] sm:$0xff]
          %v1935 = vld [vmem:[%s672 + $0xa8] sm:$0xff]
          %v1936 = vld [vmem:[%s672 + $0xb0] sm:$0xff]
          %v1937 = vld [vmem:[%s672 + $0xb8] sm:$0xff]
          %v1938 = vld [vmem:[%s672 + $0xc0] sm:$0xff]
          %v1939 = vld [vmem:[%s672 + $0xc8] sm:$0xff]
          %v1940 = vld [vmem:[%s672 + $0xd0] sm:$0xff]
          %v1941 = vld [vmem:[%s672 + $0xd8] sm:$0xff]
          %v1942 = vld [vmem:[%s672 + $0xe0] sm:$0xff]
          %v1943 = vld [vmem:[%s672 + $0xe8] sm:$0xff]
          %v1944 = vld [vmem:[%s672 + $0xf0] sm:$0xff]
          %v1945 = vld [vmem:[%s672 + $0xf8] sm:$0xff]
          %v1946 = vld [vmem:[%s672 + $0x100] sm:$0xff]
          %v1947 = vld [vmem:[%s672 + $0x108] sm:$0xff]
          %v1948 = vld [vmem:[%s672 + $0x110] sm:$0xff]
          %v1949 = vld [vmem:[%s672 + $0x118] sm:$0xff]
          %v1950 = vld [vmem:[%s672 + $0x120] sm:$0xff]
          %v1951 = vld [vmem:[%s672 + $0x128] sm:$0xff]
          %v1952 = vld [vmem:[%s672 + $0x130] sm:$0xff]
          %v1953 = vld [vmem:[%s672 + $0x138] sm:$0xff]
          %v1954 = vld [vmem:[%s672 + $0x140] sm:$0xff]
          %v1955 = vld [vmem:[%s672 + $0x148] sm:$0xff]
          %v1956 = vld [vmem:[%s672 + $0x150] sm:$0xff]
          %v1957 = vld [vmem:[%s672 + $0x158] sm:$0xff]
          %v1958 = vld [vmem:[%s672 + $0x160] sm:$0xff]
          %v1959 = vld [vmem:[%s672 + $0x168] sm:$0xff]
          %v1960 = vld [vmem:[%s672 + $0x170] sm:$0xff]
          %v1961 = vld [vmem:[%s672 + $0x178] sm:$0xff]
          %v1962 = vld [vmem:[%s672 + $0x180] sm:$0xff]
          %v1963 = vld [vmem:[%s672 + $0x188] sm:$0xff]
          %v1964 = vld [vmem:[%s672 + $0x190] sm:$0xff]
          %v1965 = vld [vmem:[%s672 + $0x198] sm:$0xff]
          %v1966 = vld [vmem:[%s672 + $0x1a0] sm:$0xff]
          %v1967 = vld [vmem:[%s672 + $0x1a8] sm:$0xff]
          %v1968 = vld [vmem:[%s672 + $0x1b0] sm:$0xff]
          %v1969 = vld [vmem:[%s672 + $0x1b8] sm:$0xff]
          %v1970 = vld [vmem:[%s672 + $0x1c0] sm:$0xff]
          %v1971 = vld [vmem:[%s672 + $0x1c8] sm:$0xff]
          %v1972 = vld [vmem:[%s672 + $0x1d0] sm:$0xff]
          %v1973 = vld [vmem:[%s672 + $0x1d8] sm:$0xff]
          %v1974 = vld [vmem:[%s672 + $0x1e0] sm:$0xff]
          %v1975 = vld [vmem:[%s672 + $0x1e8] sm:$0xff]
          %v1976 = vld [vmem:[%s672 + $0x1f0] sm:$0xff]
          %v1977 = vld [vmem:[%s672 + $0x1f8] sm:$0xff]
          %v1980 = vunpack.c.l.b16 %v1912
          %v1981 = vunpack.c.h.b16 %v1912
          %v1982 = vunpack.c.l.b16 %v1913
          %v1983 = vunpack.c.h.b16 %v1913
          %v1984 = vpack.c.b16 %v1980, %v1980
          %v1985 = vpack.c.b16 %v1981, %v1981
          %v1986 = vpack.c.b16 %v1982, %v1982
          %v1987 = vpack.c.b16 %v1983, %v1983
          %v2056 = vunpack.c.l.b16 %v1914
          %v2057 = vunpack.c.h.b16 %v1914
          %v2058 = vunpack.c.l.b16 %v1915
          %v2059 = vunpack.c.h.b16 %v1915
          %v2060 = vunpack.c.l.b16 %v1916
          %v2061 = vunpack.c.h.b16 %v1916
          %v2062 = vunpack.c.l.b16 %v1917
          %v2063 = vunpack.c.h.b16 %v1917
          %v2064 = vunpack.c.l.b16 %v1918
          %v2065 = vunpack.c.h.b16 %v1918
          %v2066 = vunpack.c.l.b16 %v1919
          %v2067 = vunpack.c.h.b16 %v1919
          %v2068 = vunpack.c.l.b16 %v1920
          %v2069 = vunpack.c.h.b16 %v1920
          %v2070 = vunpack.c.l.b16 %v1921
          %v2071 = vunpack.c.h.b16 %v1921
          %v2072 = vunpack.c.l.b16 %v1922
          %v2073 = vunpack.c.h.b16 %v1922
          %v2074 = vunpack.c.l.b16 %v1923
          %v2075 = vunpack.c.h.b16 %v1923
          %v2076 = vunpack.c.l.b16 %v1924
          %v2077 = vunpack.c.h.b16 %v1924
          %v2078 = vunpack.c.l.b16 %v1925
          %v2079 = vunpack.c.h.b16 %v1925
          %v2080 = vunpack.c.l.b16 %v1926
          %v2081 = vunpack.c.h.b16 %v1926
          %v2082 = vunpack.c.l.b16 %v1927
          %v2083 = vunpack.c.h.b16 %v1927
          %v2084 = vunpack.c.l.b16 %v1928
          %v2085 = vunpack.c.h.b16 %v1928
          %v2086 = vunpack.c.l.b16 %v1929
          %v2087 = vunpack.c.h.b16 %v1929
          %v2088 = vunpack.c.l.b16 %v1930
          %v2089 = vunpack.c.h.b16 %v1930
          %v2090 = vunpack.c.l.b16 %v1931
          %v2091 = vunpack.c.h.b16 %v1931
          %v2092 = vunpack.c.l.b16 %v1932
          %v2093 = vunpack.c.h.b16 %v1932
          %v2094 = vunpack.c.l.b16 %v1933
          %v2095 = vunpack.c.h.b16 %v1933
          %v2096 = vunpack.c.l.b16 %v1934
          %v2097 = vunpack.c.h.b16 %v1934
          %v2098 = vunpack.c.l.b16 %v1935
          %v2099 = vunpack.c.h.b16 %v1935
          %v2100 = vunpack.c.l.b16 %v1936
          %v2101 = vunpack.c.h.b16 %v1936
          %v2102 = vunpack.c.l.b16 %v1937
          %v2103 = vunpack.c.h.b16 %v1937
          %v2104 = vunpack.c.l.b16 %v1938
          %v2105 = vunpack.c.h.b16 %v1938
          %v2106 = vunpack.c.l.b16 %v1939
          %v2107 = vunpack.c.h.b16 %v1939
          %v2108 = vunpack.c.l.b16 %v1940
          %v2109 = vunpack.c.h.b16 %v1940
          %v2110 = vunpack.c.l.b16 %v1941
          %v2111 = vunpack.c.h.b16 %v1941
          %v2112 = vunpack.c.l.b16 %v1942
          %v2113 = vunpack.c.h.b16 %v1942
          %v2114 = vunpack.c.l.b16 %v1943
          %v2115 = vunpack.c.h.b16 %v1943
          %v2116 = vunpack.c.l.b16 %v1944
          %v2117 = vunpack.c.h.b16 %v1944
          %v2118 = vunpack.c.l.b16 %v1945
          %v2119 = vunpack.c.h.b16 %v1945
          %v2120 = vunpack.c.l.b16 %v1946
          %v2121 = vunpack.c.h.b16 %v1946
          %v2122 = vunpack.c.l.b16 %v1947
          %v2123 = vunpack.c.h.b16 %v1947
          %v2124 = vunpack.c.l.b16 %v1948
          %v2125 = vunpack.c.h.b16 %v1948
          %v2126 = vunpack.c.l.b16 %v1949
          %v2127 = vunpack.c.h.b16 %v1949
          %v2128 = vunpack.c.l.b16 %v1950
          %v2129 = vunpack.c.h.b16 %v1950
          %v2130 = vunpack.c.l.b16 %v1951
          %v2131 = vunpack.c.h.b16 %v1951
          %v2132 = vunpack.c.l.b16 %v1952
          %v2133 = vunpack.c.h.b16 %v1952
          %v2134 = vunpack.c.l.b16 %v1953
          %v2135 = vunpack.c.h.b16 %v1953
          %v2136 = vunpack.c.l.b16 %v1954
          %v2137 = vunpack.c.h.b16 %v1954
          %v2138 = vunpack.c.l.b16 %v1955
          %v2139 = vunpack.c.h.b16 %v1955
          %v2140 = vunpack.c.l.b16 %v1956
          %v2141 = vunpack.c.h.b16 %v1956
          %v2142 = vunpack.c.l.b16 %v1957
          %v2143 = vunpack.c.h.b16 %v1957
          %v2144 = vunpack.c.l.b16 %v1958
          %v2145 = vunpack.c.h.b16 %v1958
          %v2146 = vunpack.c.l.b16 %v1959
          %v2147 = vunpack.c.h.b16 %v1959
          %v2148 = vunpack.c.l.b16 %v1960
          %v2149 = vunpack.c.h.b16 %v1960
          %v2150 = vunpack.c.l.b16 %v1961
          %v2151 = vunpack.c.h.b16 %v1961
          %v2152 = vunpack.c.l.b16 %v1962
          %v2153 = vunpack.c.h.b16 %v1962
          %v2154 = vunpack.c.l.b16 %v1963
          %v2155 = vunpack.c.h.b16 %v1963
          %v2156 = vunpack.c.l.b16 %v1964
          %v2157 = vunpack.c.h.b16 %v1964
          %v2158 = vunpack.c.l.b16 %v1965
          %v2159 = vunpack.c.h.b16 %v1965
          %v2160 = vunpack.c.l.b16 %v1966
          %v2161 = vunpack.c.h.b16 %v1966
          %v2162 = vunpack.c.l.b16 %v1967
          %v2163 = vunpack.c.h.b16 %v1967
          %v2164 = vunpack.c.l.b16 %v1968
          %v2165 = vunpack.c.h.b16 %v1968
          %v2166 = vunpack.c.l.b16 %v1969
          %v2167 = vunpack.c.h.b16 %v1969
          %v2168 = vunpack.c.l.b16 %v1970
          %v2169 = vunpack.c.h.b16 %v1970
          %v2170 = vunpack.c.l.b16 %v1971
          %v2171 = vunpack.c.h.b16 %v1971
          %v2172 = vunpack.c.l.b16 %v1972
          %v2173 = vunpack.c.h.b16 %v1972
          %v2174 = vunpack.c.l.b16 %v1973
          %v2175 = vunpack.c.h.b16 %v1973
          %v2176 = vunpack.c.l.b16 %v1974
          %v2177 = vunpack.c.h.b16 %v1974
          %v2178 = vunpack.c.l.b16 %v1975
          %v2179 = vunpack.c.h.b16 %v1975
          %v2180 = vunpack.c.l.b16 %v1976
          %v2181 = vunpack.c.h.b16 %v1976
          %v2182 = vunpack.c.l.b16 %v1977
          %v2183 = vunpack.c.h.b16 %v1977
          %v2184 = vpack.c.b16 %v2058, %v2056
          %v2185 = vpack.c.b16 %v2059, %v2057
          %v2186 = vpack.c.b16 %v2062, %v2060
          %v2187 = vpack.c.b16 %v2063, %v2061
          %v2188 = vpack.c.b16 %v2066, %v2064
          %v2189 = vpack.c.b16 %v2067, %v2065
          %v2190 = vpack.c.b16 %v2070, %v2068
          %v2191 = vpack.c.b16 %v2071, %v2069
          %v2192 = vpack.c.b16 %v2074, %v2072
          %v2193 = vpack.c.b16 %v2075, %v2073
          %v2194 = vpack.c.b16 %v2078, %v2076
          %v2195 = vpack.c.b16 %v2079, %v2077
          %v2196 = vpack.c.b16 %v2082, %v2080
          %v2197 = vpack.c.b16 %v2083, %v2081
          %v2198 = vpack.c.b16 %v2086, %v2084
          %v2199 = vpack.c.b16 %v2087, %v2085
          %v2200 = vpack.c.b16 %v2090, %v2088
          %v2201 = vpack.c.b16 %v2091, %v2089
          %v2202 = vpack.c.b16 %v2094, %v2092
          %v2203 = vpack.c.b16 %v2095, %v2093
          %v2204 = vpack.c.b16 %v2098, %v2096
          %v2205 = vpack.c.b16 %v2099, %v2097
          %v2206 = vpack.c.b16 %v2102, %v2100
          %v2207 = vpack.c.b16 %v2103, %v2101
          %v2208 = vpack.c.b16 %v2106, %v2104
          %v2209 = vpack.c.b16 %v2107, %v2105
          %v2210 = vpack.c.b16 %v2110, %v2108
          %v2211 = vpack.c.b16 %v2111, %v2109
          %v2212 = vpack.c.b16 %v2114, %v2112
          %v2213 = vpack.c.b16 %v2115, %v2113
          %v2214 = vpack.c.b16 %v2118, %v2116
          %v2215 = vpack.c.b16 %v2119, %v2117
          %v2216 = vpack.c.b16 %v2122, %v2120
          %v2217 = vpack.c.b16 %v2123, %v2121
          %v2218 = vpack.c.b16 %v2126, %v2124
          %v2219 = vpack.c.b16 %v2127, %v2125
          %v2220 = vpack.c.b16 %v2130, %v2128
          %v2221 = vpack.c.b16 %v2131, %v2129
          %v2222 = vpack.c.b16 %v2134, %v2132
          %v2223 = vpack.c.b16 %v2135, %v2133
          %v2224 = vpack.c.b16 %v2138, %v2136
          %v2225 = vpack.c.b16 %v2139, %v2137
          %v2226 = vpack.c.b16 %v2142, %v2140
          %v2227 = vpack.c.b16 %v2143, %v2141
          %v2228 = vpack.c.b16 %v2146, %v2144
          %v2229 = vpack.c.b16 %v2147, %v2145
          %v2230 = vpack.c.b16 %v2150, %v2148
          %v2231 = vpack.c.b16 %v2151, %v2149
          %v2232 = vpack.c.b16 %v2154, %v2152
          %v2233 = vpack.c.b16 %v2155, %v2153
          %v2234 = vpack.c.b16 %v2158, %v2156
          %v2235 = vpack.c.b16 %v2159, %v2157
          %v2236 = vpack.c.b16 %v2162, %v2160
          %v2237 = vpack.c.b16 %v2163, %v2161
          %v2238 = vpack.c.b16 %v2166, %v2164
          %v2239 = vpack.c.b16 %v2167, %v2165
          %v2240 = vpack.c.b16 %v2170, %v2168
          %v2241 = vpack.c.b16 %v2171, %v2169
          %v2242 = vpack.c.b16 %v2174, %v2172
          %v2243 = vpack.c.b16 %v2175, %v2173
          %v2244 = vpack.c.b16 %v2178, %v2176
          %v2245 = vpack.c.b16 %v2179, %v2177
          %v2246 = vpack.c.b16 %v2182, %v2180
          %v2247 = vpack.c.b16 %v2183, %v2181
          %2312 = vmatpush.bf16.msra.mxu0 %v2198
          %2313 = vmatpush.bf16.msra.mxu0 %v2196
          %2314 = vmatpush.bf16.msra.mxu0 %v2194
          %2315 = vmatpush.bf16.msra.mxu0 %v2192
          %2316 = vmatpush.bf16.msra.mxu0 %v2190
          %2317 = vmatpush.bf16.msra.mxu0 %v2188
          %2318 = vmatpush.bf16.msra.mxu0 %v2186
          %2319 = vmatpush.bf16.msra.mxu0 %v2184
          %2320 = vmatmul.bf16.gmra.mxu0 %v1984
          %v2321 = vpop.f32.mrf.mxu0
          %v2322 = vadd.f32 0.0, %v2321
          %v2323 = vpop.f32.mrf.mxu0
          %2324 = vdwg.mxu0
          %2325 = vmatpush.bf16.msra.mxu0 %v2214
          %2326 = vmatpush.bf16.msra.mxu0 %v2212
          %2327 = vmatpush.bf16.msra.mxu0 %v2210
          %2328 = vmatpush.bf16.msra.mxu0 %v2208
          %2329 = vmatpush.bf16.msra.mxu0 %v2206
          %2330 = vmatpush.bf16.msra.mxu0 %v2204
          %2331 = vmatpush.bf16.msra.mxu0 %v2202
          %2332 = vmatpush.bf16.msra.mxu0 %v2200
          %2333 = vmatmul.bf16.gmra.mxu0 %v1985
          %v2334 = vpop.f32.mrf.mxu0
          %v2335 = vadd.f32 %v2322, %v2334
          %v2336 = vpop.f32.mrf.mxu0
          %2337 = vdwg.mxu0
          %2338 = vmatpush.bf16.msra.mxu0 %v2230
          %2339 = vmatpush.bf16.msra.mxu0 %v2228
          %2340 = vmatpush.bf16.msra.mxu0 %v2226
          %2341 = vmatpush.bf16.msra.mxu0 %v2224
          %2342 = vmatpush.bf16.msra.mxu0 %v2222
          %2343 = vmatpush.bf16.msra.mxu0 %v2220
          %2344 = vmatpush.bf16.msra.mxu0 %v2218
          %2345 = vmatpush.bf16.msra.mxu0 %v2216
          %2346 = vmatmul.bf16.gmra.mxu0 %v1986
          %v2347 = vpop.f32.mrf.mxu0
          %v2348 = vadd.f32 %v2335, %v2347
          %v2349 = vpop.f32.mrf.mxu0
          %2350 = vdwg.mxu0
          %2351 = vmatpush.bf16.msra.mxu0 %v2246
          %2352 = vmatpush.bf16.msra.mxu0 %v2244
          %2353 = vmatpush.bf16.msra.mxu0 %v2242
          %2354 = vmatpush.bf16.msra.mxu0 %v2240
          %2355 = vmatpush.bf16.msra.mxu0 %v2238
          %2356 = vmatpush.bf16.msra.mxu0 %v2236
          %2357 = vmatpush.bf16.msra.mxu0 %v2234
          %2358 = vmatpush.bf16.msra.mxu0 %v2232
          %2359 = vmatmul.bf16.gmra.mxu0 %v1987
          %v2360 = vpop.f32.mrf.mxu0
          %v2361 = vadd.f32 %v2348, %v2360
          %v2362 = vpop.f32.mrf.mxu0
          %2363 = vdwg.mxu0
          %2364 = vmatpush.bf16.msra.mxu0 %v2199
          %2365 = vmatpush.bf16.msra.mxu0 %v2197
          %2366 = vmatpush.bf16.msra.mxu0 %v2195
          %2367 = vmatpush.bf16.msra.mxu0 %v2193
          %2368 = vmatpush.bf16.msra.mxu0 %v2191
          %2369 = vmatpush.bf16.msra.mxu0 %v2189
          %2370 = vmatpush.bf16.msra.mxu0 %v2187
          %2371 = vmatpush.bf16.msra.mxu0 %v2185
          %2372 = vmatmul.bf16.gmra.mxu0 %v1984
          %v2373 = vpop.f32.mrf.mxu0
          %v2374 = vadd.f32 0.0, %v2373
          %v2375 = vpop.f32.mrf.mxu0
          %2376 = vdwg.mxu0
          %2377 = vmatpush.bf16.msra.mxu0 %v2215
          %2378 = vmatpush.bf16.msra.mxu0 %v2213
          %2379 = vmatpush.bf16.msra.mxu0 %v2211
          %2380 = vmatpush.bf16.msra.mxu0 %v2209
          %2381 = vmatpush.bf16.msra.mxu0 %v2207
          %2382 = vmatpush.bf16.msra.mxu0 %v2205
          %2383 = vmatpush.bf16.msra.mxu0 %v2203
          %2384 = vmatpush.bf16.msra.mxu0 %v2201
          %2385 = vmatmul.bf16.gmra.mxu0 %v1985
          %v2386 = vpop.f32.mrf.mxu0
          %v2387 = vadd.f32 %v2374, %v2386
          %v2388 = vpop.f32.mrf.mxu0
          %2389 = vdwg.mxu0
          %2390 = vmatpush.bf16.msra.mxu0 %v2231
          %2391 = vmatpush.bf16.msra.mxu0 %v2229
          %2392 = vmatpush.bf16.msra.mxu0 %v2227
          %2393 = vmatpush.bf16.msra.mxu0 %v2225
          %2394 = vmatpush.bf16.msra.mxu0 %v2223
          %2395 = vmatpush.bf16.msra.mxu0 %v2221
          %2396 = vmatpush.bf16.msra.mxu0 %v2219
          %2397 = vmatpush.bf16.msra.mxu0 %v2217
          %2398 = vmatmul.bf16.gmra.mxu0 %v1986
          %v2399 = vpop.f32.mrf.mxu0
          %v2400 = vadd.f32 %v2387, %v2399
          %v2401 = vpop.f32.mrf.mxu0
          %2402 = vdwg.mxu0
          %2403 = vmatpush.bf16.msra.mxu0 %v2247
          %2404 = vmatpush.bf16.msra.mxu0 %v2245
          %2405 = vmatpush.bf16.msra.mxu0 %v2243
          %2406 = vmatpush.bf16.msra.mxu0 %v2241
          %2407 = vmatpush.bf16.msra.mxu0 %v2239
          %2408 = vmatpush.bf16.msra.mxu0 %v2237
          %2409 = vmatpush.bf16.msra.mxu0 %v2235
          %2410 = vmatpush.bf16.msra.mxu0 %v2233
          %2411 = vmatmul.bf16.gmra.mxu0 %v1987
          %v2412 = vpop.f32.mrf.mxu0
          %v2413 = vadd.f32 %v2400, %v2412
          %v2414 = vpop.f32.mrf.mxu0
          %2415 = vdwg.mxu0
          %v2416 = vadd.f32 %v1857, %v2361
          %v2417 = vadd.f32 %v1909, %v2413
          %v2418 = vadd.f32 %v902, %v2416
          %v2419 = vadd.f32 %v903, %v2417
          %2420 = vst [vmem:[#allocation2] sm:$0xff] %v2418
          %2421 = vst [vmem:[#allocation2 + $0x8] sm:$0xff] %v2419
        $region92: #{forward.5} parent=67 // pred_fallthru
          _
        // Predicated region
        $region93: #{forward.5} parent=67 // pred_check
          %p2422 = pneg %p890
        $region94: #{forward.5} parent=67 // pred_check_branch
          %2424 = sbr.rel (%p2422) target = $region96
        $region95: #{forward.5} parent=67 // pred_region
          %v2425 = vld [vmem:[%s854] sm:$0xff]
          %v2426 = vmul.f32 %v2425, 0.5
          %v2427 = vld [vmem:[#allocation2] sm:$0xff]
          %v2428 = vld [vmem:[#allocation2 + $0x8] sm:$0xff]
          %v2429 = vld [vmem:[%s7] sm:$0x3]
          %2431 = vset.pattern.permute.xlu0 0
          %2432 = vperm.xlu0 %2431, %v2426
          %v2433 = vpop.permute.xlu0 %2432
          %v2436 = vperm.slane %v2429, 0
          %v2437 = vperm.slane %v2429, 1
          %v2440 = vmul.f32 %v2433, %v2436
          %v2441 = vmul.f32 %v2433, %v2437
          %v2442 = vadd.f32 %v2427, %v2440
          %v2443 = vadd.f32 %v2428, %v2441
          %v2444 = vld [vmem:[%s8] sm:$0x3]
          %v2446 = vperm.slane %v2444, 0
          %v2447 = vperm.slane %v2444, 1
          %v2450 = vadd.f32 %v2442, %v2446
          %v2451 = vadd.f32 %v2443, %v2447
          %v2452 = vtanh.pop %v2450
          %v2453 = vtanh.pop %v2451
          %v2454 = vpack.c.bf16 %v2453, %v2452
          %2455 = vst [vmem:[#allocation3] sm:$0xff] %v2454
        $region96: #{forward.5} parent=67 // pred_fallthru
          _
        %p2456 = scmp.ge.s32.totalorder %s37, 1
        // Predicated region
        $region97: #{forward.5} parent=67 // pred_check
          %p2457 = pneg %p2456
        $region98: #{forward.5} parent=67 // pred_check_branch
          %2459 = sbr.rel (%p2457) target = $region100
        $region99: #{forward.5} parent=67 // pred_region
          %v2460 = vld [vmem:[#allocation3] sm:$0xff]
          %v2461 = vld [vmem:[%s682] sm:$0xff]
          %v2462 = vld [vmem:[%s682 + $0x8] sm:$0xff]
          %v2463 = vld [vmem:[%s682 + $0x10] sm:$0xff]
          %v2464 = vld [vmem:[%s682 + $0x18] sm:$0xff]
          %v2465 = vld [vmem:[%s682 + $0x20] sm:$0xff]
          %v2466 = vld [vmem:[%s682 + $0x28] sm:$0xff]
          %v2467 = vld [vmem:[%s682 + $0x30] sm:$0xff]
          %v2468 = vld [vmem:[%s682 + $0x38] sm:$0xff]
          %v2469 = vld [vmem:[%s682 + $0x40] sm:$0xff]
          %v2470 = vld [vmem:[%s682 + $0x48] sm:$0xff]
          %v2471 = vld [vmem:[%s682 + $0x50] sm:$0xff]
          %v2472 = vld [vmem:[%s682 + $0x58] sm:$0xff]
          %v2473 = vld [vmem:[%s682 + $0x60] sm:$0xff]
          %v2474 = vld [vmem:[%s682 + $0x68] sm:$0xff]
          %v2475 = vld [vmem:[%s682 + $0x70] sm:$0xff]
          %v2476 = vld [vmem:[%s682 + $0x78] sm:$0xff]
          %v2477 = vld [vmem:[%s682 + $0x80] sm:$0xff]
          %v2478 = vld [vmem:[%s682 + $0x88] sm:$0xff]
          %v2479 = vld [vmem:[%s682 + $0x90] sm:$0xff]
          %v2480 = vld [vmem:[%s682 + $0x98] sm:$0xff]
          %v2481 = vld [vmem:[%s682 + $0xa0] sm:$0xff]
          %v2482 = vld [vmem:[%s682 + $0xa8] sm:$0xff]
          %v2483 = vld [vmem:[%s682 + $0xb0] sm:$0xff]
          %v2484 = vld [vmem:[%s682 + $0xb8] sm:$0xff]
          %v2485 = vld [vmem:[%s682 + $0xc0] sm:$0xff]
          %v2486 = vld [vmem:[%s682 + $0xc8] sm:$0xff]
          %v2487 = vld [vmem:[%s682 + $0xd0] sm:$0xff]
          %v2488 = vld [vmem:[%s682 + $0xd8] sm:$0xff]
          %v2489 = vld [vmem:[%s682 + $0xe0] sm:$0xff]
          %v2490 = vld [vmem:[%s682 + $0xe8] sm:$0xff]
          %v2491 = vld [vmem:[%s682 + $0xf0] sm:$0xff]
          %v2492 = vld [vmem:[%s682 + $0xf8] sm:$0xff]
          %v2493 = vld [vmem:[%s682 + $0x100] sm:$0xff]
          %v2494 = vld [vmem:[%s682 + $0x108] sm:$0xff]
          %v2495 = vld [vmem:[%s682 + $0x110] sm:$0xff]
          %v2496 = vld [vmem:[%s682 + $0x118] sm:$0xff]
          %v2497 = vld [vmem:[%s682 + $0x120] sm:$0xff]
          %v2498 = vld [vmem:[%s682 + $0x128] sm:$0xff]
          %v2499 = vld [vmem:[%s682 + $0x130] sm:$0xff]
          %v2500 = vld [vmem:[%s682 + $0x138] sm:$0xff]
          %v2501 = vld [vmem:[%s682 + $0x140] sm:$0xff]
          %v2502 = vld [vmem:[%s682 + $0x148] sm:$0xff]
          %v2503 = vld [vmem:[%s682 + $0x150] sm:$0xff]
          %v2504 = vld [vmem:[%s682 + $0x158] sm:$0xff]
          %v2505 = vld [vmem:[%s682 + $0x160] sm:$0xff]
          %v2506 = vld [vmem:[%s682 + $0x168] sm:$0xff]
          %v2507 = vld [vmem:[%s682 + $0x170] sm:$0xff]
          %v2508 = vld [vmem:[%s682 + $0x178] sm:$0xff]
          %v2509 = vld [vmem:[%s682 + $0x180] sm:$0xff]
          %v2510 = vld [vmem:[%s682 + $0x188] sm:$0xff]
          %v2511 = vld [vmem:[%s682 + $0x190] sm:$0xff]
          %v2512 = vld [vmem:[%s682 + $0x198] sm:$0xff]
          %v2513 = vld [vmem:[%s682 + $0x1a0] sm:$0xff]
          %v2514 = vld [vmem:[%s682 + $0x1a8] sm:$0xff]
          %v2515 = vld [vmem:[%s682 + $0x1b0] sm:$0xff]
          %v2516 = vld [vmem:[%s682 + $0x1b8] sm:$0xff]
          %v2517 = vld [vmem:[%s682 + $0x1c0] sm:$0xff]
          %v2518 = vld [vmem:[%s682 + $0x1c8] sm:$0xff]
          %v2519 = vld [vmem:[%s682 + $0x1d0] sm:$0xff]
          %v2520 = vld [vmem:[%s682 + $0x1d8] sm:$0xff]
          %v2521 = vld [vmem:[%s682 + $0x1e0] sm:$0xff]
          %v2522 = vld [vmem:[%s682 + $0x1e8] sm:$0xff]
          %v2523 = vld [vmem:[%s682 + $0x1f0] sm:$0xff]
          %v2524 = vld [vmem:[%s682 + $0x1f8] sm:$0xff]
          %v2525 = vld [vmem:[%s865] sm:$0xf]
          %v2527 = vperm.slane %v2525, 0
          %v2528 = vperm.slane %v2525, 1
          %v2529 = vperm.slane %v2525, 2
          %v2530 = vperm.slane %v2525, 3
          %v2536 = vunpack.c.l.b16 %v2460
          %v2537 = vunpack.c.h.b16 %v2460
          %v2538 = vpack.c.b16 %v2536, %v2536
          %v2539 = vpack.c.b16 %v2537, %v2537
          %v2606 = vunpack.c.l.b16 %v2461
          %v2607 = vunpack.c.h.b16 %v2461
          %v2608 = vunpack.c.l.b16 %v2462
          %v2609 = vunpack.c.h.b16 %v2462
          %v2610 = vunpack.c.l.b16 %v2463
          %v2611 = vunpack.c.h.b16 %v2463
          %v2612 = vunpack.c.l.b16 %v2464
          %v2613 = vunpack.c.h.b16 %v2464
          %v2614 = vunpack.c.l.b16 %v2465
          %v2615 = vunpack.c.h.b16 %v2465
          %v2616 = vunpack.c.l.b16 %v2466
          %v2617 = vunpack.c.h.b16 %v2466
          %v2618 = vunpack.c.l.b16 %v2467
          %v2619 = vunpack.c.h.b16 %v2467
          %v2620 = vunpack.c.l.b16 %v2468
          %v2621 = vunpack.c.h.b16 %v2468
          %v2622 = vunpack.c.l.b16 %v2469
          %v2623 = vunpack.c.h.b16 %v2469
          %v2624 = vunpack.c.l.b16 %v2470
          %v2625 = vunpack.c.h.b16 %v2470
          %v2626 = vunpack.c.l.b16 %v2471
          %v2627 = vunpack.c.h.b16 %v2471
          %v2628 = vunpack.c.l.b16 %v2472
          %v2629 = vunpack.c.h.b16 %v2472
          %v2630 = vunpack.c.l.b16 %v2473
          %v2631 = vunpack.c.h.b16 %v2473
          %v2632 = vunpack.c.l.b16 %v2474
          %v2633 = vunpack.c.h.b16 %v2474
          %v2634 = vunpack.c.l.b16 %v2475
          %v2635 = vunpack.c.h.b16 %v2475
          %v2636 = vunpack.c.l.b16 %v2476
          %v2637 = vunpack.c.h.b16 %v2476
          %v2638 = vunpack.c.l.b16 %v2477
          %v2639 = vunpack.c.h.b16 %v2477
          %v2640 = vunpack.c.l.b16 %v2478
          %v2641 = vunpack.c.h.b16 %v2478
          %v2642 = vunpack.c.l.b16 %v2479
          %v2643 = vunpack.c.h.b16 %v2479
          %v2644 = vunpack.c.l.b16 %v2480
          %v2645 = vunpack.c.h.b16 %v2480
          %v2646 = vunpack.c.l.b16 %v2481
          %v2647 = vunpack.c.h.b16 %v2481
          %v2648 = vunpack.c.l.b16 %v2482
          %v2649 = vunpack.c.h.b16 %v2482
          %v2650 = vunpack.c.l.b16 %v2483
          %v2651 = vunpack.c.h.b16 %v2483
          %v2652 = vunpack.c.l.b16 %v2484
          %v2653 = vunpack.c.h.b16 %v2484
          %v2654 = vunpack.c.l.b16 %v2485
          %v2655 = vunpack.c.h.b16 %v2485
          %v2656 = vunpack.c.l.b16 %v2486
          %v2657 = vunpack.c.h.b16 %v2486
          %v2658 = vunpack.c.l.b16 %v2487
          %v2659 = vunpack.c.h.b16 %v2487
          %v2660 = vunpack.c.l.b16 %v2488
          %v2661 = vunpack.c.h.b16 %v2488
          %v2662 = vunpack.c.l.b16 %v2489
          %v2663 = vunpack.c.h.b16 %v2489
          %v2664 = vunpack.c.l.b16 %v2490
          %v2665 = vunpack.c.h.b16 %v2490
          %v2666 = vunpack.c.l.b16 %v2491
          %v2667 = vunpack.c.h.b16 %v2491
          %v2668 = vunpack.c.l.b16 %v2492
          %v2669 = vunpack.c.h.b16 %v2492
          %v2670 = vunpack.c.l.b16 %v2493
          %v2671 = vunpack.c.h.b16 %v2493
          %v2672 = vunpack.c.l.b16 %v2494
          %v2673 = vunpack.c.h.b16 %v2494
          %v2674 = vunpack.c.l.b16 %v2495
          %v2675 = vunpack.c.h.b16 %v2495
          %v2676 = vunpack.c.l.b16 %v2496
          %v2677 = vunpack.c.h.b16 %v2496
          %v2678 = vunpack.c.l.b16 %v2497
          %v2679 = vunpack.c.h.b16 %v2497
          %v2680 = vunpack.c.l.b16 %v2498
          %v2681 = vunpack.c.h.b16 %v2498
          %v2682 = vunpack.c.l.b16 %v2499
          %v2683 = vunpack.c.h.b16 %v2499
          %v2684 = vunpack.c.l.b16 %v2500
          %v2685 = vunpack.c.h.b16 %v2500
          %v2686 = vunpack.c.l.b16 %v2501
          %v2687 = vunpack.c.h.b16 %v2501
          %v2688 = vunpack.c.l.b16 %v2502
          %v2689 = vunpack.c.h.b16 %v2502
          %v2690 = vunpack.c.l.b16 %v2503
          %v2691 = vunpack.c.h.b16 %v2503
          %v2692 = vunpack.c.l.b16 %v2504
          %v2693 = vunpack.c.h.b16 %v2504
          %v2694 = vunpack.c.l.b16 %v2505
          %v2695 = vunpack.c.h.b16 %v2505
          %v2696 = vunpack.c.l.b16 %v2506
          %v2697 = vunpack.c.h.b16 %v2506
          %v2698 = vunpack.c.l.b16 %v2507
          %v2699 = vunpack.c.h.b16 %v2507
          %v2700 = vunpack.c.l.b16 %v2508
          %v2701 = vunpack.c.h.b16 %v2508
          %v2702 = vunpack.c.l.b16 %v2509
          %v2703 = vunpack.c.h.b16 %v2509
          %v2704 = vunpack.c.l.b16 %v2510
          %v2705 = vunpack.c.h.b16 %v2510
          %v2706 = vunpack.c.l.b16 %v2511
          %v2707 = vunpack.c.h.b16 %v2511
          %v2708 = vunpack.c.l.b16 %v2512
          %v2709 = vunpack.c.h.b16 %v2512
          %v2710 = vunpack.c.l.b16 %v2513
          %v2711 = vunpack.c.h.b16 %v2513
          %v2712 = vunpack.c.l.b16 %v2514
          %v2713 = vunpack.c.h.b16 %v2514
          %v2714 = vunpack.c.l.b16 %v2515
          %v2715 = vunpack.c.h.b16 %v2515
          %v2716 = vunpack.c.l.b16 %v2516
          %v2717 = vunpack.c.h.b16 %v2516
          %v2718 = vunpack.c.l.b16 %v2517
          %v2719 = vunpack.c.h.b16 %v2517
          %v2720 = vunpack.c.l.b16 %v2518
          %v2721 = vunpack.c.h.b16 %v2518
          %v2722 = vunpack.c.l.b16 %v2519
          %v2723 = vunpack.c.h.b16 %v2519
          %v2724 = vunpack.c.l.b16 %v2520
          %v2725 = vunpack.c.h.b16 %v2520
          %v2726 = vunpack.c.l.b16 %v2521
          %v2727 = vunpack.c.h.b16 %v2521
          %v2728 = vunpack.c.l.b16 %v2522
          %v2729 = vunpack.c.h.b16 %v2522
          %v2730 = vunpack.c.l.b16 %v2523
          %v2731 = vunpack.c.h.b16 %v2523
          %v2732 = vunpack.c.l.b16 %v2524
          %v2733 = vunpack.c.h.b16 %v2524
          %v2734 = vpack.c.b16 %v2610, %v2606
          %v2735 = vpack.c.b16 %v2611, %v2607
          %v2736 = vpack.c.b16 %v2612, %v2608
          %v2737 = vpack.c.b16 %v2613, %v2609
          %v2738 = vpack.c.b16 %v2618, %v2614
          %v2739 = vpack.c.b16 %v2619, %v2615
          %v2740 = vpack.c.b16 %v2620, %v2616
          %v2741 = vpack.c.b16 %v2621, %v2617
          %v2742 = vpack.c.b16 %v2626, %v2622
          %v2743 = vpack.c.b16 %v2627, %v2623
          %v2744 = vpack.c.b16 %v2628, %v2624
          %v2745 = vpack.c.b16 %v2629, %v2625
          %v2746 = vpack.c.b16 %v2634, %v2630
          %v2747 = vpack.c.b16 %v2635, %v2631
          %v2748 = vpack.c.b16 %v2636, %v2632
          %v2749 = vpack.c.b16 %v2637, %v2633
          %v2750 = vpack.c.b16 %v2642, %v2638
          %v2751 = vpack.c.b16 %v2643, %v2639
          %v2752 = vpack.c.b16 %v2644, %v2640
          %v2753 = vpack.c.b16 %v2645, %v2641
          %v2754 = vpack.c.b16 %v2650, %v2646
          %v2755 = vpack.c.b16 %v2651, %v2647
          %v2756 = vpack.c.b16 %v2652, %v2648
          %v2757 = vpack.c.b16 %v2653, %v2649
          %v2758 = vpack.c.b16 %v2658, %v2654
          %v2759 = vpack.c.b16 %v2659, %v2655
          %v2760 = vpack.c.b16 %v2660, %v2656
          %v2761 = vpack.c.b16 %v2661, %v2657
          %v2762 = vpack.c.b16 %v2666, %v2662
          %v2763 = vpack.c.b16 %v2667, %v2663
          %v2764 = vpack.c.b16 %v2668, %v2664
          %v2765 = vpack.c.b16 %v2669, %v2665
          %v2766 = vpack.c.b16 %v2674, %v2670
          %v2767 = vpack.c.b16 %v2675, %v2671
          %v2768 = vpack.c.b16 %v2676, %v2672
          %v2769 = vpack.c.b16 %v2677, %v2673
          %v2770 = vpack.c.b16 %v2682, %v2678
          %v2771 = vpack.c.b16 %v2683, %v2679
          %v2772 = vpack.c.b16 %v2684, %v2680
          %v2773 = vpack.c.b16 %v2685, %v2681
          %v2774 = vpack.c.b16 %v2690, %v2686
          %v2775 = vpack.c.b16 %v2691, %v2687
          %v2776 = vpack.c.b16 %v2692, %v2688
          %v2777 = vpack.c.b16 %v2693, %v2689
          %v2778 = vpack.c.b16 %v2698, %v2694
          %v2779 = vpack.c.b16 %v2699, %v2695
          %v2780 = vpack.c.b16 %v2700, %v2696
          %v2781 = vpack.c.b16 %v2701, %v2697
          %v2782 = vpack.c.b16 %v2706, %v2702
          %v2783 = vpack.c.b16 %v2707, %v2703
          %v2784 = vpack.c.b16 %v2708, %v2704
          %v2785 = vpack.c.b16 %v2709, %v2705
          %v2786 = vpack.c.b16 %v2714, %v2710
          %v2787 = vpack.c.b16 %v2715, %v2711
          %v2788 = vpack.c.b16 %v2716, %v2712
          %v2789 = vpack.c.b16 %v2717, %v2713
          %v2790 = vpack.c.b16 %v2722, %v2718
          %v2791 = vpack.c.b16 %v2723, %v2719
          %v2792 = vpack.c.b16 %v2724, %v2720
          %v2793 = vpack.c.b16 %v2725, %v2721
          %v2794 = vpack.c.b16 %v2730, %v2726
          %v2795 = vpack.c.b16 %v2731, %v2727
          %v2796 = vpack.c.b16 %v2732, %v2728
          %v2797 = vpack.c.b16 %v2733, %v2729
          %2862 = vmatpush.bf16.msra.mxu0 %v2762
          %2863 = vmatpush.bf16.msra.mxu0 %v2758
          %2864 = vmatpush.bf16.msra.mxu0 %v2754
          %2865 = vmatpush.bf16.msra.mxu0 %v2750
          %2866 = vmatpush.bf16.msra.mxu0 %v2746
          %2867 = vmatpush.bf16.msra.mxu0 %v2742
          %2868 = vmatpush.bf16.msra.mxu0 %v2738
          %2869 = vmatpush.bf16.msra.mxu0 %v2734
          %2870 = vmatmul.bf16.gmra.mxu0 %v2538
          %v2871 = vpop.f32.mrf.mxu0
          %v2872 = vadd.f32 %v2527, %v2871
          %v2873 = vpop.f32.mrf.mxu0
          %2874 = vdwg.mxu0
          %2875 = vmatpush.bf16.msra.mxu0 %v2794
          %2876 = vmatpush.bf16.msra.mxu0 %v2790
          %2877 = vmatpush.bf16.msra.mxu0 %v2786
          %2878 = vmatpush.bf16.msra.mxu0 %v2782
          %2879 = vmatpush.bf16.msra.mxu0 %v2778
          %2880 = vmatpush.bf16.msra.mxu0 %v2774
          %2881 = vmatpush.bf16.msra.mxu0 %v2770
          %2882 = vmatpush.bf16.msra.mxu0 %v2766
          %2883 = vmatmul.bf16.gmra.mxu0 %v2539
          %v2884 = vpop.f32.mrf.mxu0
          %v2885 = vadd.f32 %v2872, %v2884
          %v2886 = vpop.f32.mrf.mxu0
          %2887 = vdwg.mxu0
          %2888 = vmatpush.bf16.msra.mxu0 %v2763
          %2889 = vmatpush.bf16.msra.mxu0 %v2759
          %2890 = vmatpush.bf16.msra.mxu0 %v2755
          %2891 = vmatpush.bf16.msra.mxu0 %v2751
          %2892 = vmatpush.bf16.msra.mxu0 %v2747
          %2893 = vmatpush.bf16.msra.mxu0 %v2743
          %2894 = vmatpush.bf16.msra.mxu0 %v2739
          %2895 = vmatpush.bf16.msra.mxu0 %v2735
          %2896 = vmatmul.bf16.gmra.mxu0 %v2538
          %v2897 = vpop.f32.mrf.mxu0
          %v2898 = vadd.f32 %v2528, %v2897
          %v2899 = vpop.f32.mrf.mxu0
          %2900 = vdwg.mxu0
          %2901 = vmatpush.bf16.msra.mxu0 %v2795
          %2902 = vmatpush.bf16.msra.mxu0 %v2791
          %2903 = vmatpush.bf16.msra.mxu0 %v2787
          %2904 = vmatpush.bf16.msra.mxu0 %v2783
          %2905 = vmatpush.bf16.msra.mxu0 %v2779
          %2906 = vmatpush.bf16.msra.mxu0 %v2775
          %2907 = vmatpush.bf16.msra.mxu0 %v2771
          %2908 = vmatpush.bf16.msra.mxu0 %v2767
          %2909 = vmatmul.bf16.gmra.mxu0 %v2539
          %v2910 = vpop.f32.mrf.mxu0
          %v2911 = vadd.f32 %v2898, %v2910
          %v2912 = vpop.f32.mrf.mxu0
          %2913 = vdwg.mxu0
          %2914 = vmatpush.bf16.msra.mxu0 %v2764
          %2915 = vmatpush.bf16.msra.mxu0 %v2760
          %2916 = vmatpush.bf16.msra.mxu0 %v2756
          %2917 = vmatpush.bf16.msra.mxu0 %v2752
          %2918 = vmatpush.bf16.msra.mxu0 %v2748
          %2919 = vmatpush.bf16.msra.mxu0 %v2744
          %2920 = vmatpush.bf16.msra.mxu0 %v2740
          %2921 = vmatpush.bf16.msra.mxu0 %v2736
          %2922 = vmatmul.bf16.gmra.mxu0 %v2538
          %v2923 = vpop.f32.mrf.mxu0
          %v2924 = vadd.f32 %v2529, %v2923
          %v2925 = vpop.f32.mrf.mxu0
          %2926 = vdwg.mxu0
          %2927 = vmatpush.bf16.msra.mxu0 %v2796
          %2928 = vmatpush.bf16.msra.mxu0 %v2792
          %2929 = vmatpush.bf16.msra.mxu0 %v2788
          %2930 = vmatpush.bf16.msra.mxu0 %v2784
          %2931 = vmatpush.bf16.msra.mxu0 %v2780
          %2932 = vmatpush.bf16.msra.mxu0 %v2776
          %2933 = vmatpush.bf16.msra.mxu0 %v2772
          %2934 = vmatpush.bf16.msra.mxu0 %v2768
          %2935 = vmatmul.bf16.gmra.mxu0 %v2539
          %v2936 = vpop.f32.mrf.mxu0
          %v2937 = vadd.f32 %v2924, %v2936
          %v2938 = vpop.f32.mrf.mxu0
          %2939 = vdwg.mxu0
          %2940 = vmatpush.bf16.msra.mxu0 %v2765
          %2941 = vmatpush.bf16.msra.mxu0 %v2761
          %2942 = vmatpush.bf16.msra.mxu0 %v2757
          %2943 = vmatpush.bf16.msra.mxu0 %v2753
          %2944 = vmatpush.bf16.msra.mxu0 %v2749
          %2945 = vmatpush.bf16.msra.mxu0 %v2745
          %2946 = vmatpush.bf16.msra.mxu0 %v2741
          %2947 = vmatpush.bf16.msra.mxu0 %v2737
          %2948 = vmatmul.bf16.gmra.mxu0 %v2538
          %v2949 = vpop.f32.mrf.mxu0
          %v2950 = vadd.f32 %v2530, %v2949
          %v2951 = vpop.f32.mrf.mxu0
          %2952 = vdwg.mxu0
          %2953 = vmatpush.bf16.msra.mxu0 %v2797
          %2954 = vmatpush.bf16.msra.mxu0 %v2793
          %2955 = vmatpush.bf16.msra.mxu0 %v2789
          %2956 = vmatpush.bf16.msra.mxu0 %v2785
          %2957 = vmatpush.bf16.msra.mxu0 %v2781
          %2958 = vmatpush.bf16.msra.mxu0 %v2777
          %2959 = vmatpush.bf16.msra.mxu0 %v2773
          %2960 = vmatpush.bf16.msra.mxu0 %v2769
          %2961 = vmatmul.bf16.gmra.mxu0 %v2539
          %v2962 = vpop.f32.mrf.mxu0
          %v2963 = vadd.f32 %v2950, %v2962
          %v2964 = vpop.f32.mrf.mxu0
          %2965 = vdwg.mxu0
          %v2966 = vld [vmem:[%s881] sm:$0xff]
          %v2967 = vld [vmem:[%s881 + $0x8] sm:$0xff]
          %v2968 = vunpack.c.l.bf16 %v2966
          %v2969 = vunpack.c.h.bf16 %v2966
          %v2970 = vunpack.c.l.bf16 %v2967
          %v2971 = vunpack.c.h.bf16 %v2967
          %v2972 = vsub.f32 %v2968, %v2885
          %v2973 = vsub.f32 %v2969, %v2911
          %v2974 = vsub.f32 %v2970, %v2937
          %v2975 = vsub.f32 %v2971, %v2963
          %v2976 = vld [vmem:[#allocation4] sm:$0xff]
          %v2977 = vmul.f32 %v2972, %v2972
          %v2978 = vmul.f32 %v2973, %v2973
          %v2979 = vmul.f32 %v2974, %v2974
          %v2980 = vmul.f32 %v2975, %v2975
          %v2981 = vadd.f32 %v2977, %v2978
          %v2982 = vadd.f32 %v2981, %v2979
          %v2983 = vadd.f32 %v2982, %v2980
          %2984 = vadd.xlane.f32.xlu0 %v2983
          %v2985 = vpop.xlane.xlu0 %2984
          %v2986 = vadd.f32 %v2976, %v2985
          %vm2987 = vcmask 7168
          %2988 = vst.msk [vmem:[#allocation4] sm:$0xff] %vm2987, %v2986
        $region100: #{forward.5} parent=67 // pred_fallthru
          _
        %p2989 = scmp.eq.s32.totalorder %s37, 1
        // Predicated region
        $region101: #{forward.5} parent=67 // pred_check
          %p2990 = pneg %p2989
        $region102: #{forward.5} parent=67 // pred_check_branch
          %2992 = sbr.rel (%p2990) target = $region104
        $region103: #{forward.5} parent=67 // pred_region
          %v2993 = vld [vmem:[#allocation4] sm:$0xff]
          %vm2994 = vcmask 7168
          %2995 = vst.msk [vmem:[%s889] sm:$0xff] %vm2994, %v2993
        $region104: #{forward.5} parent=67 // pred_fallthru
          _
        %p2996 = scmp.lt.s32.totalorder %s36, 0
        %s2997 = scalar_select %p2996, %s36, 0
        %s2998 = smul.addr %s2997, 8
        %s2999 = scalar_lea.vmem %s12, %s2998
        // Predicated region
        $region105: #{forward.5} parent=67 // pred_check
          %p3000 = pneg %p418
        $region106: #{forward.5} parent=67 // pred_check_branch
          %3002 = sbr.rel (%p3000) target = $region108
        $region107: #{forward.5} parent=67 // pred_region
          _
        $region108: #{forward.5} parent=67 // pred_fallthru
          _
        // Predicated region
        $region109: #{forward.5} parent=67 // pred_check
          %p3003 = pneg %p418
        $region110: #{forward.5} parent=67 // pred_check_branch
          %3005 = sbr.rel (%p3003) target = $region112
        $region111: #{forward.5} parent=67 // pred_region
          %p3006 = scmp.lt.s32.totalorder %s36, 0
          %s3007 = scalar_select %p3006, %s36, 0
          %s3008 = smul.addr %s3007, 8
          %s3009 = scalar_lea.vmem %s12, %s3008
        $region112: #{forward.5} parent=67 // pred_fallthru
          _
      $region68: #{forward.5} parent=5 // pred_fallthru
        _
      %p3010 = scmp.le.s32.totalorder 2, %s27
      // Predicated region
      $region113: #{forward.5} parent=5 // pred_check
        %p3011 = pneg %p3010
      $region114: #{forward.5} parent=5 // pred_check_branch
        %3013 = sbr.rel (%p3011) target = $region116
      $region115: #{forward.5} parent=5 // pred_region
        %s3014 = ssub.s32 %s27, 2
      $region116: #{forward.5} parent=5 // pred_fallthru
        _
    $region6: #{forward.5} parent=1 // loop_footer
      %s31 = sadd.s32 1, %s27
    $region7: #{forward.5} parent=1 // loop_footer_branch
      %26 = sbr.rel target = $region3
    $region8: #{forward.5} parent=1 // loop_exit
      _
    %3015 = vsyncpa [#allocation6], 1
    %s3016 = scalar_lea.sflag [#allocation6], 1
    %3017 = vsyncpa %s3016, 1
    %3018 = vsyncpa [#allocation8], 1
    %s3019 = scalar_lea.sflag [#allocation8], 1
    %3020 = vsyncpa %s3019, 1
    %3021 = vsyncpa [#allocation11], 1
    %s3022 = scalar_lea.sflag [#allocation11], 1
    %3023 = vsyncpa %s3022, 1

</llo_original>
